<compile_context>
chip_gen: v7x
topology: tpu7x:2x2x1
jax: 0.10.0
libtpu: 0.0.40
codegen_flags: <defaults>
</compile_context>

<pallas_src>
import functools
import math

import jax
import jax.numpy as jnp
from jax.experimental import pallas as pl
from jax.experimental.pallas import tpu as pltpu


# --------------------------------------------------------------------------- #
# small math helpers (f32, VPU/EUP friendly)
# --------------------------------------------------------------------------- #
def _layernorm(x, gamma, beta, eps=1e-5):
    mean = jnp.mean(x, axis=-1, keepdims=True)
    var = jnp.mean(jnp.square(x - mean), axis=-1, keepdims=True)
    return (x - mean) * jax.lax.rsqrt(var + eps) * gamma + beta


def _gelu_tanh(x):
    # ChatGLM gelu_impl (tanh approximation)
    return 0.5 * x * (1.0 + jnp.tanh(0.7978845608028654 * x * (1.0 + 0.044715 * x * x)))


def _rotate_half_2d(x, head_dim):
    """Exact slice/concat fallback for the GLM 2-D rotate_half permutation."""
    r = head_dim // 2
    h = r // 2
    return jnp.concatenate(
        [-x[..., h:r], x[..., 0:h], -x[..., r + h:], x[..., r:r + h]], axis=-1)


def _rotary_tables(position_ids, head_dim, base=10000.0):
    """Host-side GLM 2-D rotary tables, gathered per token, sign pattern folded in.

    position_ids: [B, 2, S] (position ids, block position ids).
    Returns (cos, sin_plus, sin_minus), each [B, S, head_dim], such that inside the
    kernel   rope(x) = x*cos + x[.., (j+h)%d]*sin_plus + x[.., (j-h)%d]*sin_minus
    with h = head_dim // 4 reproduces  x*cos + rotate_half_2d(x)*sin  exactly.
    (The gather by position id is data dependent, so it stays on the host and the
    per-token tables are streamed into the kernel.)
    """
    r = head_dim // 2
    h = r // 2
    inv_freq = 1.0 / (base ** (jnp.arange(0, r, 2, dtype=jnp.float32) / r))

    def tables(pids):                                             # [B, S]
        freqs = pids.astype(jnp.float32)[..., None] * inv_freq    # [B, S, r//2]
        emb = jnp.concatenate([freqs, freqs], axis=-1)            # [B, S, r]
        return jnp.cos(emb), jnp.sin(emb)

    c1, s1 = tables(position_ids[:, 0])       # position half  -> lanes [0, r)
    c2, s2 = tables(position_ids[:, 1])       # block half     -> lanes [r, d)
    cos = jnp.concatenate([c1, c2], axis=-1)
    sin = jnp.concatenate([s1, s2], axis=-1)

    lane = jnp.arange(head_dim) % r
    first_quarter = lane < h                  # region that needs  -x[j + h]
    sin_plus = jnp.where(first_quarter, -sin, 0.0)
    sin_minus = jnp.where(first_quarter, 0.0, sin)
    return cos, sin_plus, sin_minus


def _const_index_map(ndim):
    def im(b):
        return (0,) * ndim
    return im


# --------------------------------------------------------------------------- #
# one-time capability probes (tiny kernels; the main pallas_call stays free of
# broad try/except so genuine compile errors surface instead of being masked)
# --------------------------------------------------------------------------- #
@functools.lru_cache(maxsize=None)
def _roll_convention(head_dim):
    """+1 if pltpu.roll follows jnp.roll (out[j] = x[(j - shift) % n]),
    -1 if it rotates the other way, None if roll is unusable (exact fallback)."""
    h = head_dim // 4

    def kern(x_ref, o_ref):
        o_ref[...] = pltpu.roll(x_ref[...], head_dim - h, 2)

    try:
        x = jnp.broadcast_to(jnp.arange(head_dim, dtype=jnp.float32),
                             (1, 8, head_dim))
        y = pl.pallas_call(
            kern, out_shape=jax.ShapeDtypeStruct((1, 8, head_dim), jnp.float32))(x)
        v = int(jax.device_get(y[0, 0, 0]))
        if v == h:
            return 1
        if v == head_dim - h:
            return -1
    except Exception:      # pragma: no cover - depends on runtime build
        return None
    return None


@functools.lru_cache(maxsize=None)
def _single_buffer_ok():
    """True if grid-invariant inputs can be single-buffered via pl.Buffered(1)."""
    def kern(x_ref, o_ref):
        o_ref[...] = x_ref[...] + 1.0

    try:
        spec = pl.BlockSpec((8, 128), lambda i: (0, 0), pipeline_mode=pl.Buffered(1))
        y = pl.pallas_call(
            kern,
            out_shape=jax.ShapeDtypeStruct((8, 128), jnp.float32),
            grid=(2,),
            in_specs=[spec],
            out_specs=pl.BlockSpec((8, 128), lambda i: (0, 0)),
        )(jnp.zeros((8, 128), jnp.float32))
        jax.block_until_ready(y)
        return bool(jnp.all(y == 1.0))
    except Exception:      # pragma: no cover - depends on runtime build
        return False


def _vmem_limit_bytes():
    """Per-generation VMEM budget: ~3/4 of physical, capped at 100 MiB
    (-> ~48 MiB on v7x, ~96 MiB on v5e/v6e)."""
    try:
        cap = pltpu.get_tpu_info().vmem_capacity_bytes
    except Exception:      # pragma: no cover - older runtimes
        cap = 128 * 1024 * 1024
    return int(min(cap * 3 // 4, 100 * 1024 * 1024))


# --------------------------------------------------------------------------- #
# the GLM block kernel (one batch element per grid step)
# --------------------------------------------------------------------------- #
def glm_block_kernel(h_ref, mask_ref, cos_ref, sinp_ref, sinm_ref, past_ref,
                     wqkv_ref, bqkv_ref, wo_ref, bo_ref,
                     g_in_ref, b_in_ref, g_post_ref, b_post_ref,
                     wi_ref, bi_ref, wo2_ref, bo2_ref,
                     out_ref, present_ref,
                     *, num_heads, head_dim, layer_id, alpha, rope_mode):
    f32, bf16 = jnp.float32, jnp.bfloat16
    nh, d = num_heads, head_dim
    x = h_ref[0]                                   # [S, H]  f32
    S, H = x.shape

    # ---- input LayerNorm (f32) ---------------------------------------------
    attn_in = _layernorm(x, g_in_ref[...], b_in_ref[...])

    # ---- fused QKV projection: one lane-dense [S,H] @ [H,3H] MXU matmul -----
    qkv = jnp.dot(attn_in.astype(bf16), wqkv_ref[...],
                  preferred_element_type=f32) + bqkv_ref[...]      # [S, 3H] f32

    # split into head-major [nh, S, d]; the slices are 128-lane aligned and the
    # stack is a cheap leading-axis concatenate (no per-head matmuls).
    def split_heads(base):
        return jnp.stack([qkv[:, base + n * d: base + (n + 1) * d]
                          for n in range(nh)], axis=0)

    q = split_heads(0)
    k = split_heads(H)
    v = split_heads(2 * H)

    # ---- GLM 2-D rotary embeddings ------------------------------------------
    # permutation on the XLU via pltpu.roll; the rotate_half sign pattern is
    # folded into the host-precomputed sin_plus / sin_minus tables.
    cos = cos_ref[0][None]                          # [1, S, d]
    sinp = sinp_ref[0][None]
    sinm = sinm_ref[0][None]
    h4 = d // 4

    def rope(t):
        if rope_mode == 0:                          # exact slice/concat fallback
            return t * cos + _rotate_half_2d(t, d) * (sinm - sinp)
        if rope_mode > 0:                           # pltpu.roll == jnp.roll
            s_plus, s_minus = d - h4, h4
        else:                                       # opposite rotation direction
            s_plus, s_minus = h4, d - h4
        return (t * cos
                + pltpu.roll(t, s_plus, 2) * sinp    # contributes x[.., (j+h)%d]
                + pltpu.roll(t, s_minus, 2) * sinm)  # contributes x[.., (j-h)%d]

    q = rope(q)
    k = rope(k)

    # ---- KV cache: prepend past, emit presents (bf16 end-to-end) ------------
    kb = k.astype(bf16)
    vb = v.astype(bf16)
    k_full = jnp.concatenate([past_ref[0, 0], kb], axis=1)          # [nh, T, d]
    v_full = jnp.concatenate([past_ref[1, 0], vb], axis=1)
    present_ref[0, 0] = k_full
    present_ref[1, 0] = v_full

    # ---- attention with GLM layer-id scaled softmax -------------------------
    coeff = float(layer_id + 1)
    qs = (q * (1.0 / (math.sqrt(d) * coeff))).astype(bf16)
    scores = jnp.einsum("nqd,nkd->nqk", qs, k_full,
                        preferred_element_type=f32)                 # [nh, S, T]
    masked = mask_ref[0][None] != 0                                 # [1, S, T]
    scores = jnp.where(masked, -10000.0, scores) * coeff            # exact masked_fill
    scores = scores - jnp.max(scores, axis=-1, keepdims=True)
    p = jnp.exp(scores)
    p = p * pl.reciprocal(jnp.sum(p, axis=-1, keepdims=True), approx=True)
    ctx = jnp.einsum("nqk,nkd->nqd", p.astype(bf16), v_full,
                     preferred_element_type=f32)                    # [nh, S, d]

    # ---- output projection: merge heads on the lane axis -> one [S,nh*d]@[nh*d,H]
    # matmul, so the cross-head reduction happens inside the MXU f32 accumulator
    ctx_flat = jnp.concatenate([ctx[n] for n in range(nh)], axis=-1)  # [S, nh*d]
    attn_out = jnp.dot(ctx_flat.astype(bf16), wo_ref[...],
                       preferred_element_type=f32) + bo_ref[...]

    # ---- GLM residual + post-attention LayerNorm -----------------------------
    hidden = attn_in * alpha + attn_out
    mlp_in = _layernorm(hidden, g_post_ref[...], b_post_ref[...])

    # ---- MLP: dense_h_to_4h -> gelu(tanh) -> dense_4h_to_h -------------------
    ff = jnp.dot(mlp_in.astype(bf16), wi_ref[...],
                 preferred_element_type=f32) + bi_ref[...]
    ff = _gelu_tanh(ff)
    ff_out = jnp.dot(ff.astype(bf16), wo2_ref[...],
                     preferred_element_type=f32) + bo2_ref[...]

    out_ref[0] = mlp_in * alpha + ff_out


# --------------------------------------------------------------------------- #
# optional final LayerNorm + last-token selection (tiny second kernel)
# --------------------------------------------------------------------------- #
# TODO(synk): fold this into the main kernel once revisited outputs across a
# "parallel" batch axis are race-free; kept separate (a single [S,H] block DMA).
def _final_ln_kernel(x_ref, g_ref, b_ref, o_ref):
    x = x_ref[0]
    last = x[x.shape[0] - 1:, :]                  # last token row [1, H]
    o_ref[0] = _layernorm(last, g_ref[...], b_ref[...])


def _final_layernorm_last_token(hidden, gamma, beta):
    B, S, H = hidden.shape
    # matches torch: view(-1, H)[-1] == last token of the last batch element
    return pl.pallas_call(
        _final_ln_kernel,
        out_shape=jax.ShapeDtypeStruct((1, 1, H), jnp.float32),
        grid=(1,),
        in_specs=[pl.BlockSpec((1, S, H), lambda i: (B - 1, 0, 0)),
                  pl.BlockSpec((1, H), lambda i: (0, 0)),
                  pl.BlockSpec((1, H), lambda i: (0, 0))],
        out_specs=pl.BlockSpec((1, 1, H), lambda i: (0, 0, 0)),
    )(hidden, gamma, beta)


# --------------------------------------------------------------------------- #
# wrapper
# --------------------------------------------------------------------------- #
def _build_block_call(B, S, H, T, P, num_heads, d, weights, kernel, cost):
    single = _single_buffer_ok()

    def weight_spec(arr):
        # grid-invariant weights: a single VMEM copy when supported (halves the
        # weight VMEM; matters at real ChatGLM sizes under v7x's 64 MiB VMEM)
        if single:
            return pl.BlockSpec(arr.shape, _const_index_map(arr.ndim),
                                pipeline_mode=pl.Buffered(1))
        return pl.BlockSpec(arr.shape, _const_index_map(arr.ndim))

    in_specs = [
        pl.BlockSpec((1, S, H), lambda b: (b, 0, 0)),                      # hidden
        pl.BlockSpec((1, S, T), lambda b: (b, 0, 0)),                      # int8 mask
        pl.BlockSpec((1, S, d), lambda b: (b, 0, 0)),                      # rotary cos
        pl.BlockSpec((1, S, d), lambda b: (b, 0, 0)),                      # rotary sin_plus
        pl.BlockSpec((1, S, d), lambda b: (b, 0, 0)),                      # rotary sin_minus
        pl.BlockSpec((2, 1, num_heads, P, d), lambda b: (0, b, 0, 0, 0)),  # past_kv (bf16)
    ] + [weight_spec(w) for w in weights]

    out_specs = [
        pl.BlockSpec((1, S, H), lambda b: (b, 0, 0)),                      # hidden out
        pl.BlockSpec((2, 1, num_heads, T, d), lambda b: (0, b, 0, 0, 0)),  # presents (bf16)
    ]
    out_shape = [
        jax.ShapeDtypeStruct((B, S, H), jnp.float32),
        jax.ShapeDtypeStruct((2, B, num_heads, T, d), jnp.bfloat16),
    ]
    return pl.pallas_call(
        kernel,
        out_shape=out_shape,
        grid=(B,),
        in_specs=in_specs,
        out_specs=out_specs,
        compiler_params=pltpu.CompilerParams(
            dimension_semantics=("parallel",),          # megacore sharding on v7x
            vmem_limit_bytes=_vmem_limit_bytes()),
        cost_estimate=cost,
    )


def glm_block(hidden_states, attention_mask, position_ids, past_kv, params, *,
              num_heads, layer_id, num_layers, final_layernorm=None):
    """GLM transformer block forward.

    hidden_states:  [B, S, H] f32
    attention_mask: [B, 1, S, T] bool (True = masked), T = past_len + S
    position_ids:   [B, 2, S] int32 (GLM 2-D positions: [position, block_position])
    past_kv:        [2, B, num_heads, past_len, head_dim] cached K/V (past_len static)
    Returns (hidden, presents); presents = [2, B, num_heads, T, head_dim] in bf16.
    If final_layernorm is given, hidden is LayerNorm(last token), shape [1, 1, H].
    """
    B, S, H = hidden_states.shape
    d = H // num_heads
    P = past_kv.shape[3]
    T = P + S
    I = params["Wi"].shape[1]
    assert attention_mask.shape == (B, 1, S, T)

    mask_i8 = attention_mask.reshape(B, S, T).astype(jnp.int8)
    cos, sin_p, sin_m = _rotary_tables(position_ids, d)
    alpha = float((2.0 * num_layers) ** 0.5)

    weights = [params[n] for n in
               ("Wqkv", "bqkv", "Wo", "bo", "g_in", "b_in", "g_post", "b_post",
                "Wi", "bi", "Wo2", "bo2")]

    conv = _roll_convention(d)
    kernel = functools.partial(glm_block_kernel, num_heads=num_heads, head_dim=d,
                               layer_id=layer_id, alpha=alpha,
                               rope_mode=0 if conv is None else conv)

    # advisory cost estimate so XLA schedules correctly around the custom call
    flops = B * (2 * S * H * 3 * H            # qkv projection
                 + 4 * num_heads * S * T * d  # scores + context
                 + 2 * S * H * H              # output projection
                 + 4 * S * H * I)             # mlp
    trans = B * (num_heads * S * T + S * I)
    w_bytes = sum(int(w.size) * w.dtype.itemsize for w in weights)
    act_bytes = B * (8 * S * H + S * T + 12 * S * d
                     + 2 * num_heads * (P + T) * d)
    cost = pl.CostEstimate(flops=int(flops), transcendentals=int(trans),
                           bytes_accessed=int(w_bytes + act_bytes))

    args = (hidden_states.astype(jnp.float32), mask_i8, cos, sin_p, sin_m,
            past_kv.astype(jnp.bfloat16), *weights)

    hidden_out, presents = _build_block_call(
        B, S, H, T, P, num_heads, d, weights, kernel, cost)(*args)

    if final_layernorm is not None:
        hidden_out = _final_layernorm_last_token(
            hidden_out, final_layernorm["gamma"], final_layernorm["beta"])
    return hidden_out, presents


# --------------------------------------------------------------------------- #
# parameter init (random; layouts documented vs. torch)
# --------------------------------------------------------------------------- #
def init_params(key, hidden, num_heads, intermediate):
    """Random parameters in the kernel's weight layouts:

      Wqkv [H, 3H] bf16: columns are [Q | K | V]; within each block the heads are
        contiguous head-major (head n -> lanes [n*d, (n+1)*d)); within each head the
        lanes are [position-rotary half | block-rotary half] as in ChatGLM.
      Wo   [H, H]  bf16: rows head-major, i.e. the fused [nh*d, H] dense weight.
      Wi [H, I], Wo2 [I, H] bf16: dense_h_to_4h / dense_4h_to_h stored [in, out].
    """
    H, I = hidden, intermediate
    ks = jax.random.split(key, 8)
    std = 0.02

    def w(k, shape, dtype=jnp.bfloat16):
        return (jax.random.normal(k, shape, jnp.float32) * std).astype(dtype)

    return {
        "Wqkv": w(ks[0], (H, 3 * H)),
        "bqkv": w(ks[1], (1, 3 * H), jnp.float32),
        "Wo": w(ks[2], (H, H)),
        "bo": w(ks[3], (1, H), jnp.float32),
        "g_in": jnp.ones((1, H), jnp.float32), "b_in": jnp.zeros((1, H), jnp.float32),
        "g_post": jnp.ones((1, H), jnp.float32), "b_post": jnp.zeros((1, H), jnp.float32),
        "Wi": w(ks[4], (H, I)), "bi": w(ks[5], (1, I), jnp.float32),
        "Wo2": w(ks[6], (I, H)), "bo2": w(ks[7], (1, H), jnp.float32),
    }


if __name__ == "__main__":
    B, S, P = 2, 16, 16                  # batch, new tokens, cached tokens
    NUM_HEADS, H = 2, 256                # head_dim = 128 keeps lanes dense
    I = 4 * H
    NUM_LAYERS = 28                      # -> alpha = sqrt(2*28)
    BLOCK_ID = 0
    D = H // NUM_HEADS
    T = P + S

    key = jax.random.PRNGKey(0)
    kx, kp, kpast = jax.random.split(key, 3)

    hidden_states = jax.random.normal(kx, (B, S, H), jnp.float32)

    # boolean GLM/HF-style mask [B, 1, S, T]: True = masked out
    q_pos = P + jnp.arange(S)[:, None]
    k_pos = jnp.arange(T)[None, :]
    attention_mask = jnp.broadcast_to(k_pos > q_pos, (B, 1, S, T))

    # GLM 2-D position ids [B, 2, S]: (position ids, block position ids)
    position_ids = jnp.stack(
        [jnp.broadcast_to(P + jnp.arange(S), (B, S)),
         jnp.broadcast_to(jnp.arange(S), (B, S))], axis=1).astype(jnp.int32)

    past_kv = 0.02 * jax.random.normal(kpast, (2, B, NUM_HEADS, P, D), jnp.float32)

    params = init_params(kp, H, NUM_HEADS, I)
    final_ln = {"gamma": jnp.ones((1, H), jnp.float32),
                "beta": jnp.zeros((1, H), jnp.float32)}

    # middle layer (no final layernorm): full hidden states + presents
    out_full, presents = glm_block(hidden_states, attention_mask, position_ids, past_kv,
                                   params, num_heads=NUM_HEADS, layer_id=BLOCK_ID,
                                   num_layers=NUM_LAYERS, final_layernorm=None)
    # last layer: final layernorm + last-token selection -> [1, 1, H]
    out_last, presents2 = glm_block(hidden_states, attention_mask, position_ids, past_kv,
                                    params, num_heads=NUM_HEADS, layer_id=BLOCK_ID,
                                    num_layers=NUM_LAYERS, final_layernorm=final_ln)
    jax.block_until_ready((out_full, presents, out_last, presents2))

    assert out_full.shape == (B, S, H)
    assert presents.shape == (2, B, NUM_HEADS, T, D)
    assert presents.dtype == jnp.bfloat16
    assert out_last.shape == (1, 1, H)
    assert bool(jnp.isfinite(out_full).all()) and bool(jnp.isfinite(out_last).all())
    print("KERNEL_OK")
</pallas_src>

<mosaic_0001>
module attributes {stable_mosaic.version = 11 : i64} {
  func.func @kern(%arg0: memref<1x8x128xf32, #tpu.memory_space<vmem>>, %arg1: memref<1x8x128xf32, #tpu.memory_space<vmem>>) attributes {dimension_semantics = [], scalar_prefetch = 0 : i64, scratch_operands = 0 : i64, tpu.core_type = #tpu.core_type<tc>} {
    %c0 = arith.constant 0 : index
    %c0_0 = arith.constant 0 : index
    %c0_1 = arith.constant 0 : index
    %0 = vector.load %arg0[%c0, %c0_0, %c0_1] : memref<1x8x128xf32, #tpu.memory_space<vmem>>, vector<1x8x128xf32>
    %c96_i32 = arith.constant 96 : i32
    %1 = tpu.dynamic_rotate %0 by %c96_i32 dim 2 : vector<1x8x128xf32>, i32 -> vector<1x8x128xf32>
    %c0_2 = arith.constant 0 : index
    %c0_3 = arith.constant 0 : index
    %c0_4 = arith.constant 0 : index
    %2 = vector.load %arg1[%c0_2, %c0_3, %c0_4] : memref<1x8x128xf32, #tpu.memory_space<vmem>>, vector<1x8x128xf32>
    tpu.vector_store %arg1[%c0_2, %c0_3, %c0_4], %1 {strides = array<i32>} : memref<1x8x128xf32, #tpu.memory_space<vmem>>, vector<1x8x128xf32>,
    return
  }
}

module attributes {stable_mosaic.version = 11 : i64} {
  func.func @kern(%arg0: i32, %arg1: memref<8x128xf32, #tpu.memory_space<vmem>>, %arg2: memref<8x128xf32, #tpu.memory_space<vmem>>) attributes {dimension_semantics = [#tpu.dimension_semantics<arbitrary>], iteration_bounds = array<i64: 2>, scalar_prefetch = 0 : i64, scratch_operands = 0 : i64, tpu.core_type = #tpu.core_type<tc>, window_params = [{pipeline_mode = #tpu.pipeline_mode<synchronous>, transform_indices = @transform_0, window_bounds = array<i64: 8, 128>}, {pipeline_mode = #tpu.pipeline_mode<synchronous>, transform_indices = @transform_1, window_bounds = array<i64: 8, 128>}]} {
    %c0 = arith.constant 0 : index
    %c0_0 = arith.constant 0 : index
    %0 = vector.load %arg1[%c0, %c0_0] : memref<8x128xf32, #tpu.memory_space<vmem>>, vector<8x128xf32>
    %cst = arith.constant 1.000000e+00 : f32
    %1 = vector.broadcast %cst : f32 to vector<8x128xf32>
    %2 = arith.addf %0, %1 : vector<8x128xf32>
    %c0_1 = arith.constant 0 : index
    %c0_2 = arith.constant 0 : index
    %3 = vector.load %arg2[%c0_1, %c0_2] : memref<8x128xf32, #tpu.memory_space<vmem>>, vector<8x128xf32>
    tpu.vector_store %arg2[%c0_1, %c0_2], %2 {strides = array<i32>} : memref<8x128xf32, #tpu.memory_space<vmem>>, vector<8x128xf32>,
    return
  }
  func.func @transform_0(%arg0: i32) -> (i32, i32) {
    %c0_i32 = arith.constant 0 : i32
    %c0_i32_0 = arith.constant 0 : i32
    %c0_i32_1 = arith.constant 0 : i32
    return %c0_i32, %c0_i32_0 : i32, i32
  }
  func.func @transform_1(%arg0: i32) -> (i32, i32) {
    %c0_i32 = arith.constant 0 : i32
    %c0_i32_0 = arith.constant 0 : i32
    %c0_i32_1 = arith.constant 0 : i32
    return %c0_i32, %c0_i32_0 : i32, i32
  }
}

module attributes {stable_mosaic.version = 11 : i64} {
  func.func @glm_block_kernel(%arg0: i32, %arg1: memref<1x16x256xf32, #tpu.memory_space<vmem>>, %arg2: memref<1x16x32xi8, #tpu.memory_space<vmem>>, %arg3: memref<1x16x128xf32, #tpu.memory_space<vmem>>, %arg4: memref<1x16x128xf32, #tpu.memory_space<vmem>>, %arg5: memref<1x16x128xf32, #tpu.memory_space<vmem>>, %arg6: memref<2x1x2x16x128xbf16, #tpu.memory_space<vmem>>, %arg7: memref<256x768xbf16, #tpu.memory_space<vmem>>, %arg8: memref<1x768xf32, #tpu.memory_space<vmem>>, %arg9: memref<256x256xbf16, #tpu.memory_space<vmem>>, %arg10: memref<1x256xf32, #tpu.memory_space<vmem>>, %arg11: memref<1x256xf32, #tpu.memory_space<vmem>>, %arg12: memref<1x256xf32, #tpu.memory_space<vmem>>, %arg13: memref<1x256xf32, #tpu.memory_space<vmem>>, %arg14: memref<1x256xf32, #tpu.memory_space<vmem>>, %arg15: memref<256x1024xbf16, #tpu.memory_space<vmem>>, %arg16: memref<1x1024xf32, #tpu.memory_space<vmem>>, %arg17: memref<1024x256xbf16, #tpu.memory_space<vmem>>, %arg18: memref<1x256xf32, #tpu.memory_space<vmem>>, %arg19: memref<1x16x256xf32, #tpu.memory_space<vmem>>, %arg20: memref<2x1x2x32x128xbf16, #tpu.memory_space<vmem>>) attributes {dimension_semantics = [#tpu.dimension_semantics<parallel>], iteration_bounds = array<i64: 2>, scalar_prefetch = 0 : i64, scratch_operands = 0 : i64, tpu.core_type = #tpu.core_type<tc>, window_params = [{transform_indices = @transform_0, window_bounds = array<i64: 1, 16, 256>}, {transform_indices = @transform_1, window_bounds = array<i64: 1, 16, 32>}, {transform_indices = @transform_2, window_bounds = array<i64: 1, 16, 128>}, {transform_indices = @transform_3, window_bounds = array<i64: 1, 16, 128>}, {transform_indices = @transform_4, window_bounds = array<i64: 1, 16, 128>}, {transform_indices = @transform_5, window_bounds = array<i64: 2, 1, 2, 16, 128>}, {pipeline_mode = #tpu.pipeline_mode<synchronous>, transform_indices = @transform_6, window_bounds = array<i64: 256, 768>}, {pipeline_mode = #tpu.pipeline_mode<synchronous>, transform_indices = @transform_7, window_bounds = array<i64: 1, 768>}, {pipeline_mode = #tpu.pipeline_mode<synchronous>, transform_indices = @transform_8, window_bounds = array<i64: 256, 256>}, {pipeline_mode = #tpu.pipeline_mode<synchronous>, transform_indices = @transform_9, window_bounds = array<i64: 1, 256>}, {pipeline_mode = #tpu.pipeline_mode<synchronous>, transform_indices = @transform_10, window_bounds = array<i64: 1, 256>}, {pipeline_mode = #tpu.pipeline_mode<synchronous>, transform_indices = @transform_11, window_bounds = array<i64: 1, 256>}, {pipeline_mode = #tpu.pipeline_mode<synchronous>, transform_indices = @transform_12, window_bounds = array<i64: 1, 256>}, {pipeline_mode = #tpu.pipeline_mode<synchronous>, transform_indices = @transform_13, window_bounds = array<i64: 1, 256>}, {pipeline_mode = #tpu.pipeline_mode<synchronous>, transform_indices = @transform_14, window_bounds = array<i64: 256, 1024>}, {pipeline_mode = #tpu.pipeline_mode<synchronous>, transform_indices = @transform_15, window_bounds = array<i64: 1, 1024>}, {pipeline_mode = #tpu.pipeline_mode<synchronous>, transform_indices = @transform_16, window_bounds = array<i64: 1024, 256>}, {pipeline_mode = #tpu.pipeline_mode<synchronous>, transform_indices = @transform_17, window_bounds = array<i64: 1, 256>}, {transform_indices = @transform_18, window_bounds = array<i64: 1, 16, 256>}, {transform_indices = @transform_19, window_bounds = array<i64: 2, 1, 2, 32, 128>}]} {
    %c0 = arith.constant 0 : index
    %c0_0 = arith.constant 0 : index
    %c0_1 = arith.constant 0 : index
    %0 = vector.load %arg1[%c0, %c0_0, %c0_1] : memref<1x16x256xf32, #tpu.memory_space<vmem>>, vector<1x16x256xf32>
    %1 = vector.shape_cast %0 : vector<1x16x256xf32> to vector<16x256xf32>
    %c0_2 = arith.constant 0 : index
    %c0_3 = arith.constant 0 : index
    %2 = vector.load %arg11[%c0_2, %c0_3] : memref<1x256xf32, #tpu.memory_space<vmem>>, vector<1x256xf32>
    %c0_4 = arith.constant 0 : index
    %c0_5 = arith.constant 0 : index
    %3 = vector.load %arg12[%c0_4, %c0_5] : memref<1x256xf32, #tpu.memory_space<vmem>>, vector<1x256xf32>
    %cst = arith.constant dense<0.000000e+00> : vector<16xf32>
    %4 = vector.multi_reduction <add>, %1, %cst [1] : vector<16x256xf32> to vector<16xf32>
    %5 = vector.shape_cast %4 : vector<16xf32> to vector<16x1xf32>
    %cst_6 = arith.constant 2.560000e+02 : f32
    %6 = vector.broadcast %cst_6 : f32 to vector<16x1xf32>
    %7 = arith.divf %5, %6 : vector<16x1xf32>
    %8 = vector.broadcast %7 : vector<16x1xf32> to vector<16x256xf32>
    %9 = arith.subf %1, %8 : vector<16x256xf32>
    %10 = arith.mulf %9, %9 : vector<16x256xf32>
    %cst_7 = arith.constant dense<0.000000e+00> : vector<16xf32>
    %11 = vector.multi_reduction <add>, %10, %cst_7 [1] : vector<16x256xf32> to vector<16xf32>
    %12 = vector.shape_cast %11 : vector<16xf32> to vector<16x1xf32>
    %cst_8 = arith.constant 2.560000e+02 : f32
    %13 = vector.broadcast %cst_8 : f32 to vector<16x1xf32>
    %14 = arith.divf %12, %13 : vector<16x1xf32>
    %15 = vector.broadcast %7 : vector<16x1xf32> to vector<16x256xf32>
    %16 = arith.subf %1, %15 : vector<16x256xf32>
    %cst_9 = arith.constant 9.99999974E-6 : f32
    %17 = vector.broadcast %cst_9 : f32 to vector<16x1xf32>
    %18 = arith.addf %14, %17 : vector<16x1xf32>
    %19 = math.rsqrt %18 : vector<16x1xf32>
    %20 = vector.broadcast %19 : vector<16x1xf32> to vector<16x256xf32>
    %21 = arith.mulf %16, %20 : vector<16x256xf32>
    %22 = vector.broadcast %2 : vector<1x256xf32> to vector<16x256xf32>
    %23 = arith.mulf %21, %22 : vector<16x256xf32>
    %24 = vector.broadcast %3 : vector<1x256xf32> to vector<16x256xf32>
    %25 = arith.addf %23, %24 : vector<16x256xf32>
    %26 = arith.truncf %25 : vector<16x256xf32> to vector<16x256xbf16>
    %c0_10 = arith.constant 0 : index
    %c0_11 = arith.constant 0 : index
    %27 = vector.load %arg7[%c0_10, %c0_11] : memref<256x768xbf16, #tpu.memory_space<vmem>>, vector<256x768xbf16>
    %cst_12 = arith.constant dense<0.000000e+00> : vector<16x768xf32>
    %28 = tpu.matmul %26, %27, %cst_12 {dimension_numbers = #tpu.dot_dimension_numbers<[1], [0], [0], [1], [0, 0, 1, 1], [], []>} : vector<16x256xbf16>, vector<256x768xbf16>, vector<16x768xf32> -> vector<16x768xf32>
    %c0_13 = arith.constant 0 : index
    %c0_14 = arith.constant 0 : index
    %29 = vector.load %arg8[%c0_13, %c0_14] : memref<1x768xf32, #tpu.memory_space<vmem>>, vector<1x768xf32>
    %30 = vector.broadcast %29 : vector<1x768xf32> to vector<16x768xf32>
    %31 = arith.addf %28, %30 : vector<16x768xf32>
    %32 = vector.extract_strided_slice %31 {offsets = [0, 0], sizes = [16, 128], strides = [1, 1]} : vector<16x768xf32> to vector<16x128xf32>
    %33 = vector.extract_strided_slice %31 {offsets = [0, 128], sizes = [16, 128], strides = [1, 1]} : vector<16x768xf32> to vector<16x128xf32>
    %34 = vector.shape_cast %32 : vector<16x128xf32> to vector<1x16x128xf32>
    %35 = vector.shape_cast %33 : vector<16x128xf32> to vector<1x16x128xf32>
    %36 = tpu.concatenate %34, %35 in 0 : vector<1x16x128xf32>, vector<1x16x128xf32> -> vector<2x16x128xf32>
    %37 = vector.extract_strided_slice %31 {offsets = [0, 256], sizes = [16, 128], strides = [1, 1]} : vector<16x768xf32> to vector<16x128xf32>
    %38 = vector.extract_strided_slice %31 {offsets = [0, 384], sizes = [16, 128], strides = [1, 1]} : vector<16x768xf32> to vector<16x128xf32>
    %39 = vector.shape_cast %37 : vector<16x128xf32> to vector<1x16x128xf32>
    %40 = vector.shape_cast %38 : vector<16x128xf32> to vector<1x16x128xf32>
    %41 = tpu.concatenate %39, %40 in 0 : vector<1x16x128xf32>, vector<1x16x128xf32> -> vector<2x16x128xf32>
    %42 = vector.extract_strided_slice %31 {offsets = [0, 512], sizes = [16, 128], strides = [1, 1]} : vector<16x768xf32> to vector<16x128xf32>
    %43 = vector.extract_strided_slice %31 {offsets = [0, 640], sizes = [16, 128], strides = [1, 1]} : vector<16x768xf32> to vector<16x128xf32>
    %44 = vector.shape_cast %42 : vector<16x128xf32> to vector<1x16x128xf32>
    %45 = vector.shape_cast %43 : vector<16x128xf32> to vector<1x16x128xf32>
    %46 = tpu.concatenate %44, %45 in 0 : vector<1x16x128xf32>, vector<1x16x128xf32> -> vector<2x16x128xf32>
    %c0_15 = arith.constant 0 : index
    %c0_16 = arith.constant 0 : index
    %c0_17 = arith.constant 0 : index
    %47 = vector.load %arg3[%c0_15, %c0_16, %c0_17] : memref<1x16x128xf32, #tpu.memory_space<vmem>>, vector<1x16x128xf32>
    %48 = vector.shape_cast %47 : vector<1x16x128xf32> to vector<16x128xf32>
    %49 = vector.shape_cast %48 : vector<16x128xf32> to vector<1x16x128xf32>
    %c0_18 = arith.constant 0 : index
    %c0_19 = arith.constant 0 : index
    %c0_20 = arith.constant 0 : index
    %50 = vector.load %arg4[%c0_18, %c0_19, %c0_20] : memref<1x16x128xf32, #tpu.memory_space<vmem>>, vector<1x16x128xf32>
    %51 = vector.shape_cast %50 : vector<1x16x128xf32> to vector<16x128xf32>
    %52 = vector.shape_cast %51 : vector<16x128xf32> to vector<1x16x128xf32>
    %c0_21 = arith.constant 0 : index
    %c0_22 = arith.constant 0 : index
    %c0_23 = arith.constant 0 : index
    %53 = vector.load %arg5[%c0_21, %c0_22, %c0_23] : memref<1x16x128xf32, #tpu.memory_space<vmem>>, vector<1x16x128xf32>
    %54 = vector.shape_cast %53 : vector<1x16x128xf32> to vector<16x128xf32>
    %55 = vector.shape_cast %54 : vector<16x128xf32> to vector<1x16x128xf32>
    %56 = vector.broadcast %49 : vector<1x16x128xf32> to vector<2x16x128xf32>
    %57 = arith.mulf %36, %56 : vector<2x16x128xf32>
    %58 = vector.extract_strided_slice %36 {offsets = [0, 0, 32], sizes = [2, 16, 32], strides = [1, 1, 1]} : vector<2x16x128xf32> to vector<2x16x32xf32>
    %cst_24 = arith.constant 0.000000e+00 : f32
    %59 = vector.broadcast %cst_24 : f32 to vector<2x16x32xf32>
    %60 = arith.subf %59, %58 : vector<2x16x32xf32>
    %61 = vector.extract_strided_slice %36 {offsets = [0, 0, 0], sizes = [2, 16, 32], strides = [1, 1, 1]} : vector<2x16x128xf32> to vector<2x16x32xf32>
    %62 = vector.extract_strided_slice %36 {offsets = [0, 0, 96], sizes = [2, 16, 32], strides = [1, 1, 1]} : vector<2x16x128xf32> to vector<2x16x32xf32>
    %cst_25 = arith.constant 0.000000e+00 : f32
    %63 = vector.broadcast %cst_25 : f32 to vector<2x16x32xf32>
    %64 = arith.subf %63, %62 : vector<2x16x32xf32>
    %65 = vector.extract_strided_slice %36 {offsets = [0, 0, 64], sizes = [2, 16, 32], strides = [1, 1, 1]} : vector<2x16x128xf32> to vector<2x16x32xf32>
    %66 = tpu.concatenate %60, %61, %64, %65 in 2 : vector<2x16x32xf32>, vector<2x16x32xf32>, vector<2x16x32xf32>, vector<2x16x32xf32> -> vector<2x16x128xf32>
    %67 = arith.subf %55, %52 : vector<1x16x128xf32>
    %68 = vector.broadcast %67 : vector<1x16x128xf32> to vector<2x16x128xf32>
    %69 = arith.mulf %66, %68 : vector<2x16x128xf32>
    %70 = arith.addf %57, %69 : vector<2x16x128xf32>
    %71 = vector.broadcast %49 : vector<1x16x128xf32> to vector<2x16x128xf32>
    %72 = arith.mulf %41, %71 : vector<2x16x128xf32>
    %73 = vector.extract_strided_slice %41 {offsets = [0, 0, 32], sizes = [2, 16, 32], strides = [1, 1, 1]} : vector<2x16x128xf32> to vector<2x16x32xf32>
    %cst_26 = arith.constant 0.000000e+00 : f32
    %74 = vector.broadcast %cst_26 : f32 to vector<2x16x32xf32>
    %75 = arith.subf %74, %73 : vector<2x16x32xf32>
    %76 = vector.extract_strided_slice %41 {offsets = [0, 0, 0], sizes = [2, 16, 32], strides = [1, 1, 1]} : vector<2x16x128xf32> to vector<2x16x32xf32>
    %77 = vector.extract_strided_slice %41 {offsets = [0, 0, 96], sizes = [2, 16, 32], strides = [1, 1, 1]} : vector<2x16x128xf32> to vector<2x16x32xf32>
    %cst_27 = arith.constant 0.000000e+00 : f32
    %78 = vector.broadcast %cst_27 : f32 to vector<2x16x32xf32>
    %79 = arith.subf %78, %77 : vector<2x16x32xf32>
    %80 = vector.extract_strided_slice %41 {offsets = [0, 0, 64], sizes = [2, 16, 32], strides = [1, 1, 1]} : vector<2x16x128xf32> to vector<2x16x32xf32>
    %81 = tpu.concatenate %75, %76, %79, %80 in 2 : vector<2x16x32xf32>, vector<2x16x32xf32>, vector<2x16x32xf32>, vector<2x16x32xf32> -> vector<2x16x128xf32>
    %82 = arith.subf %55, %52 : vector<1x16x128xf32>
    %83 = vector.broadcast %82 : vector<1x16x128xf32> to vector<2x16x128xf32>
    %84 = arith.mulf %81, %83 : vector<2x16x128xf32>
    %85 = arith.addf %72, %84 : vector<2x16x128xf32>
    %86 = arith.truncf %85 : vector<2x16x128xf32> to vector<2x16x128xbf16>
    %87 = arith.truncf %46 : vector<2x16x128xf32> to vector<2x16x128xbf16>
    %c0_28 = arith.constant 0 : index
    %c0_29 = arith.constant 0 : index
    %c0_30 = arith.constant 0 : index
    %c0_31 = arith.constant 0 : index
    %c0_32 = arith.constant 0 : index
    %88 = vector.load %arg6[%c0_28, %c0_29, %c0_30, %c0_31, %c0_32] : memref<2x1x2x16x128xbf16, #tpu.memory_space<vmem>>, vector<1x1x2x16x128xbf16>
    %89 = vector.shape_cast %88 : vector<1x1x2x16x128xbf16> to vector<2x16x128xbf16>
    %90 = tpu.concatenate %89, %86 in 1 : vector<2x16x128xbf16>, vector<2x16x128xbf16> -> vector<2x32x128xbf16>
    %c1 = arith.constant 1 : index
    %c0_33 = arith.constant 0 : index
    %c0_34 = arith.constant 0 : index
    %c0_35 = arith.constant 0 : index
    %c0_36 = arith.constant 0 : index
    %91 = vector.load %arg6[%c1, %c0_33, %c0_34, %c0_35, %c0_36] : memref<2x1x2x16x128xbf16, #tpu.memory_space<vmem>>, vector<1x1x2x16x128xbf16>
    %92 = vector.shape_cast %91 : vector<1x1x2x16x128xbf16> to vector<2x16x128xbf16>
    %93 = tpu.concatenate %92, %87 in 1 : vector<2x16x128xbf16>, vector<2x16x128xbf16> -> vector<2x32x128xbf16>
    %c0_37 = arith.constant 0 : index
    %c0_38 = arith.constant 0 : index
    %c0_39 = arith.constant 0 : index
    %c0_40 = arith.constant 0 : index
    %c0_41 = arith.constant 0 : index
    %94 = vector.load %arg20[%c0_37, %c0_38, %c0_39, %c0_40, %c0_41] : memref<2x1x2x32x128xbf16, #tpu.memory_space<vmem>>, vector<1x1x2x32x128xbf16>
    %95 = vector.shape_cast %94 : vector<1x1x2x32x128xbf16> to vector<2x32x128xbf16>
    %96 = vector.shape_cast %90 : vector<2x32x128xbf16> to vector<1x1x2x32x128xbf16>
    tpu.vector_store %arg20[%c0_37, %c0_38, %c0_39, %c0_40, %c0_41], %96 {strides = array<i32>} : memref<2x1x2x32x128xbf16, #tpu.memory_space<vmem>>, vector<1x1x2x32x128xbf16>,
    %c1_42 = arith.constant 1 : index
    %c0_43 = arith.constant 0 : index
    %c0_44 = arith.constant 0 : index
    %c0_45 = arith.constant 0 : index
    %c0_46 = arith.constant 0 : index
    %97 = vector.load %arg20[%c1_42, %c0_43, %c0_44, %c0_45, %c0_46] : memref<2x1x2x32x128xbf16, #tpu.memory_space<vmem>>, vector<1x1x2x32x128xbf16>
    %98 = vector.shape_cast %97 : vector<1x1x2x32x128xbf16> to vector<2x32x128xbf16>
    %99 = vector.shape_cast %93 : vector<2x32x128xbf16> to vector<1x1x2x32x128xbf16>
    tpu.vector_store %arg20[%c1_42, %c0_43, %c0_44, %c0_45, %c0_46], %99 {strides = array<i32>} : memref<2x1x2x32x128xbf16, #tpu.memory_space<vmem>>, vector<1x1x2x32x128xbf16>,
    %cst_47 = arith.constant 0.0883883461 : f32
    %100 = vector.broadcast %cst_47 : f32 to vector<2x16x128xf32>
    %101 = arith.mulf %70, %100 : vector<2x16x128xf32>
    %102 = arith.truncf %101 : vector<2x16x128xf32> to vector<2x16x128xbf16>
    "tpu.trace_start"() <{level = 10 : i32, message = "nqd,nkd->nqk"}> : () -> ()
    %cst_48 = arith.constant dense<0.000000e+00> : vector<2x16x32xf32>
    %103 = tpu.matmul %102, %90, %cst_48 {dimension_numbers = #tpu.dot_dimension_numbers<[2], [2], [1], [1], [0, 0, 0, 1, 1, 1], [0], [0]>} : vector<2x16x128xbf16>, vector<2x32x128xbf16>, vector<2x16x32xf32> -> vector<2x16x32xf32>
    "tpu.trace_stop"() : () -> ()
    %c0_49 = arith.constant 0 : index
    %c0_50 = arith.constant 0 : index
    %c0_51 = arith.constant 0 : index
    %104 = vector.load %arg2[%c0_49, %c0_50, %c0_51] : memref<1x16x32xi8, #tpu.memory_space<vmem>>, vector<1x16x32xi8>
    %105 = vector.shape_cast %104 : vector<1x16x32xi8> to vector<16x32xi8>
    %106 = vector.shape_cast %105 : vector<16x32xi8> to vector<1x16x32xi8>
    %c0_i8 = arith.constant 0 : i8
    %107 = vector.broadcast %c0_i8 : i8 to vector<1x16x32xi8>
    %108 = arith.cmpi ne, %106, %107 : vector<1x16x32xi8>
    %cst_52 = arith.constant -1.000000e+04 : f32
    %109 = vector.shape_cast %108 : vector<1x16x32xi1> to vector<1x16x32xi1>
    %110 = vector.broadcast %109 : vector<1x16x32xi1> to vector<2x16x32xi1>
    %111 = vector.broadcast %cst_52 : f32 to vector<2x16x32xf32>
    %112 = arith.select %110, %111, %103 : vector<2x16x32xi1>, vector<2x16x32xf32>
    %cst_53 = arith.constant 1.000000e+00 : f32
    %113 = vector.broadcast %cst_53 : f32 to vector<2x16x32xf32>
    %114 = arith.mulf %112, %113 : vector<2x16x32xf32>
    %cst_54 = arith.constant dense<0xFF800000> : vector<2x16xf32>
    %115 = vector.multi_reduction <maximumf>, %114, %cst_54 [2] : vector<2x16x32xf32> to vector<2x16xf32>
    %116 = vector.shape_cast %115 : vector<2x16xf32> to vector<2x16x1xf32>
    %117 = vector.broadcast %116 : vector<2x16x1xf32> to vector<2x16x32xf32>
    %118 = arith.subf %114, %117 : vector<2x16x32xf32>
    %119 = math.exp %118 : vector<2x16x32xf32>
    %cst_55 = arith.constant dense<0.000000e+00> : vector<2x16xf32>
    %120 = vector.multi_reduction <add>, %119, %cst_55 [2] : vector<2x16x32xf32> to vector<2x16xf32>
    %121 = vector.shape_cast %120 : vector<2x16xf32> to vector<2x16x1xf32>
    %122 = tpu.reciprocal %121 {approx = true} : vector<2x16x1xf32> -> vector<2x16x1xf32>
    %123 = vector.broadcast %122 : vector<2x16x1xf32> to vector<2x16x32xf32>
    %124 = arith.mulf %119, %123 : vector<2x16x32xf32>
    %125 = arith.truncf %124 : vector<2x16x32xf32> to vector<2x16x32xbf16>
    "tpu.trace_start"() <{level = 10 : i32, message = "nqk,nkd->nqd"}> : () -> ()
    %cst_56 = arith.constant dense<0.000000e+00> : vector<2x16x128xf32>
    %126 = tpu.matmul %125, %93, %cst_56 {dimension_numbers = #tpu.dot_dimension_numbers<[2], [1], [1], [2], [0, 0, 0, 1, 1, 2], [0], [0]>} : vector<2x16x32xbf16>, vector<2x32x128xbf16>, vector<2x16x128xf32> -> vector<2x16x128xf32>
    "tpu.trace_stop"() : () -> ()
    %127 = vector.extract_strided_slice %126 {offsets = [0, 0, 0], sizes = [1, 16, 128], strides = [1, 1, 1]} : vector<2x16x128xf32> to vector<1x16x128xf32>
    %128 = vector.shape_cast %127 : vector<1x16x128xf32> to vector<16x128xf32>
    %129 = vector.extract_strided_slice %126 {offsets = [1, 0, 0], sizes = [1, 16, 128], strides = [1, 1, 1]} : vector<2x16x128xf32> to vector<1x16x128xf32>
    %130 = vector.shape_cast %129 : vector<1x16x128xf32> to vector<16x128xf32>
    %131 = tpu.concatenate %128, %130 in 1 : vector<16x128xf32>, vector<16x128xf32> -> vector<16x256xf32>
    %132 = arith.truncf %131 : vector<16x256xf32> to vector<16x256xbf16>
    %c0_57 = arith.constant 0 : index
    %c0_58 = arith.constant 0 : index
    %133 = vector.load %arg9[%c0_57, %c0_58] : memref<256x256xbf16, #tpu.memory_space<vmem>>, vector<256x256xbf16>
    %cst_59 = arith.constant dense<0.000000e+00> : vector<16x256xf32>
    %134 = tpu.matmul %132, %133, %cst_59 {dimension_numbers = #tpu.dot_dimension_numbers<[1], [0], [0], [1], [0, 0, 1, 1], [], []>} : vector<16x256xbf16>, vector<256x256xbf16>, vector<16x256xf32> -> vector<16x256xf32>
    %c0_60 = arith.constant 0 : index
    %c0_61 = arith.constant 0 : index
    %135 = vector.load %arg10[%c0_60, %c0_61] : memref<1x256xf32, #tpu.memory_space<vmem>>, vector<1x256xf32>
    %136 = vector.broadcast %135 : vector<1x256xf32> to vector<16x256xf32>
    %137 = arith.addf %134, %136 : vector<16x256xf32>
    %cst_62 = arith.constant 7.48331499 : f32
    %138 = vector.broadcast %cst_62 : f32 to vector<16x256xf32>
    %139 = arith.mulf %25, %138 : vector<16x256xf32>
    %140 = arith.addf %139, %137 : vector<16x256xf32>
    %c0_63 = arith.constant 0 : index
    %c0_64 = arith.constant 0 : index
    %141 = vector.load %arg13[%c0_63, %c0_64] : memref<1x256xf32, #tpu.memory_space<vmem>>, vector<1x256xf32>
    %c0_65 = arith.constant 0 : index
    %c0_66 = arith.constant 0 : index
    %142 = vector.load %arg14[%c0_65, %c0_66] : memref<1x256xf32, #tpu.memory_space<vmem>>, vector<1x256xf32>
    %cst_67 = arith.constant dense<0.000000e+00> : vector<16xf32>
    %143 = vector.multi_reduction <add>, %140, %cst_67 [1] : vector<16x256xf32> to vector<16xf32>
    %144 = vector.shape_cast %143 : vector<16xf32> to vector<16x1xf32>
    %cst_68 = arith.constant 2.560000e+02 : f32
    %145 = vector.broadcast %cst_68 : f32 to vector<16x1xf32>
    %146 = arith.divf %144, %145 : vector<16x1xf32>
    %147 = vector.broadcast %146 : vector<16x1xf32> to vector<16x256xf32>
    %148 = arith.subf %140, %147 : vector<16x256xf32>
    %149 = arith.mulf %148, %148 : vector<16x256xf32>
    %cst_69 = arith.constant dense<0.000000e+00> : vector<16xf32>
    %150 = vector.multi_reduction <add>, %149, %cst_69 [1] : vector<16x256xf32> to vector<16xf32>
    %151 = vector.shape_cast %150 : vector<16xf32> to vector<16x1xf32>
    %cst_70 = arith.constant 2.560000e+02 : f32
    %152 = vector.broadcast %cst_70 : f32 to vector<16x1xf32>
    %153 = arith.divf %151, %152 : vector<16x1xf32>
    %154 = vector.broadcast %146 : vector<16x1xf32> to vector<16x256xf32>
    %155 = arith.subf %140, %154 : vector<16x256xf32>
    %cst_71 = arith.constant 9.99999974E-6 : f32
    %156 = vector.broadcast %cst_71 : f32 to vector<16x1xf32>
    %157 = arith.addf %153, %156 : vector<16x1xf32>
    %158 = math.rsqrt %157 : vector<16x1xf32>
    %159 = vector.broadcast %158 : vector<16x1xf32> to vector<16x256xf32>
    %160 = arith.mulf %155, %159 : vector<16x256xf32>
    %161 = vector.broadcast %141 : vector<1x256xf32> to vector<16x256xf32>
    %162 = arith.mulf %160, %161 : vector<16x256xf32>
    %163 = vector.broadcast %142 : vector<1x256xf32> to vector<16x256xf32>
    %164 = arith.addf %162, %163 : vector<16x256xf32>
    %165 = arith.truncf %164 : vector<16x256xf32> to vector<16x256xbf16>
    %c0_72 = arith.constant 0 : index
    %c0_73 = arith.constant 0 : index
    %166 = vector.load %arg15[%c0_72, %c0_73] : memref<256x1024xbf16, #tpu.memory_space<vmem>>, vector<256x1024xbf16>
    %cst_74 = arith.constant dense<0.000000e+00> : vector<16x1024xf32>
    %167 = tpu.matmul %165, %166, %cst_74 {dimension_numbers = #tpu.dot_dimension_numbers<[1], [0], [0], [1], [0, 0, 1, 1], [], []>} : vector<16x256xbf16>, vector<256x1024xbf16>, vector<16x1024xf32> -> vector<16x1024xf32>
    %c0_75 = arith.constant 0 : index
    %c0_76 = arith.constant 0 : index
    %168 = vector.load %arg16[%c0_75, %c0_76] : memref<1x1024xf32, #tpu.memory_space<vmem>>, vector<1x1024xf32>
    %169 = vector.broadcast %168 : vector<1x1024xf32> to vector<16x1024xf32>
    %170 = arith.addf %167, %169 : vector<16x1024xf32>
    %cst_77 = arith.constant 5.000000e-01 : f32
    %171 = vector.broadcast %cst_77 : f32 to vector<16x1024xf32>
    %172 = arith.mulf %171, %170 : vector<16x1024xf32>
    %cst_78 = arith.constant 0.797884583 : f32
    %173 = vector.broadcast %cst_78 : f32 to vector<16x1024xf32>
    %174 = arith.mulf %173, %170 : vector<16x1024xf32>
    %cst_79 = arith.constant 4.471500e-02 : f32
    %175 = vector.broadcast %cst_79 : f32 to vector<16x1024xf32>
    %176 = arith.mulf %175, %170 : vector<16x1024xf32>
    %177 = arith.mulf %176, %170 : vector<16x1024xf32>
    %cst_80 = arith.constant 1.000000e+00 : f32
    %178 = vector.broadcast %cst_80 : f32 to vector<16x1024xf32>
    %179 = arith.addf %178, %177 : vector<16x1024xf32>
    %180 = arith.mulf %174, %179 : vector<16x1024xf32>
    %181 = math.tanh %180 : vector<16x1024xf32>
    %cst_81 = arith.constant 1.000000e+00 : f32
    %182 = vector.broadcast %cst_81 : f32 to vector<16x1024xf32>
    %183 = arith.addf %182, %181 : vector<16x1024xf32>
    %184 = arith.mulf %172, %183 : vector<16x1024xf32>
    %185 = arith.truncf %184 : vector<16x1024xf32> to vector<16x1024xbf16>
    %c0_82 = arith.constant 0 : index
    %c0_83 = arith.constant 0 : index
    %186 = vector.load %arg17[%c0_82, %c0_83] : memref<1024x256xbf16, #tpu.memory_space<vmem>>, vector<1024x256xbf16>
    %cst_84 = arith.constant dense<0.000000e+00> : vector<16x256xf32>
    %187 = tpu.matmul %185, %186, %cst_84 {dimension_numbers = #tpu.dot_dimension_numbers<[1], [0], [0], [1], [0, 0, 1, 1], [], []>} : vector<16x1024xbf16>, vector<1024x256xbf16>, vector<16x256xf32> -> vector<16x256xf32>
    %c0_85 = arith.constant 0 : index
    %c0_86 = arith.constant 0 : index
    %188 = vector.load %arg18[%c0_85, %c0_86] : memref<1x256xf32, #tpu.memory_space<vmem>>, vector<1x256xf32>
    %189 = vector.broadcast %188 : vector<1x256xf32> to vector<16x256xf32>
    %190 = arith.addf %187, %189 : vector<16x256xf32>
    %cst_87 = arith.constant 7.48331499 : f32
    %191 = vector.broadcast %cst_87 : f32 to vector<16x256xf32>
    %192 = arith.mulf %164, %191 : vector<16x256xf32>
    %193 = arith.addf %192, %190 : vector<16x256xf32>
    %c0_88 = arith.constant 0 : index
    %c0_89 = arith.constant 0 : index
    %c0_90 = arith.constant 0 : index
    %194 = vector.load %arg19[%c0_88, %c0_89, %c0_90] : memref<1x16x256xf32, #tpu.memory_space<vmem>>, vector<1x16x256xf32>
    %195 = vector.shape_cast %194 : vector<1x16x256xf32> to vector<16x256xf32>
    %196 = vector.shape_cast %193 : vector<16x256xf32> to vector<1x16x256xf32>
    tpu.vector_store %arg19[%c0_88, %c0_89, %c0_90], %196 {strides = array<i32>} : memref<1x16x256xf32, #tpu.memory_space<vmem>>, vector<1x16x256xf32>,
    return
  }
  func.func @transform_0(%arg0: i32) -> (i32, i32, i32) {
    %c0_i32 = arith.constant 0 : i32
    %c0_i32_0 = arith.constant 0 : i32
    %c0_i32_1 = arith.constant 0 : i32
    return %arg0, %c0_i32, %c0_i32_0 : i32, i32, i32
  }
  func.func @transform_1(%arg0: i32) -> (i32, i32, i32) {
    %c0_i32 = arith.constant 0 : i32
    %c0_i32_0 = arith.constant 0 : i32
    %c0_i32_1 = arith.constant 0 : i32
    return %arg0, %c0_i32, %c0_i32_0 : i32, i32, i32
  }
  func.func @transform_2(%arg0: i32) -> (i32, i32, i32) {
    %c0_i32 = arith.constant 0 : i32
    %c0_i32_0 = arith.constant 0 : i32
    %c0_i32_1 = arith.constant 0 : i32
    return %arg0, %c0_i32, %c0_i32_0 : i32, i32, i32
  }
  func.func @transform_3(%arg0: i32) -> (i32, i32, i32) {
    %c0_i32 = arith.constant 0 : i32
    %c0_i32_0 = arith.constant 0 : i32
    %c0_i32_1 = arith.constant 0 : i32
    return %arg0, %c0_i32, %c0_i32_0 : i32, i32, i32
  }
  func.func @transform_4(%arg0: i32) -> (i32, i32, i32) {
    %c0_i32 = arith.constant 0 : i32
    %c0_i32_0 = arith.constant 0 : i32
    %c0_i32_1 = arith.constant 0 : i32
    return %arg0, %c0_i32, %c0_i32_0 : i32, i32, i32
  }
  func.func @transform_5(%arg0: i32) -> (i32, i32, i32, i32, i32) {
    %c0_i32 = arith.constant 0 : i32
    %c0_i32_0 = arith.constant 0 : i32
    %c0_i32_1 = arith.constant 0 : i32
    %c0_i32_2 = arith.constant 0 : i32
    %c0_i32_3 = arith.constant 0 : i32
    return %c0_i32, %arg0, %c0_i32_0, %c0_i32_1, %c0_i32_2 : i32, i32, i32, i32, i32
  }
  func.func @transform_6(%arg0: i32) -> (i32, i32) {
    %c0_i32 = arith.constant 0 : i32
    %c0_i32_0 = arith.constant 0 : i32
    %c0_i32_1 = arith.constant 0 : i32
    return %c0_i32, %c0_i32_0 : i32, i32
  }
  func.func @transform_7(%arg0: i32) -> (i32, i32) {
    %c0_i32 = arith.constant 0 : i32
    %c0_i32_0 = arith.constant 0 : i32
    %c0_i32_1 = arith.constant 0 : i32
    return %c0_i32, %c0_i32_0 : i32, i32
  }
  func.func @transform_8(%arg0: i32) -> (i32, i32) {
    %c0_i32 = arith.constant 0 : i32
    %c0_i32_0 = arith.constant 0 : i32
    %c0_i32_1 = arith.constant 0 : i32
    return %c0_i32, %c0_i32_0 : i32, i32
  }
  func.func @transform_9(%arg0: i32) -> (i32, i32) {
    %c0_i32 = arith.constant 0 : i32
    %c0_i32_0 = arith.constant 0 : i32
    %c0_i32_1 = arith.constant 0 : i32
    return %c0_i32, %c0_i32_0 : i32, i32
  }
  func.func @transform_10(%arg0: i32) -> (i32, i32) {
    %c0_i32 = arith.constant 0 : i32
    %c0_i32_0 = arith.constant 0 : i32
    %c0_i32_1 = arith.constant 0 : i32
    return %c0_i32, %c0_i32_0 : i32, i32
  }
  func.func @transform_11(%arg0: i32) -> (i32, i32) {
    %c0_i32 = arith.constant 0 : i32
    %c0_i32_0 = arith.constant 0 : i32
    %c0_i32_1 = arith.constant 0 : i32
    return %c0_i32, %c0_i32_0 : i32, i32
  }
  func.func @transform_12(%arg0: i32) -> (i32, i32) {
    %c0_i32 = arith.constant 0 : i32
    %c0_i32_0 = arith.constant 0 : i32
    %c0_i32_1 = arith.constant 0 : i32
    return %c0_i32, %c0_i32_0 : i32, i32
  }
  func.func @transform_13(%arg0: i32) -> (i32, i32) {
    %c0_i32 = arith.constant 0 : i32
    %c0_i32_0 = arith.constant 0 : i32
    %c0_i32_1 = arith.constant 0 : i32
    return %c0_i32, %c0_i32_0 : i32, i32
  }
  func.func @transform_14(%arg0: i32) -> (i32, i32) {
    %c0_i32 = arith.constant 0 : i32
    %c0_i32_0 = arith.constant 0 : i32
    %c0_i32_1 = arith.constant 0 : i32
    return %c0_i32, %c0_i32_0 : i32, i32
  }
  func.func @transform_15(%arg0: i32) -> (i32, i32) {
    %c0_i32 = arith.constant 0 : i32
    %c0_i32_0 = arith.constant 0 : i32
    %c0_i32_1 = arith.constant 0 : i32
    return %c0_i32, %c0_i32_0 : i32, i32
  }
  func.func @transform_16(%arg0: i32) -> (i32, i32) {
    %c0_i32 = arith.constant 0 : i32
    %c0_i32_0 = arith.constant 0 : i32
    %c0_i32_1 = arith.constant 0 : i32
    return %c0_i32, %c0_i32_0 : i32, i32
  }
  func.func @transform_17(%arg0: i32) -> (i32, i32) {
    %c0_i32 = arith.constant 0 : i32
    %c0_i32_0 = arith.constant 0 : i32
    %c0_i32_1 = arith.constant 0 : i32
    return %c0_i32, %c0_i32_0 : i32, i32
  }
  func.func @transform_18(%arg0: i32) -> (i32, i32, i32) {
    %c0_i32 = arith.constant 0 : i32
    %c0_i32_0 = arith.constant 0 : i32
    %c0_i32_1 = arith.constant 0 : i32
    return %arg0, %c0_i32, %c0_i32_0 : i32, i32, i32
  }
  func.func @transform_19(%arg0: i32) -> (i32, i32, i32, i32, i32) {
    %c0_i32 = arith.constant 0 : i32
    %c0_i32_0 = arith.constant 0 : i32
    %c0_i32_1 = arith.constant 0 : i32
    %c0_i32_2 = arith.constant 0 : i32
    %c0_i32_3 = arith.constant 0 : i32
    return %c0_i32, %arg0, %c0_i32_0, %c0_i32_1, %c0_i32_2 : i32, i32, i32, i32, i32
  }
}

</mosaic_0001>

<llo_original>
// kernel: tpu_custom_call.1
$region0: #{tpu_custom_call.1}
  #allocation0 [shape = 'u32[]', space=smem, size = 0x4, offset = 0x4, fixed_abs, tag = 'smem constant byte address 0x4 - core index']
  #allocation1 [shape = 'u32[144,128]{1,0:T(1,128)}', space=vmem, size = 0x12000, scoped, tag = 'internal scratch']
  %s0 = inlined_call_operand.hbm [shape: f32[1,8,128], index: 0, kind: input, shape index: {}]
  %s1 = inlined_call_operand.hbm [shape: f32[1,8,128], index: 1, kind: output, shape index: {}]
  %s2 = sld [smem:[#allocation0]]
  $region18: #{tpu_custom_call.1} parent=0
    _
  %s4 = ssub.s32 1, %s2
  %s5 = scalar_select 0, %s4, %s2
  $region1: #{tpu_custom_call.1} parent=0
    #allocation2 [shape = 'u8[4096]{0}', space=vmem, size = 0x1000, scoped, tag = 'input window, operand 0, single buffered']
    #allocation3 [shape = 's32[1]{0}', space=sflag, size = 0x4, scoped, tag = 'scoped memory for tpu_custom_call.1']
    #allocation4 [shape = 's32[1]{0}', space=sflag, size = 0x4, scoped, tag = 'scoped memory for tpu_custom_call.1']
    #allocation5 [shape = 'u8[4096]{0}', space=vmem, size = 0x1000, scoped, tag = 'output window, operand 0, single buffered']
    %6 = vsyncpa [#allocation3], 0
    %7 = vsyncpa [#allocation4], 0
    // Predicated region
    $region2: #{tpu_custom_call.1} parent=1 // pred_check
      _
    $region3: #{tpu_custom_call.1} parent=1 // pred_check_branch
      %9 = sbr.rel (0) target = $region5
    $region4: #{tpu_custom_call.1} parent=1 // pred_region
      %s11 = ssub.s32 128, 128
      %12 = vsyncadd [#allocation3], %s11
      %s14 = sshll.u32 [#allocation2], 4
      %s15 = int_to_ptr.vmem [resolvable:$true] %s14
      %17 = dma.hbm_to_vmem [thread:$0]  %s0, 128, %s15, [#allocation3]
    $region5: #{tpu_custom_call.1} parent=1 // pred_fallthru
      _
    // Predicated region
    $region6: #{tpu_custom_call.1} parent=1 // pred_check
      _
    $region7: #{tpu_custom_call.1} parent=1 // pred_check_branch
      %19 = sbr.rel (0) target = $region9
    $region8: #{tpu_custom_call.1} parent=1 // pred_region
      %20 = dma.done [#allocation3], 128
    $region9: #{tpu_custom_call.1} parent=1 // pred_fallthru
      _
    %v21 = vld [vmem:[#allocation2] sm:$0xff]
    %22 = vrot.lane.b32.xlu0 %v21, 96
    %v23 = vpop.permute.xlu0 %22
    %24 = vst [vmem:[#allocation5] sm:$0xff] %v23
    // Predicated region
    $region10: #{tpu_custom_call.1} parent=1 // pred_check
      _
    $region11: #{tpu_custom_call.1} parent=1 // pred_check_branch
      %26 = sbr.rel (0) target = $region13
    $region12: #{tpu_custom_call.1} parent=1 // pred_region
      %s28 = ssub.s32 128, 128
      %29 = vsyncadd [#allocation4], %s28
      %s31 = sshll.u32 [#allocation5], 4
      %s32 = int_to_ptr.vmem [resolvable:$true] %s31
      %34 = dma.vmem_to_hbm [thread:$0]  %s32, 128, %s1, [#allocation4]
    $region13: #{tpu_custom_call.1} parent=1 // pred_fallthru
      _
    // Predicated region
    $region14: #{tpu_custom_call.1} parent=1 // pred_check
      _
    $region15: #{tpu_custom_call.1} parent=1 // pred_check_branch
      %36 = sbr.rel (0) target = $region17
    $region16: #{tpu_custom_call.1} parent=1 // pred_region
      %37 = dma.done [#allocation4], 128
    $region17: #{tpu_custom_call.1} parent=1 // pred_fallthru
      _
    %38 = vsyncpa [#allocation3], 1
    %39 = vsyncpa [#allocation4], 1

// kernel: tpu_custom_call.1
$region0: #{tpu_custom_call.1}
  #allocation0 [shape = 'u32[]', space=smem, size = 0x4, offset = 0x4, fixed_abs, tag = 'smem constant byte address 0x4 - core index']
  #allocation1 [shape = 'u32[144,128]{1,0:T(1,128)}', space=vmem, size = 0x12000, scoped, tag = 'internal scratch']
  %s0 = inlined_call_operand.hbm [shape: f32[8,128], index: 0, kind: input, shape index: {}]
  %s1 = inlined_call_operand.hbm [shape: f32[8,128], index: 1, kind: output, shape index: {}]
  %s2 = sld [smem:[#allocation0]]
  $region41: #{tpu_custom_call.1} parent=0
    _
  %s4 = ssub.s32 1, %s2
  %s5 = scalar_select 0, %s4, %s2
  $region1: #{tpu_custom_call.1} parent=0
    #allocation2 [shape = 'u8[4096]{0}', space=vmem, size = 0x1000, scoped, tag = 'input window, operand 0, single buffered']
    #allocation3 [shape = 's32[2]{0}', space=sflag, size = 0x8, scoped, tag = 'scoped memory for tpu_custom_call.1']
    #allocation4 [shape = 's32[2]{0}', space=sflag, size = 0x8, scoped, tag = 'scoped memory for tpu_custom_call.1']
    #allocation5 [shape = 'u8[4096]{0}', space=vmem, size = 0x1000, scoped, tag = 'output window, operand 0, single buffered']
    %6 = vsyncpa [#allocation3], 0
    %7 = vsyncpa [#allocation4], 0
    loop: start=0, step=1, limit=4
    $region2: #{tpu_custom_call.1} parent=1 // loop_pre_header
      _
    $region3: #{tpu_custom_call.1} parent=1 // loop_header
      %s9 = sphi 0, %s13
      %p10 = scmp.ge.s32.totalorder %s9, 4
      %s17 = sphi 0, %s17
      %s19 = sphi 0, %s17
      %s20 = sphi 0, %s19
      %s34 = sphi 0, %s20
      %s38 = sphi 0, %s38
      %s40 = sphi 0, %s38
      %s41 = sphi 0, %s40
      %s55 = sphi 0, %s41
    $region4: #{tpu_custom_call.1} parent=1 // loop_header_branch
      %12 = sbr.rel (%p10) target = $region8
    $region5: #{tpu_custom_call.1} parent=1 // loop_body
      %s14 = ssub.s32 %s9, 1
      %s15 = ssub.s32 %s9, 2
      %s16 = sadd.s32 %s9, 1
      %s18 = sadd.s32 %s17, 1
      %p21 = scmp.eq.s32.totalorder %s9, 1
      %p22 = scmp.ne.s32.totalorder %s17, %s19
      %p23 = scmp.eq.s32.totalorder %s9, 0
      %p24 = por %p22, %p23
      %p25 = scmp.ne.s32.totalorder %s17, %s19
      %p26 = scmp.eq.s32.totalorder %s14, 1
      %p27 = por %p25, %p26
      %p28 = scmp.ne.s32.totalorder %s19, %s20
      %p29 = scmp.eq.s32.totalorder %s14, 0
      %p30 = por %p28, %p29
      %p31 = scmp.ne.s32.totalorder %s19, %s20
      %p32 = scmp.eq.s32.totalorder %s15, 1
      %p33 = por %p31, %p32
      %p35 = scmp.ne.s32.totalorder %s20, %s34
      %p36 = scmp.eq.s32.totalorder %s15, 0
      %p37 = por %p35, %p36
      %s39 = sadd.s32 %s38, 1
      %p42 = scmp.eq.s32.totalorder %s9, 1
      %p43 = scmp.ne.s32.totalorder %s38, %s40
      %p44 = scmp.eq.s32.totalorder %s9, 0
      %p45 = por %p43, %p44
      %p46 = scmp.ne.s32.totalorder %s38, %s40
      %p47 = scmp.eq.s32.totalorder %s14, 1
      %p48 = por %p46, %p47
      %p49 = scmp.ne.s32.totalorder %s40, %s41
      %p50 = scmp.eq.s32.totalorder %s14, 0
      %p51 = por %p49, %p50
      %p52 = scmp.ne.s32.totalorder %s40, %s41
      %p53 = scmp.eq.s32.totalorder %s15, 1
      %p54 = por %p52, %p53
      %p56 = scmp.ne.s32.totalorder %s41, %s55
      %p57 = scmp.eq.s32.totalorder %s15, 0
      %p58 = por %p56, %p57
      %p59 = scmp.le.s32.totalorder 1, %s9
      %p60 = scmp.lt.s32.totalorder %s9, 3
      %p61 = pnand %p59, %p60
      %p62 = pneg %p61
      // Predicated region
      $region9: #{tpu_custom_call.1} parent=5 // pred_check
        _
      $region10: #{tpu_custom_call.1} parent=5 // pred_check_branch
        %64 = sbr.rel (%p61) target = $region12
      $region11: #{tpu_custom_call.1} parent=5 // pred_region
        %s65 = ssub.s32 %s9, 1
        // Predicated region
        $region13: #{tpu_custom_call.1} parent=11 // pred_check
          %p66 = pneg %p30
        $region14: #{tpu_custom_call.1} parent=11 // pred_check_branch
          %68 = sbr.rel (%p66) target = $region16
        $region15: #{tpu_custom_call.1} parent=11 // pred_region
          %s70 = ssub.s32 128, 128
          %71 = vsyncadd [#allocation3], %s70
          %s73 = sshll.u32 [#allocation2], 4
          %s74 = int_to_ptr.vmem [resolvable:$true] %s73
          %76 = dma.hbm_to_vmem [thread:$0]  %s0, 128, %s74, [#allocation3]
        $region16: #{tpu_custom_call.1} parent=11 // pred_fallthru
          _
      $region12: #{tpu_custom_call.1} parent=5 // pred_fallthru
        _
      %p77 = scmp.lt.s32.totalorder %s9, 2
      // Predicated region
      $region17: #{tpu_custom_call.1} parent=5 // pred_check
        %p78 = pneg %p77
      $region18: #{tpu_custom_call.1} parent=5 // pred_check_branch
        %80 = sbr.rel (%p78) target = $region20
      $region19: #{tpu_custom_call.1} parent=5 // pred_region
        _
      $region20: #{tpu_custom_call.1} parent=5 // pred_fallthru
        _
      %p81 = scmp.le.s32.totalorder 1, %s9
      %p82 = scmp.lt.s32.totalorder %s9, 3
      %p83 = pnand %p81, %p82
      %p84 = pneg %p83
      // Predicated region
      $region21: #{tpu_custom_call.1} parent=5 // pred_check
        _
      $region22: #{tpu_custom_call.1} parent=5 // pred_check_branch
        %86 = sbr.rel (%p83) target = $region24
      $region23: #{tpu_custom_call.1} parent=5 // pred_region
        %s87 = ssub.s32 %s9, 1
        // Predicated region
        $region25: #{tpu_custom_call.1} parent=23 // pred_check
          %p88 = pneg %p30
        $region26: #{tpu_custom_call.1} parent=23 // pred_check_branch
          %90 = sbr.rel (%p88) target = $region28
        $region27: #{tpu_custom_call.1} parent=23 // pred_region
          %91 = dma.done [#allocation3], 128
        $region28: #{tpu_custom_call.1} parent=23 // pred_fallthru
          _
        %p92 = pneg %p30
        %p93 = pneg %p27
        %p94 = pneg %p51
        %p95 = pneg %p48
        %v96 = vld [vmem:[#allocation2] sm:$0xff]
        %v97 = vadd.f32 %v96, 1.0
        %98 = vst [vmem:[#allocation5] sm:$0xff] %v97
        // Predicated region
        $region29: #{tpu_custom_call.1} parent=23 // pred_check
          %p99 = pneg %p48
        $region30: #{tpu_custom_call.1} parent=23 // pred_check_branch
          %101 = sbr.rel (%p99) target = $region32
        $region31: #{tpu_custom_call.1} parent=23 // pred_region
          %s103 = ssub.s32 128, 128
          %104 = vsyncadd [#allocation4], %s103
          %s106 = sshll.u32 [#allocation5], 4
          %s107 = int_to_ptr.vmem [resolvable:$true] %s106
          %109 = dma.vmem_to_hbm [thread:$0]  %s107, 128, %s1, [#allocation4]
        $region32: #{tpu_custom_call.1} parent=23 // pred_fallthru
          _
        // Predicated region
        $region33: #{tpu_custom_call.1} parent=23 // pred_check
          %p110 = pneg %p48
        $region34: #{tpu_custom_call.1} parent=23 // pred_check_branch
          %112 = sbr.rel (%p110) target = $region36
        $region35: #{tpu_custom_call.1} parent=23 // pred_region
          %113 = dma.done [#allocation4], 128
        $region36: #{tpu_custom_call.1} parent=23 // pred_fallthru
          _
      $region24: #{tpu_custom_call.1} parent=5 // pred_fallthru
        _
      %p114 = scmp.le.s32.totalorder 2, %s9
      // Predicated region
      $region37: #{tpu_custom_call.1} parent=5 // pred_check
        %p115 = pneg %p114
      $region38: #{tpu_custom_call.1} parent=5 // pred_check_branch
        %117 = sbr.rel (%p115) target = $region40
      $region39: #{tpu_custom_call.1} parent=5 // pred_region
        %s118 = ssub.s32 %s9, 2
      $region40: #{tpu_custom_call.1} parent=5 // pred_fallthru
        _
    $region6: #{tpu_custom_call.1} parent=1 // loop_footer
      %s13 = sadd.s32 1, %s9
    $region7: #{tpu_custom_call.1} parent=1 // loop_footer_branch
      %8 = sbr.rel target = $region3
    $region8: #{tpu_custom_call.1} parent=1 // loop_exit
      _
    %119 = vsyncpa [#allocation3], 1
    %s120 = scalar_lea.sflag [#allocation3], 1
    %121 = vsyncpa %s120, 1
    %122 = vsyncpa [#allocation4], 1
    %s123 = scalar_lea.sflag [#allocation4], 1
    %124 = vsyncpa %s123, 1

// kernel: tpu_custom_call.1
$region0: #{tpu_custom_call.1}
  #allocation0 [shape = 'u32[]', space=smem, size = 0x4, offset = 0x4, fixed_abs, tag = 'smem constant byte address 0x4 - core index']
  #allocation1 [shape = 'u32[144,128]{1,0:T(1,128)}', space=vmem, size = 0x12000, scoped, tag = 'internal scratch']
  #allocation34 [shape = 's32[]', space=sflag, size = 0x4, offset = 0, fixed_abs, tag = 'sflag constant byte address 0x0 - dummy sync flag']
  #allocation36 [shape = 's32[]', space=sflag, size = 0x4, offset = 0, fixed_abs, tag = 'sflag constant byte address 0x0 - dummy sync flag']
  %s0 = inlined_call_operand.hbm [shape: f32[2,16,256], index: 0, kind: input, shape index: {}]
  %s1 = inlined_call_operand.hbm [shape: s8[2,16,32], index: 1, kind: input, shape index: {}]
  %s2 = inlined_call_operand.hbm [shape: f32[2,16,128], index: 2, kind: input, shape index: {}]
  %s3 = inlined_call_operand.hbm [shape: f32[2,16,128], index: 3, kind: input, shape index: {}]
  %s4 = inlined_call_operand.hbm [shape: f32[2,16,128], index: 4, kind: input, shape index: {}]
  %s5 = inlined_call_operand.hbm [shape: bf16[2,2,2,16,128], index: 5, kind: input, shape index: {}]
  %s6 = inlined_call_operand.hbm [shape: bf16[256,768], index: 6, kind: input, shape index: {}]
  %s7 = inlined_call_operand.hbm [shape: f32[1,768], index: 7, kind: input, shape index: {}]
  %s8 = inlined_call_operand.hbm [shape: bf16[256,256], index: 8, kind: input, shape index: {}]
  %s9 = inlined_call_operand.hbm [shape: f32[1,256], index: 9, kind: input, shape index: {}]
  %s10 = inlined_call_operand.hbm [shape: f32[1,256], index: 10, kind: input, shape index: {}]
  %s11 = inlined_call_operand.hbm [shape: f32[1,256], index: 11, kind: input, shape index: {}]
  %s12 = inlined_call_operand.hbm [shape: f32[1,256], index: 12, kind: input, shape index: {}]
  %s13 = inlined_call_operand.hbm [shape: f32[1,256], index: 13, kind: input, shape index: {}]
  %s14 = inlined_call_operand.hbm [shape: bf16[256,1024], index: 14, kind: input, shape index: {}]
  %s15 = inlined_call_operand.hbm [shape: f32[1,1024], index: 15, kind: input, shape index: {}]
  %s16 = inlined_call_operand.hbm [shape: bf16[1024,256], index: 16, kind: input, shape index: {}]
  %s17 = inlined_call_operand.hbm [shape: f32[1,256], index: 17, kind: input, shape index: {}]
  %s18 = inlined_call_operand.hbm [shape: f32[2,16,256], index: 18, kind: output, shape index: {0}]
  %s19 = inlined_call_operand.hbm [shape: bf16[2,2,2,32,128], index: 19, kind: output, shape index: {1}]
  %20 = xla_tuple %s18, %s19
  %s21 = sld [smem:[#allocation0]]
  $region185: #{tpu_custom_call.1} parent=0
    _
  %s23 = ssub.s32 1, %s21
  %s24 = scalar_select 0, %s23, %s21
  $region1: #{tpu_custom_call.1} parent=0
    #allocation2 [shape = 'u8[32768]{0}', space=vmem, size = 0x8000, scoped, tag = 'input window, operand 0']
    #allocation3 [shape = 's32[2]{0}', space=sflag, size = 0x8, scoped, tag = 'scoped memory for tpu_custom_call.1']
    #allocation4 [shape = 's32[2]{0}', space=sflag, size = 0x8, scoped, tag = 'scoped memory for tpu_custom_call.1']
    #allocation5 [shape = 'u8[4096]{0}', space=vmem, size = 0x1000, scoped, tag = 'input window, operand 1']
    #allocation6 [shape = 's32[2]{0}', space=sflag, size = 0x8, scoped, tag = 'scoped memory for tpu_custom_call.1']
    #allocation7 [shape = 'u8[16384]{0}', space=vmem, size = 0x4000, scoped, tag = 'input window, operand 2']
    #allocation8 [shape = 'u8[16384]{0}', space=vmem, size = 0x4000, scoped, tag = 'input window, operand 3']
    #allocation9 [shape = 's32[2]{0}', space=sflag, size = 0x8, scoped, tag = 'scoped memory for tpu_custom_call.1']
    #allocation10 [shape = 'u8[16384]{0}', space=vmem, size = 0x4000, scoped, tag = 'input window, operand 4']
    #allocation11 [shape = 'u8[32768]{0}', space=vmem, size = 0x8000, scoped, tag = 'input window, operand 5']
    #allocation12 [shape = 's32[2]{0}', space=sflag, size = 0x8, scoped, tag = 'scoped memory for tpu_custom_call.1']
    #allocation13 [shape = 'u8[393216]{0}', space=vmem, size = 0x60000, scoped, tag = 'input window, operand 6, single buffered']
    #allocation14 [shape = 'u8[3072]{0}', space=vmem, size = 0xc00, scoped, tag = 'input window, operand 7, single buffered']
    #allocation15 [shape = 's32[1]{0}', space=sflag, size = 0x4, scoped, tag = 'scoped memory for tpu_custom_call.1']
    #allocation16 [shape = 'u8[131072]{0}', space=vmem, size = 0x20000, scoped, tag = 'input window, operand 8, single buffered']
    #allocation17 [shape = 'u8[1024]{0}', space=vmem, size = 0x400, scoped, tag = 'input window, operand 9, single buffered']
    #allocation18 [shape = 's32[1]{0}', space=sflag, size = 0x4, scoped, tag = 'scoped memory for tpu_custom_call.1']
    #allocation19 [shape = 'u8[1024]{0}', space=vmem, size = 0x400, scoped, tag = 'input window, operand 10, single buffered']
    #allocation20 [shape = 'u8[1024]{0}', space=vmem, size = 0x400, scoped, tag = 'input window, operand 11, single buffered']
    #allocation21 [shape = 's32[1]{0}', space=sflag, size = 0x4, scoped, tag = 'scoped memory for tpu_custom_call.1']
    #allocation22 [shape = 'u8[1024]{0}', space=vmem, size = 0x400, scoped, tag = 'input window, operand 12, single buffered']
    #allocation23 [shape = 'u8[1024]{0}', space=vmem, size = 0x400, scoped, tag = 'input window, operand 13, single buffered']
    #allocation24 [shape = 's32[1]{0}', space=sflag, size = 0x4, scoped, tag = 'scoped memory for tpu_custom_call.1']
    #allocation25 [shape = 'u8[524288]{0}', space=vmem, size = 0x80000, scoped, tag = 'input window, operand 14, single buffered']
    #allocation26 [shape = 'u8[4096]{0}', space=vmem, size = 0x1000, scoped, tag = 'input window, operand 15, single buffered']
    #allocation27 [shape = 's32[1]{0}', space=sflag, size = 0x4, scoped, tag = 'scoped memory for tpu_custom_call.1']
    #allocation28 [shape = 'u8[524288]{0}', space=vmem, size = 0x80000, scoped, tag = 'input window, operand 16, single buffered']
    #allocation29 [shape = 'u8[1024]{0}', space=vmem, size = 0x400, scoped, tag = 'input window, operand 17, single buffered']
    #allocation30 [shape = 's32[1]{0}', space=sflag, size = 0x4, scoped, tag = 'scoped memory for tpu_custom_call.1']
    #allocation31 [shape = 'u8[32768]{0}', space=vmem, size = 0x8000, scoped, tag = 'output window, operand 0']
    #allocation32 [shape = 'u8[65536]{0}', space=vmem, size = 0x10000, scoped, tag = 'output window, operand 1']
    #allocation33 [shape = 's32[2]{0}', space=sflag, size = 0x8, scoped, tag = 'scoped memory for tpu_custom_call.1']
    %25 = vsyncpa [#allocation3], 0
    %s26 = scalar_lea.sflag [#allocation3], 1
    %27 = vsyncpa %s26, 0
    %28 = vsyncpa [#allocation6], 0
    %s29 = scalar_lea.sflag [#allocation6], 1
    %30 = vsyncpa %s29, 0
    %31 = vsyncpa [#allocation9], 0
    %s32 = scalar_lea.sflag [#allocation9], 1
    %33 = vsyncpa %s32, 0
    %34 = vsyncpa [#allocation12], 0
    %s35 = scalar_lea.sflag [#allocation12], 1
    %36 = vsyncpa %s35, 0
    %37 = vsyncpa [#allocation15], 0
    %38 = vsyncpa [#allocation18], 0
    %39 = vsyncpa [#allocation21], 0
    %40 = vsyncpa [#allocation24], 0
    %41 = vsyncpa [#allocation27], 0
    %42 = vsyncpa [#allocation30], 0
    %43 = vsyncpa [#allocation4], 0
    %s44 = scalar_lea.sflag [#allocation4], 1
    %45 = vsyncpa %s44, 0
    %46 = vsyncpa [#allocation33], 0
    %s47 = scalar_lea.sflag [#allocation33], 1
    %48 = vsyncpa %s47, 0
    loop: start=0, step=1, limit=4
    $region2: #{tpu_custom_call.1} parent=1 // loop_pre_header
      _
    $region3: #{tpu_custom_call.1} parent=1 // loop_header
      %s50 = sphi 0, %s54
      %p51 = scmp.ge.s32.totalorder %s50, 4
      %s60 = sphi 0, %s62
      %s63 = sphi 0, %s60
      %s64 = sphi 0, %s63
      %s80 = sphi 0, %s64
      %s86 = sphi 0, %s88
      %s89 = sphi 0, %s86
      %s90 = sphi 0, %s89
      %s106 = sphi 0, %s90
      %s112 = sphi 0, %s114
      %s115 = sphi 0, %s112
      %s116 = sphi 0, %s115
      %s132 = sphi 0, %s116
      %s138 = sphi 0, %s140
      %s141 = sphi 0, %s138
      %s142 = sphi 0, %s141
      %s158 = sphi 0, %s142
      %s164 = sphi 0, %s166
      %s167 = sphi 0, %s164
      %s168 = sphi 0, %s167
      %s184 = sphi 0, %s168
      %s190 = sphi 0, %s192
      %s193 = sphi 0, %s190
      %s194 = sphi 0, %s193
      %s210 = sphi 0, %s194
      %s214 = sphi 0, %s214
      %s216 = sphi 0, %s214
      %s217 = sphi 0, %s216
      %s231 = sphi 0, %s217
      %s235 = sphi 0, %s235
      %s237 = sphi 0, %s235
      %s238 = sphi 0, %s237
      %s252 = sphi 0, %s238
      %s256 = sphi 0, %s256
      %s258 = sphi 0, %s256
      %s259 = sphi 0, %s258
      %s273 = sphi 0, %s259
      %s277 = sphi 0, %s277
      %s279 = sphi 0, %s277
      %s280 = sphi 0, %s279
      %s294 = sphi 0, %s280
      %s298 = sphi 0, %s298
      %s300 = sphi 0, %s298
      %s301 = sphi 0, %s300
      %s315 = sphi 0, %s301
      %s319 = sphi 0, %s319
      %s321 = sphi 0, %s319
      %s322 = sphi 0, %s321
      %s336 = sphi 0, %s322
      %s340 = sphi 0, %s340
      %s342 = sphi 0, %s340
      %s343 = sphi 0, %s342
      %s357 = sphi 0, %s343
      %s361 = sphi 0, %s361
      %s363 = sphi 0, %s361
      %s364 = sphi 0, %s363
      %s378 = sphi 0, %s364
      %s382 = sphi 0, %s382
      %s384 = sphi 0, %s382
      %s385 = sphi 0, %s384
      %s399 = sphi 0, %s385
      %s403 = sphi 0, %s403
      %s405 = sphi 0, %s403
      %s406 = sphi 0, %s405
      %s420 = sphi 0, %s406
      %s424 = sphi 0, %s424
      %s426 = sphi 0, %s424
      %s427 = sphi 0, %s426
      %s441 = sphi 0, %s427
      %s445 = sphi 0, %s445
      %s447 = sphi 0, %s445
      %s448 = sphi 0, %s447
      %s462 = sphi 0, %s448
      %s468 = sphi 0, %s470
      %s471 = sphi 0, %s468
      %s472 = sphi 0, %s471
      %s488 = sphi 0, %s472
      %s494 = sphi 0, %s496
      %s497 = sphi 0, %s494
      %s498 = sphi 0, %s497
      %s514 = sphi 0, %s498
    $region4: #{tpu_custom_call.1} parent=1 // loop_header_branch
      %53 = sbr.rel (%p51) target = $region8
    $region5: #{tpu_custom_call.1} parent=1 // loop_body
      %s55 = ssub.s32 %s50, 1
      %s56 = ssub.s32 %s50, 2
      %s57 = sadd.s32 %s50, 1
      %s58 = ssub.s32 %s50, %s57
      %p59 = scmp.eq.s32.totalorder %s58, 0
      %s61 = sadd.s32 %s60, 1
      %s62 = scalar_select %p59, %s60, %s61
      %p65 = pneg %p59
      %p66 = scmp.eq.s32.totalorder %s50, 1
      %p67 = por %p65, %p66
      %p68 = scmp.ne.s32.totalorder %s60, %s63
      %p69 = scmp.eq.s32.totalorder %s50, 0
      %p70 = por %p68, %p69
      %p71 = scmp.ne.s32.totalorder %s60, %s63
      %p72 = scmp.eq.s32.totalorder %s55, 1
      %p73 = por %p71, %p72
      %p74 = scmp.ne.s32.totalorder %s63, %s64
      %p75 = scmp.eq.s32.totalorder %s55, 0
      %p76 = por %p74, %p75
      %p77 = scmp.ne.s32.totalorder %s63, %s64
      %p78 = scmp.eq.s32.totalorder %s56, 1
      %p79 = por %p77, %p78
      %p81 = scmp.ne.s32.totalorder %s64, %s80
      %p82 = scmp.eq.s32.totalorder %s56, 0
      %p83 = por %p81, %p82
      %s84 = ssub.s32 %s50, %s57
      %p85 = scmp.eq.s32.totalorder %s84, 0
      %s87 = sadd.s32 %s86, 1
      %s88 = scalar_select %p85, %s86, %s87
      %p91 = pneg %p85
      %p92 = scmp.eq.s32.totalorder %s50, 1
      %p93 = por %p91, %p92
      %p94 = scmp.ne.s32.totalorder %s86, %s89
      %p95 = scmp.eq.s32.totalorder %s50, 0
      %p96 = por %p94, %p95
      %p97 = scmp.ne.s32.totalorder %s86, %s89
      %p98 = scmp.eq.s32.totalorder %s55, 1
      %p99 = por %p97, %p98
      %p100 = scmp.ne.s32.totalorder %s89, %s90
      %p101 = scmp.eq.s32.totalorder %s55, 0
      %p102 = por %p100, %p101
      %p103 = scmp.ne.s32.totalorder %s89, %s90
      %p104 = scmp.eq.s32.totalorder %s56, 1
      %p105 = por %p103, %p104
      %p107 = scmp.ne.s32.totalorder %s90, %s106
      %p108 = scmp.eq.s32.totalorder %s56, 0
      %p109 = por %p107, %p108
      %s110 = ssub.s32 %s50, %s57
      %p111 = scmp.eq.s32.totalorder %s110, 0
      %s113 = sadd.s32 %s112, 1
      %s114 = scalar_select %p111, %s112, %s113
      %p117 = pneg %p111
      %p118 = scmp.eq.s32.totalorder %s50, 1
      %p119 = por %p117, %p118
      %p120 = scmp.ne.s32.totalorder %s112, %s115
      %p121 = scmp.eq.s32.totalorder %s50, 0
      %p122 = por %p120, %p121
      %p123 = scmp.ne.s32.totalorder %s112, %s115
      %p124 = scmp.eq.s32.totalorder %s55, 1
      %p125 = por %p123, %p124
      %p126 = scmp.ne.s32.totalorder %s115, %s116
      %p127 = scmp.eq.s32.totalorder %s55, 0
      %p128 = por %p126, %p127
      %p129 = scmp.ne.s32.totalorder %s115, %s116
      %p130 = scmp.eq.s32.totalorder %s56, 1
      %p131 = por %p129, %p130
      %p133 = scmp.ne.s32.totalorder %s116, %s132
      %p134 = scmp.eq.s32.totalorder %s56, 0
      %p135 = por %p133, %p134
      %s136 = ssub.s32 %s50, %s57
      %p137 = scmp.eq.s32.totalorder %s136, 0
      %s139 = sadd.s32 %s138, 1
      %s140 = scalar_select %p137, %s138, %s139
      %p143 = pneg %p137
      %p144 = scmp.eq.s32.totalorder %s50, 1
      %p145 = por %p143, %p144
      %p146 = scmp.ne.s32.totalorder %s138, %s141
      %p147 = scmp.eq.s32.totalorder %s50, 0
      %p148 = por %p146, %p147
      %p149 = scmp.ne.s32.totalorder %s138, %s141
      %p150 = scmp.eq.s32.totalorder %s55, 1
      %p151 = por %p149, %p150
      %p152 = scmp.ne.s32.totalorder %s141, %s142
      %p153 = scmp.eq.s32.totalorder %s55, 0
      %p154 = por %p152, %p153
      %p155 = scmp.ne.s32.totalorder %s141, %s142
      %p156 = scmp.eq.s32.totalorder %s56, 1
      %p157 = por %p155, %p156
      %p159 = scmp.ne.s32.totalorder %s142, %s158
      %p160 = scmp.eq.s32.totalorder %s56, 0
      %p161 = por %p159, %p160
      %s162 = ssub.s32 %s50, %s57
      %p163 = scmp.eq.s32.totalorder %s162, 0
      %s165 = sadd.s32 %s164, 1
      %s166 = scalar_select %p163, %s164, %s165
      %p169 = pneg %p163
      %p170 = scmp.eq.s32.totalorder %s50, 1
      %p171 = por %p169, %p170
      %p172 = scmp.ne.s32.totalorder %s164, %s167
      %p173 = scmp.eq.s32.totalorder %s50, 0
      %p174 = por %p172, %p173
      %p175 = scmp.ne.s32.totalorder %s164, %s167
      %p176 = scmp.eq.s32.totalorder %s55, 1
      %p177 = por %p175, %p176
      %p178 = scmp.ne.s32.totalorder %s167, %s168
      %p179 = scmp.eq.s32.totalorder %s55, 0
      %p180 = por %p178, %p179
      %p181 = scmp.ne.s32.totalorder %s167, %s168
      %p182 = scmp.eq.s32.totalorder %s56, 1
      %p183 = por %p181, %p182
      %p185 = scmp.ne.s32.totalorder %s168, %s184
      %p186 = scmp.eq.s32.totalorder %s56, 0
      %p187 = por %p185, %p186
      %s188 = ssub.s32 %s50, %s57
      %p189 = scmp.eq.s32.totalorder %s188, 0
      %s191 = sadd.s32 %s190, 1
      %s192 = scalar_select %p189, %s190, %s191
      %p195 = pneg %p189
      %p196 = scmp.eq.s32.totalorder %s50, 1
      %p197 = por %p195, %p196
      %p198 = scmp.ne.s32.totalorder %s190, %s193
      %p199 = scmp.eq.s32.totalorder %s50, 0
      %p200 = por %p198, %p199
      %p201 = scmp.ne.s32.totalorder %s190, %s193
      %p202 = scmp.eq.s32.totalorder %s55, 1
      %p203 = por %p201, %p202
      %p204 = scmp.ne.s32.totalorder %s193, %s194
      %p205 = scmp.eq.s32.totalorder %s55, 0
      %p206 = por %p204, %p205
      %p207 = scmp.ne.s32.totalorder %s193, %s194
      %p208 = scmp.eq.s32.totalorder %s56, 1
      %p209 = por %p207, %p208
      %p211 = scmp.ne.s32.totalorder %s194, %s210
      %p212 = scmp.eq.s32.totalorder %s56, 0
      %p213 = por %p211, %p212
      %s215 = sadd.s32 %s214, 1
      %p218 = scmp.eq.s32.totalorder %s50, 1
      %p219 = scmp.ne.s32.totalorder %s214, %s216
      %p220 = scmp.eq.s32.totalorder %s50, 0
      %p221 = por %p219, %p220
      %p222 = scmp.ne.s32.totalorder %s214, %s216
      %p223 = scmp.eq.s32.totalorder %s55, 1
      %p224 = por %p222, %p223
      %p225 = scmp.ne.s32.totalorder %s216, %s217
      %p226 = scmp.eq.s32.totalorder %s55, 0
      %p227 = por %p225, %p226
      %p228 = scmp.ne.s32.totalorder %s216, %s217
      %p229 = scmp.eq.s32.totalorder %s56, 1
      %p230 = por %p228, %p229
      %p232 = scmp.ne.s32.totalorder %s217, %s231
      %p233 = scmp.eq.s32.totalorder %s56, 0
      %p234 = por %p232, %p233
      %s236 = sadd.s32 %s235, 1
      %p239 = scmp.eq.s32.totalorder %s50, 1
      %p240 = scmp.ne.s32.totalorder %s235, %s237
      %p241 = scmp.eq.s32.totalorder %s50, 0
      %p242 = por %p240, %p241
      %p243 = scmp.ne.s32.totalorder %s235, %s237
      %p244 = scmp.eq.s32.totalorder %s55, 1
      %p245 = por %p243, %p244
      %p246 = scmp.ne.s32.totalorder %s237, %s238
      %p247 = scmp.eq.s32.totalorder %s55, 0
      %p248 = por %p246, %p247
      %p249 = scmp.ne.s32.totalorder %s237, %s238
      %p250 = scmp.eq.s32.totalorder %s56, 1
      %p251 = por %p249, %p250
      %p253 = scmp.ne.s32.totalorder %s238, %s252
      %p254 = scmp.eq.s32.totalorder %s56, 0
      %p255 = por %p253, %p254
      %s257 = sadd.s32 %s256, 1
      %p260 = scmp.eq.s32.totalorder %s50, 1
      %p261 = scmp.ne.s32.totalorder %s256, %s258
      %p262 = scmp.eq.s32.totalorder %s50, 0
      %p263 = por %p261, %p262
      %p264 = scmp.ne.s32.totalorder %s256, %s258
      %p265 = scmp.eq.s32.totalorder %s55, 1
      %p266 = por %p264, %p265
      %p267 = scmp.ne.s32.totalorder %s258, %s259
      %p268 = scmp.eq.s32.totalorder %s55, 0
      %p269 = por %p267, %p268
      %p270 = scmp.ne.s32.totalorder %s258, %s259
      %p271 = scmp.eq.s32.totalorder %s56, 1
      %p272 = por %p270, %p271
      %p274 = scmp.ne.s32.totalorder %s259, %s273
      %p275 = scmp.eq.s32.totalorder %s56, 0
      %p276 = por %p274, %p275
      %s278 = sadd.s32 %s277, 1
      %p281 = scmp.eq.s32.totalorder %s50, 1
      %p282 = scmp.ne.s32.totalorder %s277, %s279
      %p283 = scmp.eq.s32.totalorder %s50, 0
      %p284 = por %p282, %p283
      %p285 = scmp.ne.s32.totalorder %s277, %s279
      %p286 = scmp.eq.s32.totalorder %s55, 1
      %p287 = por %p285, %p286
      %p288 = scmp.ne.s32.totalorder %s279, %s280
      %p289 = scmp.eq.s32.totalorder %s55, 0
      %p290 = por %p288, %p289
      %p291 = scmp.ne.s32.totalorder %s279, %s280
      %p292 = scmp.eq.s32.totalorder %s56, 1
      %p293 = por %p291, %p292
      %p295 = scmp.ne.s32.totalorder %s280, %s294
      %p296 = scmp.eq.s32.totalorder %s56, 0
      %p297 = por %p295, %p296
      %s299 = sadd.s32 %s298, 1
      %p302 = scmp.eq.s32.totalorder %s50, 1
      %p303 = scmp.ne.s32.totalorder %s298, %s300
      %p304 = scmp.eq.s32.totalorder %s50, 0
      %p305 = por %p303, %p304
      %p306 = scmp.ne.s32.totalorder %s298, %s300
      %p307 = scmp.eq.s32.totalorder %s55, 1
      %p308 = por %p306, %p307
      %p309 = scmp.ne.s32.totalorder %s300, %s301
      %p310 = scmp.eq.s32.totalorder %s55, 0
      %p311 = por %p309, %p310
      %p312 = scmp.ne.s32.totalorder %s300, %s301
      %p313 = scmp.eq.s32.totalorder %s56, 1
      %p314 = por %p312, %p313
      %p316 = scmp.ne.s32.totalorder %s301, %s315
      %p317 = scmp.eq.s32.totalorder %s56, 0
      %p318 = por %p316, %p317
      %s320 = sadd.s32 %s319, 1
      %p323 = scmp.eq.s32.totalorder %s50, 1
      %p324 = scmp.ne.s32.totalorder %s319, %s321
      %p325 = scmp.eq.s32.totalorder %s50, 0
      %p326 = por %p324, %p325
      %p327 = scmp.ne.s32.totalorder %s319, %s321
      %p328 = scmp.eq.s32.totalorder %s55, 1
      %p329 = por %p327, %p328
      %p330 = scmp.ne.s32.totalorder %s321, %s322
      %p331 = scmp.eq.s32.totalorder %s55, 0
      %p332 = por %p330, %p331
      %p333 = scmp.ne.s32.totalorder %s321, %s322
      %p334 = scmp.eq.s32.totalorder %s56, 1
      %p335 = por %p333, %p334
      %p337 = scmp.ne.s32.totalorder %s322, %s336
      %p338 = scmp.eq.s32.totalorder %s56, 0
      %p339 = por %p337, %p338
      %s341 = sadd.s32 %s340, 1
      %p344 = scmp.eq.s32.totalorder %s50, 1
      %p345 = scmp.ne.s32.totalorder %s340, %s342
      %p346 = scmp.eq.s32.totalorder %s50, 0
      %p347 = por %p345, %p346
      %p348 = scmp.ne.s32.totalorder %s340, %s342
      %p349 = scmp.eq.s32.totalorder %s55, 1
      %p350 = por %p348, %p349
      %p351 = scmp.ne.s32.totalorder %s342, %s343
      %p352 = scmp.eq.s32.totalorder %s55, 0
      %p353 = por %p351, %p352
      %p354 = scmp.ne.s32.totalorder %s342, %s343
      %p355 = scmp.eq.s32.totalorder %s56, 1
      %p356 = por %p354, %p355
      %p358 = scmp.ne.s32.totalorder %s343, %s357
      %p359 = scmp.eq.s32.totalorder %s56, 0
      %p360 = por %p358, %p359
      %s362 = sadd.s32 %s361, 1
      %p365 = scmp.eq.s32.totalorder %s50, 1
      %p366 = scmp.ne.s32.totalorder %s361, %s363
      %p367 = scmp.eq.s32.totalorder %s50, 0
      %p368 = por %p366, %p367
      %p369 = scmp.ne.s32.totalorder %s361, %s363
      %p370 = scmp.eq.s32.totalorder %s55, 1
      %p371 = por %p369, %p370
      %p372 = scmp.ne.s32.totalorder %s363, %s364
      %p373 = scmp.eq.s32.totalorder %s55, 0
      %p374 = por %p372, %p373
      %p375 = scmp.ne.s32.totalorder %s363, %s364
      %p376 = scmp.eq.s32.totalorder %s56, 1
      %p377 = por %p375, %p376
      %p379 = scmp.ne.s32.totalorder %s364, %s378
      %p380 = scmp.eq.s32.totalorder %s56, 0
      %p381 = por %p379, %p380
      %s383 = sadd.s32 %s382, 1
      %p386 = scmp.eq.s32.totalorder %s50, 1
      %p387 = scmp.ne.s32.totalorder %s382, %s384
      %p388 = scmp.eq.s32.totalorder %s50, 0
      %p389 = por %p387, %p388
      %p390 = scmp.ne.s32.totalorder %s382, %s384
      %p391 = scmp.eq.s32.totalorder %s55, 1
      %p392 = por %p390, %p391
      %p393 = scmp.ne.s32.totalorder %s384, %s385
      %p394 = scmp.eq.s32.totalorder %s55, 0
      %p395 = por %p393, %p394
      %p396 = scmp.ne.s32.totalorder %s384, %s385
      %p397 = scmp.eq.s32.totalorder %s56, 1
      %p398 = por %p396, %p397
      %p400 = scmp.ne.s32.totalorder %s385, %s399
      %p401 = scmp.eq.s32.totalorder %s56, 0
      %p402 = por %p400, %p401
      %s404 = sadd.s32 %s403, 1
      %p407 = scmp.eq.s32.totalorder %s50, 1
      %p408 = scmp.ne.s32.totalorder %s403, %s405
      %p409 = scmp.eq.s32.totalorder %s50, 0
      %p410 = por %p408, %p409
      %p411 = scmp.ne.s32.totalorder %s403, %s405
      %p412 = scmp.eq.s32.totalorder %s55, 1
      %p413 = por %p411, %p412
      %p414 = scmp.ne.s32.totalorder %s405, %s406
      %p415 = scmp.eq.s32.totalorder %s55, 0
      %p416 = por %p414, %p415
      %p417 = scmp.ne.s32.totalorder %s405, %s406
      %p418 = scmp.eq.s32.totalorder %s56, 1
      %p419 = por %p417, %p418
      %p421 = scmp.ne.s32.totalorder %s406, %s420
      %p422 = scmp.eq.s32.totalorder %s56, 0
      %p423 = por %p421, %p422
      %s425 = sadd.s32 %s424, 1
      %p428 = scmp.eq.s32.totalorder %s50, 1
      %p429 = scmp.ne.s32.totalorder %s424, %s426
      %p430 = scmp.eq.s32.totalorder %s50, 0
      %p431 = por %p429, %p430
      %p432 = scmp.ne.s32.totalorder %s424, %s426
      %p433 = scmp.eq.s32.totalorder %s55, 1
      %p434 = por %p432, %p433
      %p435 = scmp.ne.s32.totalorder %s426, %s427
      %p436 = scmp.eq.s32.totalorder %s55, 0
      %p437 = por %p435, %p436
      %p438 = scmp.ne.s32.totalorder %s426, %s427
      %p439 = scmp.eq.s32.totalorder %s56, 1
      %p440 = por %p438, %p439
      %p442 = scmp.ne.s32.totalorder %s427, %s441
      %p443 = scmp.eq.s32.totalorder %s56, 0
      %p444 = por %p442, %p443
      %s446 = sadd.s32 %s445, 1
      %p449 = scmp.eq.s32.totalorder %s50, 1
      %p450 = scmp.ne.s32.totalorder %s445, %s447
      %p451 = scmp.eq.s32.totalorder %s50, 0
      %p452 = por %p450, %p451
      %p453 = scmp.ne.s32.totalorder %s445, %s447
      %p454 = scmp.eq.s32.totalorder %s55, 1
      %p455 = por %p453, %p454
      %p456 = scmp.ne.s32.totalorder %s447, %s448
      %p457 = scmp.eq.s32.totalorder %s55, 0
      %p458 = por %p456, %p457
      %p459 = scmp.ne.s32.totalorder %s447, %s448
      %p460 = scmp.eq.s32.totalorder %s56, 1
      %p461 = por %p459, %p460
      %p463 = scmp.ne.s32.totalorder %s448, %s462
      %p464 = scmp.eq.s32.totalorder %s56, 0
      %p465 = por %p463, %p464
      %s466 = ssub.s32 %s50, %s57
      %p467 = scmp.eq.s32.totalorder %s466, 0
      %s469 = sadd.s32 %s468, 1
      %s470 = scalar_select %p467, %s468, %s469
      %p473 = pneg %p467
      %p474 = scmp.eq.s32.totalorder %s50, 1
      %p475 = por %p473, %p474
      %p476 = scmp.ne.s32.totalorder %s468, %s471
      %p477 = scmp.eq.s32.totalorder %s50, 0
      %p478 = por %p476, %p477
      %p479 = scmp.ne.s32.totalorder %s468, %s471
      %p480 = scmp.eq.s32.totalorder %s55, 1
      %p481 = por %p479, %p480
      %p482 = scmp.ne.s32.totalorder %s471, %s472
      %p483 = scmp.eq.s32.totalorder %s55, 0
      %p484 = por %p482, %p483
      %p485 = scmp.ne.s32.totalorder %s471, %s472
      %p486 = scmp.eq.s32.totalorder %s56, 1
      %p487 = por %p485, %p486
      %p489 = scmp.ne.s32.totalorder %s472, %s488
      %p490 = scmp.eq.s32.totalorder %s56, 0
      %p491 = por %p489, %p490
      %s492 = ssub.s32 %s50, %s57
      %p493 = scmp.eq.s32.totalorder %s492, 0
      %s495 = sadd.s32 %s494, 1
      %s496 = scalar_select %p493, %s494, %s495
      %p499 = pneg %p493
      %p500 = scmp.eq.s32.totalorder %s50, 1
      %p501 = por %p499, %p500
      %p502 = scmp.ne.s32.totalorder %s494, %s497
      %p503 = scmp.eq.s32.totalorder %s50, 0
      %p504 = por %p502, %p503
      %p505 = scmp.ne.s32.totalorder %s494, %s497
      %p506 = scmp.eq.s32.totalorder %s55, 1
      %p507 = por %p505, %p506
      %p508 = scmp.ne.s32.totalorder %s497, %s498
      %p509 = scmp.eq.s32.totalorder %s55, 0
      %p510 = por %p508, %p509
      %p511 = scmp.ne.s32.totalorder %s497, %s498
      %p512 = scmp.eq.s32.totalorder %s56, 1
      %p513 = por %p511, %p512
      %p515 = scmp.ne.s32.totalorder %s498, %s514
      %p516 = scmp.eq.s32.totalorder %s56, 0
      %p517 = por %p515, %p516
      %p518 = scmp.le.s32.totalorder 1, %s50
      %p519 = scmp.lt.s32.totalorder %s50, 3
      %p520 = pnand %p518, %p519
      %p521 = pneg %p520
      // Predicated region
      $region9: #{tpu_custom_call.1} parent=5 // pred_check
        _
      $region10: #{tpu_custom_call.1} parent=5 // pred_check_branch
        %523 = sbr.rel (%p520) target = $region12
      $region11: #{tpu_custom_call.1} parent=5 // pred_region
        %s524 = ssub.s32 %s50, 1
        // Predicated region
        $region13: #{tpu_custom_call.1} parent=11 // pred_check
          %p525 = pneg %p227
        $region14: #{tpu_custom_call.1} parent=11 // pred_check_branch
          %527 = sbr.rel (%p525) target = $region16
        $region15: #{tpu_custom_call.1} parent=11 // pred_region
          %s529 = ssub.s32 12288, 12288
          %530 = vsyncadd [#allocation12], %s529
          %s531 = sshll.u32 [#allocation13], 4
          %s532 = int_to_ptr.vmem [resolvable:$true] %s531
          %537 = dma.hbm_to_vmem [thread:$0]  %s6, 12288, %s532, [#allocation12], 384, 384, 24
        $region16: #{tpu_custom_call.1} parent=11 // pred_fallthru
          _
        // Predicated region
        $region17: #{tpu_custom_call.1} parent=11 // pred_check
          %p538 = pneg %p248
        $region18: #{tpu_custom_call.1} parent=11 // pred_check_branch
          %540 = sbr.rel (%p538) target = $region20
        $region19: #{tpu_custom_call.1} parent=11 // pred_region
          %s542 = ssub.s32 96, 96
          %543 = vsyncadd [#allocation15], %s542
          %s545 = sshll.u32 [#allocation14], 4
          %s546 = int_to_ptr.vmem [resolvable:$true] %s545
          %548 = dma.hbm_to_vmem [thread:$0]  %s7, 96, %s546, [#allocation15]
        $region20: #{tpu_custom_call.1} parent=11 // pred_fallthru
          _
        // Predicated region
        $region21: #{tpu_custom_call.1} parent=11 // pred_check
          %p549 = pneg %p269
        $region22: #{tpu_custom_call.1} parent=11 // pred_check_branch
          %551 = sbr.rel (%p549) target = $region24
        $region23: #{tpu_custom_call.1} parent=11 // pred_region
          %s553 = ssub.s32 4096, 4096
          %554 = vsyncadd [#allocation15], %s553
          %s555 = sshll.u32 [#allocation16], 4
          %s556 = int_to_ptr.vmem [resolvable:$true] %s555
          %561 = dma.hbm_to_vmem [thread:$0]  %s8, 4096, %s556, [#allocation15], 128, 128, 8
        $region24: #{tpu_custom_call.1} parent=11 // pred_fallthru
          _
        // Predicated region
        $region25: #{tpu_custom_call.1} parent=11 // pred_check
          %p562 = pneg %p290
        $region26: #{tpu_custom_call.1} parent=11 // pred_check_branch
          %564 = sbr.rel (%p562) target = $region28
        $region27: #{tpu_custom_call.1} parent=11 // pred_region
          %s566 = ssub.s32 32, 32
          %567 = vsyncadd [#allocation18], %s566
          %s569 = sshll.u32 [#allocation17], 4
          %s570 = int_to_ptr.vmem [resolvable:$true] %s569
          %572 = dma.hbm_to_vmem [thread:$0]  %s9, 32, %s570, [#allocation18]
        $region28: #{tpu_custom_call.1} parent=11 // pred_fallthru
          _
        // Predicated region
        $region29: #{tpu_custom_call.1} parent=11 // pred_check
          %p573 = pneg %p311
        $region30: #{tpu_custom_call.1} parent=11 // pred_check_branch
          %575 = sbr.rel (%p573) target = $region32
        $region31: #{tpu_custom_call.1} parent=11 // pred_region
          %s577 = ssub.s32 32, 32
          %578 = vsyncadd [#allocation18], %s577
          %s580 = sshll.u32 [#allocation19], 4
          %s581 = int_to_ptr.vmem [resolvable:$true] %s580
          %583 = dma.hbm_to_vmem [thread:$0]  %s10, 32, %s581, [#allocation18]
        $region32: #{tpu_custom_call.1} parent=11 // pred_fallthru
          _
        // Predicated region
        $region33: #{tpu_custom_call.1} parent=11 // pred_check
          %p584 = pneg %p332
        $region34: #{tpu_custom_call.1} parent=11 // pred_check_branch
          %586 = sbr.rel (%p584) target = $region36
        $region35: #{tpu_custom_call.1} parent=11 // pred_region
          %s588 = ssub.s32 32, 32
          %589 = vsyncadd [#allocation21], %s588
          %s591 = sshll.u32 [#allocation20], 4
          %s592 = int_to_ptr.vmem [resolvable:$true] %s591
          %594 = dma.hbm_to_vmem [thread:$0]  %s11, 32, %s592, [#allocation21]
        $region36: #{tpu_custom_call.1} parent=11 // pred_fallthru
          _
        // Predicated region
        $region37: #{tpu_custom_call.1} parent=11 // pred_check
          %p595 = pneg %p353
        $region38: #{tpu_custom_call.1} parent=11 // pred_check_branch
          %597 = sbr.rel (%p595) target = $region40
        $region39: #{tpu_custom_call.1} parent=11 // pred_region
          %s599 = ssub.s32 32, 32
          %600 = vsyncadd [#allocation21], %s599
          %s602 = sshll.u32 [#allocation22], 4
          %s603 = int_to_ptr.vmem [resolvable:$true] %s602
          %605 = dma.hbm_to_vmem [thread:$0]  %s12, 32, %s603, [#allocation21]
        $region40: #{tpu_custom_call.1} parent=11 // pred_fallthru
          _
        // Predicated region
        $region41: #{tpu_custom_call.1} parent=11 // pred_check
          %p606 = pneg %p374
        $region42: #{tpu_custom_call.1} parent=11 // pred_check_branch
          %608 = sbr.rel (%p606) target = $region44
        $region43: #{tpu_custom_call.1} parent=11 // pred_region
          %s610 = ssub.s32 32, 32
          %611 = vsyncadd [#allocation24], %s610
          %s613 = sshll.u32 [#allocation23], 4
          %s614 = int_to_ptr.vmem [resolvable:$true] %s613
          %616 = dma.hbm_to_vmem [thread:$0]  %s13, 32, %s614, [#allocation24]
        $region44: #{tpu_custom_call.1} parent=11 // pred_fallthru
          _
        // Predicated region
        $region45: #{tpu_custom_call.1} parent=11 // pred_check
          %p617 = pneg %p395
        $region46: #{tpu_custom_call.1} parent=11 // pred_check_branch
          %619 = sbr.rel (%p617) target = $region48
        $region47: #{tpu_custom_call.1} parent=11 // pred_region
          %s621 = ssub.s32 16384, 16384
          %622 = vsyncadd [#allocation24], %s621
          %s623 = sshll.u32 [#allocation25], 4
          %s624 = int_to_ptr.vmem [resolvable:$true] %s623
          %629 = dma.hbm_to_vmem [thread:$0]  %s14, 16384, %s624, [#allocation24], 512, 512, 32
        $region48: #{tpu_custom_call.1} parent=11 // pred_fallthru
          _
        // Predicated region
        $region49: #{tpu_custom_call.1} parent=11 // pred_check
          %p630 = pneg %p416
        $region50: #{tpu_custom_call.1} parent=11 // pred_check_branch
          %632 = sbr.rel (%p630) target = $region52
        $region51: #{tpu_custom_call.1} parent=11 // pred_region
          %s634 = ssub.s32 128, 128
          %635 = vsyncadd [#allocation27], %s634
          %s637 = sshll.u32 [#allocation26], 4
          %s638 = int_to_ptr.vmem [resolvable:$true] %s637
          %640 = dma.hbm_to_vmem [thread:$0]  %s15, 128, %s638, [#allocation27]
        $region52: #{tpu_custom_call.1} parent=11 // pred_fallthru
          _
        // Predicated region
        $region53: #{tpu_custom_call.1} parent=11 // pred_check
          %p641 = pneg %p437
        $region54: #{tpu_custom_call.1} parent=11 // pred_check_branch
          %643 = sbr.rel (%p641) target = $region56
        $region55: #{tpu_custom_call.1} parent=11 // pred_region
          %s645 = ssub.s32 16384, 16384
          %646 = vsyncadd [#allocation27], %s645
          %s647 = sshll.u32 [#allocation28], 4
          %s648 = int_to_ptr.vmem [resolvable:$true] %s647
          %653 = dma.hbm_to_vmem [thread:$0]  %s16, 16384, %s648, [#allocation27], 128, 128, 8
        $region56: #{tpu_custom_call.1} parent=11 // pred_fallthru
          _
        // Predicated region
        $region57: #{tpu_custom_call.1} parent=11 // pred_check
          %p654 = pneg %p458
        $region58: #{tpu_custom_call.1} parent=11 // pred_check_branch
          %656 = sbr.rel (%p654) target = $region60
        $region59: #{tpu_custom_call.1} parent=11 // pred_region
          %s658 = ssub.s32 32, 32
          %659 = vsyncadd [#allocation30], %s658
          %s661 = sshll.u32 [#allocation29], 4
          %s662 = int_to_ptr.vmem [resolvable:$true] %s661
          %664 = dma.hbm_to_vmem [thread:$0]  %s17, 32, %s662, [#allocation30]
        $region60: #{tpu_custom_call.1} parent=11 // pred_fallthru
          _
      $region12: #{tpu_custom_call.1} parent=5 // pred_fallthru
        _
      %p665 = scmp.lt.s32.totalorder %s50, 2
      // Predicated region
      $region61: #{tpu_custom_call.1} parent=5 // pred_check
        %p666 = pneg %p665
      $region62: #{tpu_custom_call.1} parent=5 // pred_check_branch
        %668 = sbr.rel (%p666) target = $region64
      $region63: #{tpu_custom_call.1} parent=5 // pred_region
        // Predicated region
        $region65: #{tpu_custom_call.1} parent=63 // pred_check
          %p669 = pneg %p70
        $region66: #{tpu_custom_call.1} parent=63 // pred_check_branch
          %671 = sbr.rel (%p669) target = $region68
        $region67: #{tpu_custom_call.1} parent=63 // pred_region
          %s672 = sand.u32 %s60, 1
          %s673 = scalar_lea.sflag [#allocation3], %s672
          %s674 = sand.u32 %s60, 1
          %s675 = smul.addr %s674, 32
          %s676 = scalar_lea.vmem [#allocation2], %s675
          %s678 = ssub.s32 512, 512
          %679 = vsyncadd %s673, %s678
          %s680 = smul.addr %s50, 4
          %s681 = smul.addr %s680, 128
          %s682 = scalar_lea.hbm %s0, %s681
          %s683 = sshll.u32 %s676, 4
          %s684 = int_to_ptr.vmem [resolvable:$true] %s683
          %689 = dma.hbm_to_vmem [thread:$0]  %s682, 512, %s684, %s673, 256, 256, 16
        $region68: #{tpu_custom_call.1} parent=63 // pred_fallthru
          _
        // Predicated region
        $region69: #{tpu_custom_call.1} parent=63 // pred_check
          %p690 = pneg %p96
        $region70: #{tpu_custom_call.1} parent=63 // pred_check_branch
          %692 = sbr.rel (%p690) target = $region72
        $region71: #{tpu_custom_call.1} parent=63 // pred_region
          %s693 = sand.u32 %s50, 1
          %s694 = scalar_lea.sflag [#allocation6], %s693
          %s695 = sand.u32 %s86, 1
          %s696 = smul.addr %s695, 4
          %s697 = scalar_lea.vmem [#allocation5], %s696
          %s699 = ssub.s32 64, 64
          %700 = vsyncadd %s694, %s699
          %s701 = smul.addr %s50, 2
          %s702 = smul.addr %s701, 32
          %s703 = scalar_lea.hbm %s1, %s702
          %s704 = sshll.u32 %s697, 4
          %s705 = int_to_ptr.vmem [resolvable:$true] %s704
          %710 = dma.hbm_to_vmem [thread:$0]  %s703, 64, %s705, %s694, 32, 32, 2
        $region72: #{tpu_custom_call.1} parent=63 // pred_fallthru
          _
        // Predicated region
        $region73: #{tpu_custom_call.1} parent=63 // pred_check
          %p711 = pneg %p122
        $region74: #{tpu_custom_call.1} parent=63 // pred_check_branch
          %713 = sbr.rel (%p711) target = $region76
        $region75: #{tpu_custom_call.1} parent=63 // pred_region
          %s714 = sand.u32 %s50, 1
          %s715 = scalar_lea.sflag [#allocation6], %s714
          %s716 = sand.u32 %s112, 1
          %s717 = smul.addr %s716, 16
          %s718 = scalar_lea.vmem [#allocation7], %s717
          %s720 = ssub.s32 256, 256
          %721 = vsyncadd %s715, %s720
          %s722 = smul.addr %s50, 2
          %s723 = smul.addr %s722, 128
          %s724 = scalar_lea.hbm %s2, %s723
          %s725 = sshll.u32 %s718, 4
          %s726 = int_to_ptr.vmem [resolvable:$true] %s725
          %731 = dma.hbm_to_vmem [thread:$0]  %s724, 256, %s726, %s715, 128, 128, 8
        $region76: #{tpu_custom_call.1} parent=63 // pred_fallthru
          _
        // Predicated region
        $region77: #{tpu_custom_call.1} parent=63 // pred_check
          %p732 = pneg %p148
        $region78: #{tpu_custom_call.1} parent=63 // pred_check_branch
          %734 = sbr.rel (%p732) target = $region80
        $region79: #{tpu_custom_call.1} parent=63 // pred_region
          %s735 = sand.u32 %s50, 1
          %s736 = scalar_lea.sflag [#allocation9], %s735
          %s737 = sand.u32 %s138, 1
          %s738 = smul.addr %s737, 16
          %s739 = scalar_lea.vmem [#allocation8], %s738
          %s741 = ssub.s32 256, 256
          %742 = vsyncadd %s736, %s741
          %s743 = smul.addr %s50, 2
          %s744 = smul.addr %s743, 128
          %s745 = scalar_lea.hbm %s3, %s744
          %s746 = sshll.u32 %s739, 4
          %s747 = int_to_ptr.vmem [resolvable:$true] %s746
          %752 = dma.hbm_to_vmem [thread:$0]  %s745, 256, %s747, %s736, 128, 128, 8
        $region80: #{tpu_custom_call.1} parent=63 // pred_fallthru
          _
        // Predicated region
        $region81: #{tpu_custom_call.1} parent=63 // pred_check
          %p753 = pneg %p174
        $region82: #{tpu_custom_call.1} parent=63 // pred_check_branch
          %755 = sbr.rel (%p753) target = $region84
        $region83: #{tpu_custom_call.1} parent=63 // pred_region
          %s756 = sand.u32 %s50, 1
          %s757 = scalar_lea.sflag [#allocation9], %s756
          %s758 = sand.u32 %s164, 1
          %s759 = smul.addr %s758, 16
          %s760 = scalar_lea.vmem [#allocation10], %s759
          %s762 = ssub.s32 256, 256
          %763 = vsyncadd %s757, %s762
          %s764 = smul.addr %s50, 2
          %s765 = smul.addr %s764, 128
          %s766 = scalar_lea.hbm %s4, %s765
          %s767 = sshll.u32 %s760, 4
          %s768 = int_to_ptr.vmem [resolvable:$true] %s767
          %773 = dma.hbm_to_vmem [thread:$0]  %s766, 256, %s768, %s757, 128, 128, 8
        $region84: #{tpu_custom_call.1} parent=63 // pred_fallthru
          _
        // Predicated region
        $region85: #{tpu_custom_call.1} parent=63 // pred_check
          %p774 = pneg %p200
        $region86: #{tpu_custom_call.1} parent=63 // pred_check_branch
          %776 = sbr.rel (%p774) target = $region88
        $region87: #{tpu_custom_call.1} parent=63 // pred_region
          #allocation35 [shape = 'u32[6]{0}', space=smem, size = 0x18, scoped, tag = 'DMA stride descriptor']
          %s777 = sand.u32 %s50, 1
          %s778 = scalar_lea.sflag [#allocation12], %s777
          %s779 = sand.u32 %s190, 1
          %s780 = smul.addr %s779, 32
          %s781 = scalar_lea.vmem [#allocation11], %s780
          %s783 = ssub.s32 512, 512
          %784 = vsyncadd %s778, %s783
          %s785 = smul.addr %s50, 4
          %s786 = smul.addr %s785, 64
          %s787 = scalar_lea.hbm %s5, %s786
          %s789 = sshll.u32 1, 14
          %s790 = sxor.u32 4294967295, %s789
          %s792 = sld [smem:[#allocation0]]
          %s793 = sadd.s32 2, %s792
          %s795 = sshll.u32 7, 26
          %s796 = sxor.u32 4294967295, %s795
          %s797 = sand.u32 0, %s796
          %s798 = sshll.u32 %s793, 26
          %s799 = sor.u32 %s797, %s798
          %s800 = sshll.u32 %s781, 4
          %s801 = int_to_ptr.vmem [resolvable:$true] %s800
          %807 = sst [smem:[#allocation35]] 512
          %s808 = scalar_lea.smem [#allocation35], 1
          %809 = sst [smem:[%s808]] 256
          %s810 = scalar_lea.smem [#allocation35], 2
          %811 = sst [smem:[%s810]] 4
          %s812 = scalar_lea.smem [#allocation35], 3
          %813 = sst [smem:[%s812]] 64
          %s814 = scalar_lea.smem [#allocation35], 4
          %815 = sst [smem:[%s814]] 64
          %s816 = scalar_lea.smem [#allocation35], 5
          %817 = sst [smem:[%s816]] 4
          %819 = dma.general %s787, 512, %s801, %s778, [#allocation34], [#allocation35], %s799, 0
        $region88: #{tpu_custom_call.1} parent=63 // pred_fallthru
          _
      $region64: #{tpu_custom_call.1} parent=5 // pred_fallthru
        _
      %p820 = scmp.le.s32.totalorder 1, %s50
      %p821 = scmp.lt.s32.totalorder %s50, 3
      %p822 = pnand %p820, %p821
      %p823 = pneg %p822
      // Predicated region
      $region89: #{tpu_custom_call.1} parent=5 // pred_check
        _
      $region90: #{tpu_custom_call.1} parent=5 // pred_check_branch
        %825 = sbr.rel (%p822) target = $region92
      $region91: #{tpu_custom_call.1} parent=5 // pred_region
        %s826 = ssub.s32 %s50, 1
        %s827 = sand.u32 %s63, 1
        %s828 = scalar_lea.sflag [#allocation3], %s827
        %s829 = sand.u32 %s63, 1
        %s830 = smul.addr %s829, 32
        %s831 = scalar_lea.vmem [#allocation2], %s830
        // Predicated region
        $region93: #{tpu_custom_call.1} parent=91 // pred_check
          %p832 = pneg %p76
        $region94: #{tpu_custom_call.1} parent=91 // pred_check_branch
          %834 = sbr.rel (%p832) target = $region96
        $region95: #{tpu_custom_call.1} parent=91 // pred_region
          %835 = dma.done %s828, 512
        $region96: #{tpu_custom_call.1} parent=91 // pred_fallthru
          _
        %s836 = sand.u32 %s55, 1
        %s837 = scalar_lea.sflag [#allocation6], %s836
        %s838 = sand.u32 %s89, 1
        %s839 = smul.addr %s838, 4
        %s840 = scalar_lea.vmem [#allocation5], %s839
        // Predicated region
        $region97: #{tpu_custom_call.1} parent=91 // pred_check
          %p841 = pneg %p102
        $region98: #{tpu_custom_call.1} parent=91 // pred_check_branch
          %843 = sbr.rel (%p841) target = $region100
        $region99: #{tpu_custom_call.1} parent=91 // pred_region
          %844 = dma.done %s837, 64
        $region100: #{tpu_custom_call.1} parent=91 // pred_fallthru
          _
        %s845 = sand.u32 %s55, 1
        %s846 = scalar_lea.sflag [#allocation6], %s845
        %s847 = sand.u32 %s115, 1
        %s848 = smul.addr %s847, 16
        %s849 = scalar_lea.vmem [#allocation7], %s848
        // Predicated region
        $region101: #{tpu_custom_call.1} parent=91 // pred_check
          %p850 = pneg %p128
        $region102: #{tpu_custom_call.1} parent=91 // pred_check_branch
          %852 = sbr.rel (%p850) target = $region104
        $region103: #{tpu_custom_call.1} parent=91 // pred_region
          %853 = dma.done %s846, 256
        $region104: #{tpu_custom_call.1} parent=91 // pred_fallthru
          _
        %s854 = sand.u32 %s55, 1
        %s855 = scalar_lea.sflag [#allocation9], %s854
        %s856 = sand.u32 %s141, 1
        %s857 = smul.addr %s856, 16
        %s858 = scalar_lea.vmem [#allocation8], %s857
        // Predicated region
        $region105: #{tpu_custom_call.1} parent=91 // pred_check
          %p859 = pneg %p154
        $region106: #{tpu_custom_call.1} parent=91 // pred_check_branch
          %861 = sbr.rel (%p859) target = $region108
        $region107: #{tpu_custom_call.1} parent=91 // pred_region
          %862 = dma.done %s855, 256
        $region108: #{tpu_custom_call.1} parent=91 // pred_fallthru
          _
        %s863 = sand.u32 %s55, 1
        %s864 = scalar_lea.sflag [#allocation9], %s863
        %s865 = sand.u32 %s167, 1
        %s866 = smul.addr %s865, 16
        %s867 = scalar_lea.vmem [#allocation10], %s866
        // Predicated region
        $region109: #{tpu_custom_call.1} parent=91 // pred_check
          %p868 = pneg %p180
        $region110: #{tpu_custom_call.1} parent=91 // pred_check_branch
          %870 = sbr.rel (%p868) target = $region112
        $region111: #{tpu_custom_call.1} parent=91 // pred_region
          %871 = dma.done %s864, 256
        $region112: #{tpu_custom_call.1} parent=91 // pred_fallthru
          _
        %s872 = sand.u32 %s55, 1
        %s873 = scalar_lea.sflag [#allocation12], %s872
        %s874 = sand.u32 %s193, 1
        %s875 = smul.addr %s874, 32
        %s876 = scalar_lea.vmem [#allocation11], %s875
        // Predicated region
        $region113: #{tpu_custom_call.1} parent=91 // pred_check
          %p877 = pneg %p206
        $region114: #{tpu_custom_call.1} parent=91 // pred_check_branch
          %879 = sbr.rel (%p877) target = $region116
        $region115: #{tpu_custom_call.1} parent=91 // pred_region
          %880 = dma.done %s873, 512
        $region116: #{tpu_custom_call.1} parent=91 // pred_fallthru
          _
        // Predicated region
        $region117: #{tpu_custom_call.1} parent=91 // pred_check
          %p881 = pneg %p227
        $region118: #{tpu_custom_call.1} parent=91 // pred_check_branch
          %883 = sbr.rel (%p881) target = $region120
        $region119: #{tpu_custom_call.1} parent=91 // pred_region
          %884 = dma.done [#allocation12], 12288
        $region120: #{tpu_custom_call.1} parent=91 // pred_fallthru
          _
        // Predicated region
        $region121: #{tpu_custom_call.1} parent=91 // pred_check
          %p885 = pneg %p248
        $region122: #{tpu_custom_call.1} parent=91 // pred_check_branch
          %887 = sbr.rel (%p885) target = $region124
        $region123: #{tpu_custom_call.1} parent=91 // pred_region
          %888 = dma.done [#allocation15], 96
        $region124: #{tpu_custom_call.1} parent=91 // pred_fallthru
          _
        // Predicated region
        $region125: #{tpu_custom_call.1} parent=91 // pred_check
          %p889 = pneg %p269
        $region126: #{tpu_custom_call.1} parent=91 // pred_check_branch
          %891 = sbr.rel (%p889) target = $region128
        $region127: #{tpu_custom_call.1} parent=91 // pred_region
          %892 = dma.done [#allocation15], 4096
        $region128: #{tpu_custom_call.1} parent=91 // pred_fallthru
          _
        // Predicated region
        $region129: #{tpu_custom_call.1} parent=91 // pred_check
          %p893 = pneg %p290
        $region130: #{tpu_custom_call.1} parent=91 // pred_check_branch
          %895 = sbr.rel (%p893) target = $region132
        $region131: #{tpu_custom_call.1} parent=91 // pred_region
          %896 = dma.done [#allocation18], 32
        $region132: #{tpu_custom_call.1} parent=91 // pred_fallthru
          _
        // Predicated region
        $region133: #{tpu_custom_call.1} parent=91 // pred_check
          %p897 = pneg %p311
        $region134: #{tpu_custom_call.1} parent=91 // pred_check_branch
          %899 = sbr.rel (%p897) target = $region136
        $region135: #{tpu_custom_call.1} parent=91 // pred_region
          %900 = dma.done [#allocation18], 32
        $region136: #{tpu_custom_call.1} parent=91 // pred_fallthru
          _
        // Predicated region
        $region137: #{tpu_custom_call.1} parent=91 // pred_check
          %p901 = pneg %p332
        $region138: #{tpu_custom_call.1} parent=91 // pred_check_branch
          %903 = sbr.rel (%p901) target = $region140
        $region139: #{tpu_custom_call.1} parent=91 // pred_region
          %904 = dma.done [#allocation21], 32
        $region140: #{tpu_custom_call.1} parent=91 // pred_fallthru
          _
        // Predicated region
        $region141: #{tpu_custom_call.1} parent=91 // pred_check
          %p905 = pneg %p353
        $region142: #{tpu_custom_call.1} parent=91 // pred_check_branch
          %907 = sbr.rel (%p905) target = $region144
        $region143: #{tpu_custom_call.1} parent=91 // pred_region
          %908 = dma.done [#allocation21], 32
        $region144: #{tpu_custom_call.1} parent=91 // pred_fallthru
          _
        // Predicated region
        $region145: #{tpu_custom_call.1} parent=91 // pred_check
          %p909 = pneg %p374
        $region146: #{tpu_custom_call.1} parent=91 // pred_check_branch
          %911 = sbr.rel (%p909) target = $region148
        $region147: #{tpu_custom_call.1} parent=91 // pred_region
          %912 = dma.done [#allocation24], 32
        $region148: #{tpu_custom_call.1} parent=91 // pred_fallthru
          _
        // Predicated region
        $region149: #{tpu_custom_call.1} parent=91 // pred_check
          %p913 = pneg %p395
        $region150: #{tpu_custom_call.1} parent=91 // pred_check_branch
          %915 = sbr.rel (%p913) target = $region152
        $region151: #{tpu_custom_call.1} parent=91 // pred_region
          %916 = dma.done [#allocation24], 16384
        $region152: #{tpu_custom_call.1} parent=91 // pred_fallthru
          _
        // Predicated region
        $region153: #{tpu_custom_call.1} parent=91 // pred_check
          %p917 = pneg %p416
        $region154: #{tpu_custom_call.1} parent=91 // pred_check_branch
          %919 = sbr.rel (%p917) target = $region156
        $region155: #{tpu_custom_call.1} parent=91 // pred_region
          %920 = dma.done [#allocation27], 128
        $region156: #{tpu_custom_call.1} parent=91 // pred_fallthru
          _
        // Predicated region
        $region157: #{tpu_custom_call.1} parent=91 // pred_check
          %p921 = pneg %p437
        $region158: #{tpu_custom_call.1} parent=91 // pred_check_branch
          %923 = sbr.rel (%p921) target = $region160
        $region159: #{tpu_custom_call.1} parent=91 // pred_region
          %924 = dma.done [#allocation27], 16384
        $region160: #{tpu_custom_call.1} parent=91 // pred_fallthru
          _
        // Predicated region
        $region161: #{tpu_custom_call.1} parent=91 // pred_check
          %p925 = pneg %p458
        $region162: #{tpu_custom_call.1} parent=91 // pred_check_branch
          %927 = sbr.rel (%p925) target = $region164
        $region163: #{tpu_custom_call.1} parent=91 // pred_region
          %928 = dma.done [#allocation30], 32
        $region164: #{tpu_custom_call.1} parent=91 // pred_fallthru
          _
        %s929 = sand.u32 %s63, 1
        %s930 = scalar_lea.sflag [#allocation3], %s929
        %s931 = sand.u32 %s63, 1
        %s932 = smul.addr %s931, 32
        %s933 = scalar_lea.vmem [#allocation2], %s932
        %p934 = pneg %p76
        %p935 = pneg %p73
        %s936 = sand.u32 %s55, 1
        %s937 = scalar_lea.sflag [#allocation6], %s936
        %s938 = sand.u32 %s89, 1
        %s939 = smul.addr %s938, 4
        %s940 = scalar_lea.vmem [#allocation5], %s939
        %p941 = pneg %p102
        %p942 = pneg %p99
        %s943 = sand.u32 %s55, 1
        %s944 = scalar_lea.sflag [#allocation6], %s943
        %s945 = sand.u32 %s115, 1
        %s946 = smul.addr %s945, 16
        %s947 = scalar_lea.vmem [#allocation7], %s946
        %p948 = pneg %p128
        %p949 = pneg %p125
        %s950 = sand.u32 %s55, 1
        %s951 = scalar_lea.sflag [#allocation9], %s950
        %s952 = sand.u32 %s141, 1
        %s953 = smul.addr %s952, 16
        %s954 = scalar_lea.vmem [#allocation8], %s953
        %p955 = pneg %p154
        %p956 = pneg %p151
        %s957 = sand.u32 %s55, 1
        %s958 = scalar_lea.sflag [#allocation9], %s957
        %s959 = sand.u32 %s167, 1
        %s960 = smul.addr %s959, 16
        %s961 = scalar_lea.vmem [#allocation10], %s960
        %p962 = pneg %p180
        %p963 = pneg %p177
        %s964 = sand.u32 %s55, 1
        %s965 = scalar_lea.sflag [#allocation12], %s964
        %s966 = sand.u32 %s193, 1
        %s967 = smul.addr %s966, 32
        %s968 = scalar_lea.vmem [#allocation11], %s967
        %p969 = pneg %p206
        %p970 = pneg %p203
        %p971 = pneg %p227
        %p972 = pneg %p224
        %p973 = pneg %p248
        %p974 = pneg %p245
        %p975 = pneg %p269
        %p976 = pneg %p266
        %p977 = pneg %p290
        %p978 = pneg %p287
        %p979 = pneg %p311
        %p980 = pneg %p308
        %p981 = pneg %p332
        %p982 = pneg %p329
        %p983 = pneg %p353
        %p984 = pneg %p350
        %p985 = pneg %p374
        %p986 = pneg %p371
        %p987 = pneg %p395
        %p988 = pneg %p392
        %p989 = pneg %p416
        %p990 = pneg %p413
        %p991 = pneg %p437
        %p992 = pneg %p434
        %p993 = pneg %p458
        %p994 = pneg %p455
        %p995 = pneg %p484
        %p996 = pneg %p481
        %s997 = sand.u32 %s471, 1
        %s998 = scalar_lea.sflag [#allocation4], %s997
        %s999 = sand.u32 %s471, 1
        %s1000 = smul.addr %s999, 32
        %s1001 = scalar_lea.vmem [#allocation31], %s1000
        %p1002 = pneg %p510
        %p1003 = pneg %p507
        %s1004 = sand.u32 %s497, 1
        %s1005 = scalar_lea.sflag [#allocation33], %s1004
        %s1006 = sand.u32 %s497, 1
        %s1007 = smul.addr %s1006, 64
        %s1008 = scalar_lea.vmem [#allocation32], %s1007
        %v1012 = vld [vmem:[%s831] sm:$0xff]
        %v1013 = vld [vmem:[%s831 + $0x8] sm:$0xff]
        %v1014 = vld [vmem:[%s831 + $0x10] sm:$0xff]
        %v1015 = vld [vmem:[%s831 + $0x18] sm:$0xff]
        %v1016 = vld [vmem:[#allocation19] sm:$0x3]
        %v1017 = vld [vmem:[#allocation20] sm:$0x3]
        %v1018 = vadd.f32 %v1012, %v1013
        %1019 = vadd.xlane.f32.xlu0 %v1018
        %v1020 = vpop.xlane.xlu0 %1019
        %v1021 = vadd.f32 %v1014, %v1015
        %1022 = vadd.xlane.f32.xlu0 %v1021
        %v1023 = vpop.xlane.xlu0 %1022
        %v1024 = vrcp.pop 256.0
        %v1025 = vmul.f32 %v1020, %v1024
        %v1026 = vmul.f32 %v1023, %v1024
        %v1027 = vsub.f32 %v1012, %v1025
        %v1028 = vsub.f32 %v1013, %v1025
        %v1029 = vsub.f32 %v1014, %v1026
        %v1030 = vsub.f32 %v1015, %v1026
        %v1031 = vmul.f32 %v1027, %v1027
        %v1032 = vmul.f32 %v1028, %v1028
        %v1033 = vmul.f32 %v1029, %v1029
        %v1034 = vmul.f32 %v1030, %v1030
        %v1035 = vadd.f32 %v1031, %v1032
        %1036 = vadd.xlane.f32.xlu0 %v1035
        %v1037 = vpop.xlane.xlu0 %1036
        %v1038 = vadd.f32 %v1033, %v1034
        %1039 = vadd.xlane.f32.xlu0 %v1038
        %v1040 = vpop.xlane.xlu0 %1039
        %v1041 = vmul.f32 %v1037, %v1024
        %v1042 = vmul.f32 %v1040, %v1024
        %v1043 = vadd.f32 %v1041, 1e-05
        %v1044 = vadd.f32 %v1042, 1e-05
        %v1045 = vrsqrt.pop %v1043
        %v1046 = vrsqrt.pop %v1044
        %v1047 = vmul.f32 %v1027, %v1045
        %v1048 = vmul.f32 %v1028, %v1045
        %v1049 = vmul.f32 %v1029, %v1046
        %v1050 = vmul.f32 %v1030, %v1046
        %v1052 = vlaneseq
        %v1053 = vshrl.u32 %v1052, 7
        %v1054 = vsub.s32 0, %v1053
        %v1055 = vrot.slane %v1016, %v1054
        %v1056 = vlaneseq
        %v1057 = vshrl.u32 %v1056, 7
        %v1058 = vsub.s32 1, %v1057
        %v1059 = vrot.slane %v1016, %v1058
        %v1062 = vmul.f32 %v1047, %v1055
        %v1063 = vmul.f32 %v1048, %v1059
        %v1064 = vmul.f32 %v1049, %v1055
        %v1065 = vmul.f32 %v1050, %v1059
        %v1067 = vlaneseq
        %v1068 = vshrl.u32 %v1067, 7
        %v1069 = vsub.s32 0, %v1068
        %v1070 = vrot.slane %v1017, %v1069
        %v1071 = vlaneseq
        %v1072 = vshrl.u32 %v1071, 7
        %v1073 = vsub.s32 1, %v1072
        %v1074 = vrot.slane %v1017, %v1073
        %v1077 = vadd.f32 %v1062, %v1070
        %v1078 = vadd.f32 %v1063, %v1074
        %v1079 = vadd.f32 %v1064, %v1070
        %v1080 = vadd.f32 %v1065, %v1074
        %v1081 = vpack.c.bf16 %v1079, %v1077
        %v1082 = vpack.c.bf16 %v1080, %v1078
        %v1083 = vld [vmem:[#allocation13] sm:$0xff]
        %v1084 = vld [vmem:[#allocation13 + $0x8] sm:$0xff]
        %v1085 = vld [vmem:[#allocation13 + $0x10] sm:$0xff]
        %v1086 = vld [vmem:[#allocation13 + $0x18] sm:$0xff]
        %v1087 = vld [vmem:[#allocation13 + $0x20] sm:$0xff]
        %v1088 = vld [vmem:[#allocation13 + $0x28] sm:$0xff]
        %v1089 = vld [vmem:[#allocation13 + $0x30] sm:$0xff]
        %v1090 = vld [vmem:[#allocation13 + $0x38] sm:$0xff]
        %v1091 = vld [vmem:[#allocation13 + $0x40] sm:$0xff]
        %v1092 = vld [vmem:[#allocation13 + $0x48] sm:$0xff]
        %v1093 = vld [vmem:[#allocation13 + $0x50] sm:$0xff]
        %v1094 = vld [vmem:[#allocation13 + $0x58] sm:$0xff]
        %v1095 = vld [vmem:[#allocation13 + $0x60] sm:$0xff]
        %v1096 = vld [vmem:[#allocation13 + $0x68] sm:$0xff]
        %v1097 = vld [vmem:[#allocation13 + $0x70] sm:$0xff]
        %v1098 = vld [vmem:[#allocation13 + $0x78] sm:$0xff]
        %v1099 = vld [vmem:[#allocation13 + $0x80] sm:$0xff]
        %v1100 = vld [vmem:[#allocation13 + $0x88] sm:$0xff]
        %v1101 = vld [vmem:[#allocation13 + $0x90] sm:$0xff]
        %v1102 = vld [vmem:[#allocation13 + $0x98] sm:$0xff]
        %v1103 = vld [vmem:[#allocation13 + $0xa0] sm:$0xff]
        %v1104 = vld [vmem:[#allocation13 + $0xa8] sm:$0xff]
        %v1105 = vld [vmem:[#allocation13 + $0xb0] sm:$0xff]
        %v1106 = vld [vmem:[#allocation13 + $0xb8] sm:$0xff]
        %v1107 = vld [vmem:[#allocation13 + $0xc0] sm:$0xff]
        %v1108 = vld [vmem:[#allocation13 + $0xc8] sm:$0xff]
        %v1109 = vld [vmem:[#allocation13 + $0xd0] sm:$0xff]
        %v1110 = vld [vmem:[#allocation13 + $0xd8] sm:$0xff]
        %v1111 = vld [vmem:[#allocation13 + $0xe0] sm:$0xff]
        %v1112 = vld [vmem:[#allocation13 + $0xe8] sm:$0xff]
        %v1113 = vld [vmem:[#allocation13 + $0xf0] sm:$0xff]
        %v1114 = vld [vmem:[#allocation13 + $0xf8] sm:$0xff]
        %v1115 = vld [vmem:[#allocation13 + $0x100] sm:$0xff]
        %v1116 = vld [vmem:[#allocation13 + $0x108] sm:$0xff]
        %v1117 = vld [vmem:[#allocation13 + $0x110] sm:$0xff]
        %v1118 = vld [vmem:[#allocation13 + $0x118] sm:$0xff]
        %v1119 = vld [vmem:[#allocation13 + $0x120] sm:$0xff]
        %v1120 = vld [vmem:[#allocation13 + $0x128] sm:$0xff]
        %v1121 = vld [vmem:[#allocation13 + $0x130] sm:$0xff]
        %v1122 = vld [vmem:[#allocation13 + $0x138] sm:$0xff]
        %v1123 = vld [vmem:[#allocation13 + $0x140] sm:$0xff]
        %v1124 = vld [vmem:[#allocation13 + $0x148] sm:$0xff]
        %v1125 = vld [vmem:[#allocation13 + $0x150] sm:$0xff]
        %v1126 = vld [vmem:[#allocation13 + $0x158] sm:$0xff]
        %v1127 = vld [vmem:[#allocation13 + $0x160] sm:$0xff]
        %v1128 = vld [vmem:[#allocation13 + $0x168] sm:$0xff]
        %v1129 = vld [vmem:[#allocation13 + $0x170] sm:$0xff]
        %v1130 = vld [vmem:[#allocation13 + $0x178] sm:$0xff]
        %v1131 = vld [vmem:[#allocation13 + $0x180] sm:$0xff]
        %v1132 = vld [vmem:[#allocation13 + $0x188] sm:$0xff]
        %v1133 = vld [vmem:[#allocation13 + $0x190] sm:$0xff]
        %v1134 = vld [vmem:[#allocation13 + $0x198] sm:$0xff]
        %v1135 = vld [vmem:[#allocation13 + $0x1a0] sm:$0xff]
        %v1136 = vld [vmem:[#allocation13 + $0x1a8] sm:$0xff]
        %v1137 = vld [vmem:[#allocation13 + $0x1b0] sm:$0xff]
        %v1138 = vld [vmem:[#allocation13 + $0x1b8] sm:$0xff]
        %v1139 = vld [vmem:[#allocation13 + $0x1c0] sm:$0xff]
        %v1140 = vld [vmem:[#allocation13 + $0x1c8] sm:$0xff]
        %v1141 = vld [vmem:[#allocation13 + $0x1d0] sm:$0xff]
        %v1142 = vld [vmem:[#allocation13 + $0x1d8] sm:$0xff]
        %v1143 = vld [vmem:[#allocation13 + $0x1e0] sm:$0xff]
        %v1144 = vld [vmem:[#allocation13 + $0x1e8] sm:$0xff]
        %v1145 = vld [vmem:[#allocation13 + $0x1f0] sm:$0xff]
        %v1146 = vld [vmem:[#allocation13 + $0x1f8] sm:$0xff]
        %v1147 = vld [vmem:[#allocation13 + $0x200] sm:$0xff]
        %v1148 = vld [vmem:[#allocation13 + $0x208] sm:$0xff]
        %v1149 = vld [vmem:[#allocation13 + $0x210] sm:$0xff]
        %v1150 = vld [vmem:[#allocation13 + $0x218] sm:$0xff]
        %v1151 = vld [vmem:[#allocation13 + $0x220] sm:$0xff]
        %v1152 = vld [vmem:[#allocation13 + $0x228] sm:$0xff]
        %v1153 = vld [vmem:[#allocation13 + $0x230] sm:$0xff]
        %v1154 = vld [vmem:[#allocation13 + $0x238] sm:$0xff]
        %v1155 = vld [vmem:[#allocation13 + $0x240] sm:$0xff]
        %v1156 = vld [vmem:[#allocation13 + $0x248] sm:$0xff]
        %v1157 = vld [vmem:[#allocation13 + $0x250] sm:$0xff]
        %v1158 = vld [vmem:[#allocation13 + $0x258] sm:$0xff]
        %v1159 = vld [vmem:[#allocation13 + $0x260] sm:$0xff]
        %v1160 = vld [vmem:[#allocation13 + $0x268] sm:$0xff]
        %v1161 = vld [vmem:[#allocation13 + $0x270] sm:$0xff]
        %v1162 = vld [vmem:[#allocation13 + $0x278] sm:$0xff]
        %v1163 = vld [vmem:[#allocation13 + $0x280] sm:$0xff]
        %v1164 = vld [vmem:[#allocation13 + $0x288] sm:$0xff]
        %v1165 = vld [vmem:[#allocation13 + $0x290] sm:$0xff]
        %v1166 = vld [vmem:[#allocation13 + $0x298] sm:$0xff]
        %v1167 = vld [vmem:[#allocation13 + $0x2a0] sm:$0xff]
        %v1168 = vld [vmem:[#allocation13 + $0x2a8] sm:$0xff]
        %v1169 = vld [vmem:[#allocation13 + $0x2b0] sm:$0xff]
        %v1170 = vld [vmem:[#allocation13 + $0x2b8] sm:$0xff]
        %v1171 = vld [vmem:[#allocation13 + $0x2c0] sm:$0xff]
        %v1172 = vld [vmem:[#allocation13 + $0x2c8] sm:$0xff]
        %v1173 = vld [vmem:[#allocation13 + $0x2d0] sm:$0xff]
        %v1174 = vld [vmem:[#allocation13 + $0x2d8] sm:$0xff]
        %v1175 = vld [vmem:[#allocation13 + $0x2e0] sm:$0xff]
        %v1176 = vld [vmem:[#allocation13 + $0x2e8] sm:$0xff]
        %v1177 = vld [vmem:[#allocation13 + $0x2f0] sm:$0xff]
        %v1178 = vld [vmem:[#allocation13 + $0x2f8] sm:$0xff]
        %v1179 = vld [vmem:[#allocation14] sm:$0x3f]
        %v1181 = vlaneseq
        %v1182 = vshrl.u32 %v1181, 7
        %v1183 = vsub.s32 0, %v1182
        %v1184 = vrot.slane %v1179, %v1183
        %v1185 = vlaneseq
        %v1186 = vshrl.u32 %v1185, 7
        %v1187 = vsub.s32 1, %v1186
        %v1188 = vrot.slane %v1179, %v1187
        %v1189 = vlaneseq
        %v1190 = vshrl.u32 %v1189, 7
        %v1191 = vsub.s32 2, %v1190
        %v1192 = vrot.slane %v1179, %v1191
        %v1193 = vlaneseq
        %v1194 = vshrl.u32 %v1193, 7
        %v1195 = vsub.s32 3, %v1194
        %v1196 = vrot.slane %v1179, %v1195
        %v1197 = vlaneseq
        %v1198 = vshrl.u32 %v1197, 7
        %v1199 = vsub.s32 4, %v1198
        %v1200 = vrot.slane %v1179, %v1199
        %v1201 = vlaneseq
        %v1202 = vshrl.u32 %v1201, 7
        %v1203 = vsub.s32 5, %v1202
        %v1204 = vrot.slane %v1179, %v1203
        %v1307 = vunpack.c.l.b16 %v1083
        %v1308 = vunpack.c.h.b16 %v1083
        %v1309 = vunpack.c.l.b16 %v1084
        %v1310 = vunpack.c.h.b16 %v1084
        %v1311 = vunpack.c.l.b16 %v1085
        %v1312 = vunpack.c.h.b16 %v1085
        %v1313 = vunpack.c.l.b16 %v1086
        %v1314 = vunpack.c.h.b16 %v1086
        %v1315 = vunpack.c.l.b16 %v1087
        %v1316 = vunpack.c.h.b16 %v1087
        %v1317 = vunpack.c.l.b16 %v1088
        %v1318 = vunpack.c.h.b16 %v1088
        %v1319 = vunpack.c.l.b16 %v1089
        %v1320 = vunpack.c.h.b16 %v1089
        %v1321 = vunpack.c.l.b16 %v1090
        %v1322 = vunpack.c.h.b16 %v1090
        %v1323 = vunpack.c.l.b16 %v1091
        %v1324 = vunpack.c.h.b16 %v1091
        %v1325 = vunpack.c.l.b16 %v1092
        %v1326 = vunpack.c.h.b16 %v1092
        %v1327 = vunpack.c.l.b16 %v1093
        %v1328 = vunpack.c.h.b16 %v1093
        %v1329 = vunpack.c.l.b16 %v1094
        %v1330 = vunpack.c.h.b16 %v1094
        %v1331 = vunpack.c.l.b16 %v1095
        %v1332 = vunpack.c.h.b16 %v1095
        %v1333 = vunpack.c.l.b16 %v1096
        %v1334 = vunpack.c.h.b16 %v1096
        %v1335 = vunpack.c.l.b16 %v1097
        %v1336 = vunpack.c.h.b16 %v1097
        %v1337 = vunpack.c.l.b16 %v1098
        %v1338 = vunpack.c.h.b16 %v1098
        %v1339 = vunpack.c.l.b16 %v1099
        %v1340 = vunpack.c.h.b16 %v1099
        %v1341 = vunpack.c.l.b16 %v1100
        %v1342 = vunpack.c.h.b16 %v1100
        %v1343 = vunpack.c.l.b16 %v1101
        %v1344 = vunpack.c.h.b16 %v1101
        %v1345 = vunpack.c.l.b16 %v1102
        %v1346 = vunpack.c.h.b16 %v1102
        %v1347 = vunpack.c.l.b16 %v1103
        %v1348 = vunpack.c.h.b16 %v1103
        %v1349 = vunpack.c.l.b16 %v1104
        %v1350 = vunpack.c.h.b16 %v1104
        %v1351 = vunpack.c.l.b16 %v1105
        %v1352 = vunpack.c.h.b16 %v1105
        %v1353 = vunpack.c.l.b16 %v1106
        %v1354 = vunpack.c.h.b16 %v1106
        %v1355 = vunpack.c.l.b16 %v1107
        %v1356 = vunpack.c.h.b16 %v1107
        %v1357 = vunpack.c.l.b16 %v1108
        %v1358 = vunpack.c.h.b16 %v1108
        %v1359 = vunpack.c.l.b16 %v1109
        %v1360 = vunpack.c.h.b16 %v1109
        %v1361 = vunpack.c.l.b16 %v1110
        %v1362 = vunpack.c.h.b16 %v1110
        %v1363 = vunpack.c.l.b16 %v1111
        %v1364 = vunpack.c.h.b16 %v1111
        %v1365 = vunpack.c.l.b16 %v1112
        %v1366 = vunpack.c.h.b16 %v1112
        %v1367 = vunpack.c.l.b16 %v1113
        %v1368 = vunpack.c.h.b16 %v1113
        %v1369 = vunpack.c.l.b16 %v1114
        %v1370 = vunpack.c.h.b16 %v1114
        %v1371 = vunpack.c.l.b16 %v1115
        %v1372 = vunpack.c.h.b16 %v1115
        %v1373 = vunpack.c.l.b16 %v1116
        %v1374 = vunpack.c.h.b16 %v1116
        %v1375 = vunpack.c.l.b16 %v1117
        %v1376 = vunpack.c.h.b16 %v1117
        %v1377 = vunpack.c.l.b16 %v1118
        %v1378 = vunpack.c.h.b16 %v1118
        %v1379 = vunpack.c.l.b16 %v1119
        %v1380 = vunpack.c.h.b16 %v1119
        %v1381 = vunpack.c.l.b16 %v1120
        %v1382 = vunpack.c.h.b16 %v1120
        %v1383 = vunpack.c.l.b16 %v1121
        %v1384 = vunpack.c.h.b16 %v1121
        %v1385 = vunpack.c.l.b16 %v1122
        %v1386 = vunpack.c.h.b16 %v1122
        %v1387 = vunpack.c.l.b16 %v1123
        %v1388 = vunpack.c.h.b16 %v1123
        %v1389 = vunpack.c.l.b16 %v1124
        %v1390 = vunpack.c.h.b16 %v1124
        %v1391 = vunpack.c.l.b16 %v1125
        %v1392 = vunpack.c.h.b16 %v1125
        %v1393 = vunpack.c.l.b16 %v1126
        %v1394 = vunpack.c.h.b16 %v1126
        %v1395 = vunpack.c.l.b16 %v1127
        %v1396 = vunpack.c.h.b16 %v1127
        %v1397 = vunpack.c.l.b16 %v1128
        %v1398 = vunpack.c.h.b16 %v1128
        %v1399 = vunpack.c.l.b16 %v1129
        %v1400 = vunpack.c.h.b16 %v1129
        %v1401 = vunpack.c.l.b16 %v1130
        %v1402 = vunpack.c.h.b16 %v1130
        %v1403 = vunpack.c.l.b16 %v1131
        %v1404 = vunpack.c.h.b16 %v1131
        %v1405 = vunpack.c.l.b16 %v1132
        %v1406 = vunpack.c.h.b16 %v1132
        %v1407 = vunpack.c.l.b16 %v1133
        %v1408 = vunpack.c.h.b16 %v1133
        %v1409 = vunpack.c.l.b16 %v1134
        %v1410 = vunpack.c.h.b16 %v1134
        %v1411 = vunpack.c.l.b16 %v1135
        %v1412 = vunpack.c.h.b16 %v1135
        %v1413 = vunpack.c.l.b16 %v1136
        %v1414 = vunpack.c.h.b16 %v1136
        %v1415 = vunpack.c.l.b16 %v1137
        %v1416 = vunpack.c.h.b16 %v1137
        %v1417 = vunpack.c.l.b16 %v1138
        %v1418 = vunpack.c.h.b16 %v1138
        %v1419 = vunpack.c.l.b16 %v1139
        %v1420 = vunpack.c.h.b16 %v1139
        %v1421 = vunpack.c.l.b16 %v1140
        %v1422 = vunpack.c.h.b16 %v1140
        %v1423 = vunpack.c.l.b16 %v1141
        %v1424 = vunpack.c.h.b16 %v1141
        %v1425 = vunpack.c.l.b16 %v1142
        %v1426 = vunpack.c.h.b16 %v1142
        %v1427 = vunpack.c.l.b16 %v1143
        %v1428 = vunpack.c.h.b16 %v1143
        %v1429 = vunpack.c.l.b16 %v1144
        %v1430 = vunpack.c.h.b16 %v1144
        %v1431 = vunpack.c.l.b16 %v1145
        %v1432 = vunpack.c.h.b16 %v1145
        %v1433 = vunpack.c.l.b16 %v1146
        %v1434 = vunpack.c.h.b16 %v1146
        %v1435 = vunpack.c.l.b16 %v1147
        %v1436 = vunpack.c.h.b16 %v1147
        %v1437 = vunpack.c.l.b16 %v1148
        %v1438 = vunpack.c.h.b16 %v1148
        %v1439 = vunpack.c.l.b16 %v1149
        %v1440 = vunpack.c.h.b16 %v1149
        %v1441 = vunpack.c.l.b16 %v1150
        %v1442 = vunpack.c.h.b16 %v1150
        %v1443 = vunpack.c.l.b16 %v1151
        %v1444 = vunpack.c.h.b16 %v1151
        %v1445 = vunpack.c.l.b16 %v1152
        %v1446 = vunpack.c.h.b16 %v1152
        %v1447 = vunpack.c.l.b16 %v1153
        %v1448 = vunpack.c.h.b16 %v1153
        %v1449 = vunpack.c.l.b16 %v1154
        %v1450 = vunpack.c.h.b16 %v1154
        %v1451 = vunpack.c.l.b16 %v1155
        %v1452 = vunpack.c.h.b16 %v1155
        %v1453 = vunpack.c.l.b16 %v1156
        %v1454 = vunpack.c.h.b16 %v1156
        %v1455 = vunpack.c.l.b16 %v1157
        %v1456 = vunpack.c.h.b16 %v1157
        %v1457 = vunpack.c.l.b16 %v1158
        %v1458 = vunpack.c.h.b16 %v1158
        %v1459 = vunpack.c.l.b16 %v1159
        %v1460 = vunpack.c.h.b16 %v1159
        %v1461 = vunpack.c.l.b16 %v1160
        %v1462 = vunpack.c.h.b16 %v1160
        %v1463 = vunpack.c.l.b16 %v1161
        %v1464 = vunpack.c.h.b16 %v1161
        %v1465 = vunpack.c.l.b16 %v1162
        %v1466 = vunpack.c.h.b16 %v1162
        %v1467 = vunpack.c.l.b16 %v1163
        %v1468 = vunpack.c.h.b16 %v1163
        %v1469 = vunpack.c.l.b16 %v1164
        %v1470 = vunpack.c.h.b16 %v1164
        %v1471 = vunpack.c.l.b16 %v1165
        %v1472 = vunpack.c.h.b16 %v1165
        %v1473 = vunpack.c.l.b16 %v1166
        %v1474 = vunpack.c.h.b16 %v1166
        %v1475 = vunpack.c.l.b16 %v1167
        %v1476 = vunpack.c.h.b16 %v1167
        %v1477 = vunpack.c.l.b16 %v1168
        %v1478 = vunpack.c.h.b16 %v1168
        %v1479 = vunpack.c.l.b16 %v1169
        %v1480 = vunpack.c.h.b16 %v1169
        %v1481 = vunpack.c.l.b16 %v1170
        %v1482 = vunpack.c.h.b16 %v1170
        %v1483 = vunpack.c.l.b16 %v1171
        %v1484 = vunpack.c.h.b16 %v1171
        %v1485 = vunpack.c.l.b16 %v1172
        %v1486 = vunpack.c.h.b16 %v1172
        %v1487 = vunpack.c.l.b16 %v1173
        %v1488 = vunpack.c.h.b16 %v1173
        %v1489 = vunpack.c.l.b16 %v1174
        %v1490 = vunpack.c.h.b16 %v1174
        %v1491 = vunpack.c.l.b16 %v1175
        %v1492 = vunpack.c.h.b16 %v1175
        %v1493 = vunpack.c.l.b16 %v1176
        %v1494 = vunpack.c.h.b16 %v1176
        %v1495 = vunpack.c.l.b16 %v1177
        %v1496 = vunpack.c.h.b16 %v1177
        %v1497 = vunpack.c.l.b16 %v1178
        %v1498 = vunpack.c.h.b16 %v1178
        %v1499 = vpack.c.b16 %v1313, %v1307
        %v1500 = vpack.c.b16 %v1314, %v1308
        %v1501 = vpack.c.b16 %v1315, %v1309
        %v1502 = vpack.c.b16 %v1316, %v1310
        %v1503 = vpack.c.b16 %v1317, %v1311
        %v1504 = vpack.c.b16 %v1318, %v1312
        %v1505 = vpack.c.b16 %v1325, %v1319
        %v1506 = vpack.c.b16 %v1326, %v1320
        %v1507 = vpack.c.b16 %v1327, %v1321
        %v1508 = vpack.c.b16 %v1328, %v1322
        %v1509 = vpack.c.b16 %v1329, %v1323
        %v1510 = vpack.c.b16 %v1330, %v1324
        %v1511 = vpack.c.b16 %v1337, %v1331
        %v1512 = vpack.c.b16 %v1338, %v1332
        %v1513 = vpack.c.b16 %v1339, %v1333
        %v1514 = vpack.c.b16 %v1340, %v1334
        %v1515 = vpack.c.b16 %v1341, %v1335
        %v1516 = vpack.c.b16 %v1342, %v1336
        %v1517 = vpack.c.b16 %v1349, %v1343
        %v1518 = vpack.c.b16 %v1350, %v1344
        %v1519 = vpack.c.b16 %v1351, %v1345
        %v1520 = vpack.c.b16 %v1352, %v1346
        %v1521 = vpack.c.b16 %v1353, %v1347
        %v1522 = vpack.c.b16 %v1354, %v1348
        %v1523 = vpack.c.b16 %v1361, %v1355
        %v1524 = vpack.c.b16 %v1362, %v1356
        %v1525 = vpack.c.b16 %v1363, %v1357
        %v1526 = vpack.c.b16 %v1364, %v1358
        %v1527 = vpack.c.b16 %v1365, %v1359
        %v1528 = vpack.c.b16 %v1366, %v1360
        %v1529 = vpack.c.b16 %v1373, %v1367
        %v1530 = vpack.c.b16 %v1374, %v1368
        %v1531 = vpack.c.b16 %v1375, %v1369
        %v1532 = vpack.c.b16 %v1376, %v1370
        %v1533 = vpack.c.b16 %v1377, %v1371
        %v1534 = vpack.c.b16 %v1378, %v1372
        %v1535 = vpack.c.b16 %v1385, %v1379
        %v1536 = vpack.c.b16 %v1386, %v1380
        %v1537 = vpack.c.b16 %v1387, %v1381
        %v1538 = vpack.c.b16 %v1388, %v1382
        %v1539 = vpack.c.b16 %v1389, %v1383
        %v1540 = vpack.c.b16 %v1390, %v1384
        %v1541 = vpack.c.b16 %v1397, %v1391
        %v1542 = vpack.c.b16 %v1398, %v1392
        %v1543 = vpack.c.b16 %v1399, %v1393
        %v1544 = vpack.c.b16 %v1400, %v1394
        %v1545 = vpack.c.b16 %v1401, %v1395
        %v1546 = vpack.c.b16 %v1402, %v1396
        %v1547 = vpack.c.b16 %v1409, %v1403
        %v1548 = vpack.c.b16 %v1410, %v1404
        %v1549 = vpack.c.b16 %v1411, %v1405
        %v1550 = vpack.c.b16 %v1412, %v1406
        %v1551 = vpack.c.b16 %v1413, %v1407
        %v1552 = vpack.c.b16 %v1414, %v1408
        %v1553 = vpack.c.b16 %v1421, %v1415
        %v1554 = vpack.c.b16 %v1422, %v1416
        %v1555 = vpack.c.b16 %v1423, %v1417
        %v1556 = vpack.c.b16 %v1424, %v1418
        %v1557 = vpack.c.b16 %v1425, %v1419
        %v1558 = vpack.c.b16 %v1426, %v1420
        %v1559 = vpack.c.b16 %v1433, %v1427
        %v1560 = vpack.c.b16 %v1434, %v1428
        %v1561 = vpack.c.b16 %v1435, %v1429
        %v1562 = vpack.c.b16 %v1436, %v1430
        %v1563 = vpack.c.b16 %v1437, %v1431
        %v1564 = vpack.c.b16 %v1438, %v1432
        %v1565 = vpack.c.b16 %v1445, %v1439
        %v1566 = vpack.c.b16 %v1446, %v1440
        %v1567 = vpack.c.b16 %v1447, %v1441
        %v1568 = vpack.c.b16 %v1448, %v1442
        %v1569 = vpack.c.b16 %v1449, %v1443
        %v1570 = vpack.c.b16 %v1450, %v1444
        %v1571 = vpack.c.b16 %v1457, %v1451
        %v1572 = vpack.c.b16 %v1458, %v1452
        %v1573 = vpack.c.b16 %v1459, %v1453
        %v1574 = vpack.c.b16 %v1460, %v1454
        %v1575 = vpack.c.b16 %v1461, %v1455
        %v1576 = vpack.c.b16 %v1462, %v1456
        %v1577 = vpack.c.b16 %v1469, %v1463
        %v1578 = vpack.c.b16 %v1470, %v1464
        %v1579 = vpack.c.b16 %v1471, %v1465
        %v1580 = vpack.c.b16 %v1472, %v1466
        %v1581 = vpack.c.b16 %v1473, %v1467
        %v1582 = vpack.c.b16 %v1474, %v1468
        %v1583 = vpack.c.b16 %v1481, %v1475
        %v1584 = vpack.c.b16 %v1482, %v1476
        %v1585 = vpack.c.b16 %v1483, %v1477
        %v1586 = vpack.c.b16 %v1484, %v1478
        %v1587 = vpack.c.b16 %v1485, %v1479
        %v1588 = vpack.c.b16 %v1486, %v1480
        %v1589 = vpack.c.b16 %v1493, %v1487
        %v1590 = vpack.c.b16 %v1494, %v1488
        %v1591 = vpack.c.b16 %v1495, %v1489
        %v1592 = vpack.c.b16 %v1496, %v1490
        %v1593 = vpack.c.b16 %v1497, %v1491
        %v1594 = vpack.c.b16 %v1498, %v1492
        %1691 = vmatprep.subr.bf16.mxu0 %v1500
        %1692 = vmatpush1.bf16.msra.mxu0 %v1499
        %1693 = vmatprep.subr.bf16.mxu0 %v1506
        %1694 = vmatpush1.bf16.msra.mxu0 %v1505
        %1695 = vmatprep.subr.bf16.mxu0 %v1512
        %1696 = vmatpush1.bf16.msra.mxu0 %v1511
        %1697 = vmatprep.subr.bf16.mxu0 %v1518
        %1698 = vmatpush1.bf16.msra.mxu0 %v1517
        %1699 = vmatprep.subr.bf16.mxu0 %v1524
        %1700 = vmatpush1.bf16.msra.mxu0 %v1523
        %1701 = vmatprep.subr.bf16.mxu0 %v1530
        %1702 = vmatpush1.bf16.msra.mxu0 %v1529
        %1703 = vmatprep.subr.bf16.mxu0 %v1536
        %1704 = vmatpush1.bf16.msra.mxu0 %v1535
        %1705 = vmatprep.subr.bf16.mxu0 %v1542
        %1706 = vmatpush1.bf16.msra.mxu0 %v1541
        %1707 = vmatprep.subr.bf16.mxu0 %v1548
        %1708 = vmatpush1.bf16.msra.mxu0 %v1547
        %1709 = vmatprep.subr.bf16.mxu0 %v1554
        %1710 = vmatpush1.bf16.msra.mxu0 %v1553
        %1711 = vmatprep.subr.bf16.mxu0 %v1560
        %1712 = vmatpush1.bf16.msra.mxu0 %v1559
        %1713 = vmatprep.subr.bf16.mxu0 %v1566
        %1714 = vmatpush1.bf16.msra.mxu0 %v1565
        %1715 = vmatprep.subr.bf16.mxu0 %v1572
        %1716 = vmatpush1.bf16.msra.mxu0 %v1571
        %1717 = vmatprep.subr.bf16.mxu0 %v1578
        %1718 = vmatpush1.bf16.msra.mxu0 %v1577
        %1719 = vmatprep.subr.bf16.mxu0 %v1584
        %1720 = vmatpush1.bf16.msra.mxu0 %v1583
        %1721 = vmatprep.subr.bf16.mxu0 %v1590
        %1722 = vmatpush1.bf16.msra.mxu0 %v1589
        %1723 = vmatprep.mubr.bf16.mxu0 %v1082
        %1724 = vmatmul.mubr.bf16.gmra.mrb[0].mxu0 %v1081
        %v1725 = vpop.f32.mrb[0].mxu0
        %v1726 = vadd.f32 %v1184, %v1725
        %v1727 = vpop.f32.mrb[0].mxu0
        %v1728 = vadd.f32 %v1188, %v1727
        %v1729 = vpop.f32.mrb[0].mxu0
        %v1730 = vadd.f32 %v1184, %v1729
        %v1731 = vpop.f32.mrb[0].mxu0
        %v1732 = vadd.f32 %v1188, %v1731
        %1733 = vdwg.mxu0
        %1734 = vmatprep.subr.bf16.mxu0 %v1502
        %1735 = vmatpush1.bf16.msra.mxu0 %v1501
        %1736 = vmatprep.subr.bf16.mxu0 %v1508
        %1737 = vmatpush1.bf16.msra.mxu0 %v1507
        %1738 = vmatprep.subr.bf16.mxu0 %v1514
        %1739 = vmatpush1.bf16.msra.mxu0 %v1513
        %1740 = vmatprep.subr.bf16.mxu0 %v1520
        %1741 = vmatpush1.bf16.msra.mxu0 %v1519
        %1742 = vmatprep.subr.bf16.mxu0 %v1526
        %1743 = vmatpush1.bf16.msra.mxu0 %v1525
        %1744 = vmatprep.subr.bf16.mxu0 %v1532
        %1745 = vmatpush1.bf16.msra.mxu0 %v1531
        %1746 = vmatprep.subr.bf16.mxu0 %v1538
        %1747 = vmatpush1.bf16.msra.mxu0 %v1537
        %1748 = vmatprep.subr.bf16.mxu0 %v1544
        %1749 = vmatpush1.bf16.msra.mxu0 %v1543
        %1750 = vmatprep.subr.bf16.mxu0 %v1550
        %1751 = vmatpush1.bf16.msra.mxu0 %v1549
        %1752 = vmatprep.subr.bf16.mxu0 %v1556
        %1753 = vmatpush1.bf16.msra.mxu0 %v1555
        %1754 = vmatprep.subr.bf16.mxu0 %v1562
        %1755 = vmatpush1.bf16.msra.mxu0 %v1561
        %1756 = vmatprep.subr.bf16.mxu0 %v1568
        %1757 = vmatpush1.bf16.msra.mxu0 %v1567
        %1758 = vmatprep.subr.bf16.mxu0 %v1574
        %1759 = vmatpush1.bf16.msra.mxu0 %v1573
        %1760 = vmatprep.subr.bf16.mxu0 %v1580
        %1761 = vmatpush1.bf16.msra.mxu0 %v1579
        %1762 = vmatprep.subr.bf16.mxu0 %v1586
        %1763 = vmatpush1.bf16.msra.mxu0 %v1585
        %1764 = vmatprep.subr.bf16.mxu0 %v1592
        %1765 = vmatpush1.bf16.msra.mxu0 %v1591
        %1766 = vmatprep.mubr.bf16.mxu0 %v1082
        %1767 = vmatmul.mubr.bf16.gmra.mrb[0].mxu0 %v1081
        %v1768 = vpop.f32.mrb[0].mxu0
        %v1769 = vadd.f32 %v1192, %v1768
        %v1770 = vpop.f32.mrb[0].mxu0
        %v1771 = vadd.f32 %v1196, %v1770
        %v1772 = vpop.f32.mrb[0].mxu0
        %v1773 = vadd.f32 %v1192, %v1772
        %v1774 = vpop.f32.mrb[0].mxu0
        %v1775 = vadd.f32 %v1196, %v1774
        %1776 = vdwg.mxu0
        %1777 = vmatprep.subr.bf16.mxu0 %v1504
        %1778 = vmatpush1.bf16.msra.mxu0 %v1503
        %1779 = vmatprep.subr.bf16.mxu0 %v1510
        %1780 = vmatpush1.bf16.msra.mxu0 %v1509
        %1781 = vmatprep.subr.bf16.mxu0 %v1516
        %1782 = vmatpush1.bf16.msra.mxu0 %v1515
        %1783 = vmatprep.subr.bf16.mxu0 %v1522
        %1784 = vmatpush1.bf16.msra.mxu0 %v1521
        %1785 = vmatprep.subr.bf16.mxu0 %v1528
        %1786 = vmatpush1.bf16.msra.mxu0 %v1527
        %1787 = vmatprep.subr.bf16.mxu0 %v1534
        %1788 = vmatpush1.bf16.msra.mxu0 %v1533
        %1789 = vmatprep.subr.bf16.mxu0 %v1540
        %1790 = vmatpush1.bf16.msra.mxu0 %v1539
        %1791 = vmatprep.subr.bf16.mxu0 %v1546
        %1792 = vmatpush1.bf16.msra.mxu0 %v1545
        %1793 = vmatprep.subr.bf16.mxu0 %v1552
        %1794 = vmatpush1.bf16.msra.mxu0 %v1551
        %1795 = vmatprep.subr.bf16.mxu0 %v1558
        %1796 = vmatpush1.bf16.msra.mxu0 %v1557
        %1797 = vmatprep.subr.bf16.mxu0 %v1564
        %1798 = vmatpush1.bf16.msra.mxu0 %v1563
        %1799 = vmatprep.subr.bf16.mxu0 %v1570
        %1800 = vmatpush1.bf16.msra.mxu0 %v1569
        %1801 = vmatprep.subr.bf16.mxu0 %v1576
        %1802 = vmatpush1.bf16.msra.mxu0 %v1575
        %1803 = vmatprep.subr.bf16.mxu0 %v1582
        %1804 = vmatpush1.bf16.msra.mxu0 %v1581
        %1805 = vmatprep.subr.bf16.mxu0 %v1588
        %1806 = vmatpush1.bf16.msra.mxu0 %v1587
        %1807 = vmatprep.subr.bf16.mxu0 %v1594
        %1808 = vmatpush1.bf16.msra.mxu0 %v1593
        %1809 = vmatprep.mubr.bf16.mxu0 %v1082
        %1810 = vmatmul.mubr.bf16.gmra.mrb[0].mxu0 %v1081
        %v1811 = vpop.f32.mrb[0].mxu0
        %v1812 = vadd.f32 %v1200, %v1811
        %v1813 = vpop.f32.mrb[0].mxu0
        %v1814 = vadd.f32 %v1204, %v1813
        %v1815 = vpop.f32.mrb[0].mxu0
        %v1816 = vadd.f32 %v1200, %v1815
        %v1817 = vpop.f32.mrb[0].mxu0
        %v1818 = vadd.f32 %v1204, %v1817
        %1819 = vdwg.mxu0
        %v1820 = vld [vmem:[%s849] sm:$0xff]
        %v1821 = vld [vmem:[%s849 + $0x8] sm:$0xff]
        %v1822 = vld [vmem:[%s858] sm:$0xff]
        %v1823 = vld [vmem:[%s858 + $0x8] sm:$0xff]
        %v1824 = vld [vmem:[%s867] sm:$0xff]
        %v1825 = vld [vmem:[%s867 + $0x8] sm:$0xff]
        %v1826 = vmul.f32 %v1726, %v1820
        %v1827 = vmul.f32 %v1730, %v1821
        %v1828 = vmul.f32 %v1728, %v1820
        %v1829 = vmul.f32 %v1732, %v1821
        %v1830 = vsub.f32 0.0, %v1726
        %v1831 = vsub.f32 0.0, %v1730
        %v1832 = vsub.f32 0.0, %v1728
        %v1833 = vsub.f32 0.0, %v1732
        %1838 = vrot.lane.b32.xlu0 %v1830, 96
        %v1839 = vpop.permute.xlu0 %1838
        %1840 = vrot.lane.b32.xlu0 %v1831, 96
        %v1841 = vpop.permute.xlu0 %1840
        %1842 = vrot.lane.b32.xlu0 %v1832, 96
        %v1843 = vpop.permute.xlu0 %1842
        %1844 = vrot.lane.b32.xlu0 %v1833, 96
        %v1845 = vpop.permute.xlu0 %1844
        %1854 = vrot.lane.b32.xlu0 %v1726, 32
        %v1855 = vpop.permute.xlu0 %1854
        %1856 = vrot.lane.b32.xlu0 %v1730, 32
        %v1857 = vpop.permute.xlu0 %1856
        %1858 = vrot.lane.b32.xlu0 %v1728, 32
        %v1859 = vpop.permute.xlu0 %1858
        %1860 = vrot.lane.b32.xlu0 %v1732, 32
        %v1861 = vpop.permute.xlu0 %1860
        %vm1866 = vcmask 261120
        %v1867 = vsel %vm1866, %v1839, %v1855
        %v1868 = vsel %vm1866, %v1841, %v1857
        %v1869 = vsel %vm1866, %v1843, %v1859
        %v1870 = vsel %vm1866, %v1845, %v1861
        %vm1871 = vcmask 523264
        %v1872 = vsel %vm1871, %v1867, %v1839
        %v1873 = vsel %vm1871, %v1868, %v1841
        %v1874 = vsel %vm1871, %v1869, %v1843
        %v1875 = vsel %vm1871, %v1870, %v1845
        %vm1876 = vcmask 785408
        %v1877 = vsel %vm1876, %v1872, %v1855
        %v1878 = vsel %vm1876, %v1873, %v1857
        %v1879 = vsel %vm1876, %v1874, %v1859
        %v1880 = vsel %vm1876, %v1875, %v1861
        %v1881 = vsub.f32 %v1824, %v1822
        %v1882 = vsub.f32 %v1825, %v1823
        %v1883 = vmul.f32 %v1877, %v1881
        %v1884 = vmul.f32 %v1878, %v1882
        %v1885 = vmul.f32 %v1879, %v1881
        %v1886 = vmul.f32 %v1880, %v1882
        %v1887 = vadd.f32 %v1826, %v1883
        %v1888 = vadd.f32 %v1827, %v1884
        %v1889 = vadd.f32 %v1828, %v1885
        %v1890 = vadd.f32 %v1829, %v1886
        %v1891 = vmul.f32 %v1769, %v1820
        %v1892 = vmul.f32 %v1773, %v1821
        %v1893 = vmul.f32 %v1771, %v1820
        %v1894 = vmul.f32 %v1775, %v1821
        %v1895 = vsub.f32 0.0, %v1769
        %v1896 = vsub.f32 0.0, %v1773
        %v1897 = vsub.f32 0.0, %v1771
        %v1898 = vsub.f32 0.0, %v1775
        %1903 = vrot.lane.b32.xlu0 %v1895, 96
        %v1904 = vpop.permute.xlu0 %1903
        %1905 = vrot.lane.b32.xlu0 %v1896, 96
        %v1906 = vpop.permute.xlu0 %1905
        %1907 = vrot.lane.b32.xlu0 %v1897, 96
        %v1908 = vpop.permute.xlu0 %1907
        %1909 = vrot.lane.b32.xlu0 %v1898, 96
        %v1910 = vpop.permute.xlu0 %1909
        %1919 = vrot.lane.b32.xlu0 %v1769, 32
        %v1920 = vpop.permute.xlu0 %1919
        %1921 = vrot.lane.b32.xlu0 %v1773, 32
        %v1922 = vpop.permute.xlu0 %1921
        %1923 = vrot.lane.b32.xlu0 %v1771, 32
        %v1924 = vpop.permute.xlu0 %1923
        %1925 = vrot.lane.b32.xlu0 %v1775, 32
        %v1926 = vpop.permute.xlu0 %1925
        %v1931 = vsel %vm1866, %v1904, %v1920
        %v1932 = vsel %vm1866, %v1906, %v1922
        %v1933 = vsel %vm1866, %v1908, %v1924
        %v1934 = vsel %vm1866, %v1910, %v1926
        %v1935 = vsel %vm1871, %v1931, %v1904
        %v1936 = vsel %vm1871, %v1932, %v1906
        %v1937 = vsel %vm1871, %v1933, %v1908
        %v1938 = vsel %vm1871, %v1934, %v1910
        %v1939 = vsel %vm1876, %v1935, %v1920
        %v1940 = vsel %vm1876, %v1936, %v1922
        %v1941 = vsel %vm1876, %v1937, %v1924
        %v1942 = vsel %vm1876, %v1938, %v1926
        %v1943 = vmul.f32 %v1939, %v1881
        %v1944 = vmul.f32 %v1940, %v1882
        %v1945 = vmul.f32 %v1941, %v1881
        %v1946 = vmul.f32 %v1942, %v1882
        %v1947 = vadd.f32 %v1891, %v1943
        %v1948 = vadd.f32 %v1892, %v1944
        %v1949 = vadd.f32 %v1893, %v1945
        %v1950 = vadd.f32 %v1894, %v1946
        %v1951 = vpack.c.bf16 %v1948, %v1947
        %v1952 = vpack.c.bf16 %v1950, %v1949
        %v1953 = vpack.c.bf16 %v1816, %v1812
        %v1954 = vpack.c.bf16 %v1818, %v1814
        %v1955 = vld [vmem:[%s876] sm:$0xf]
        %v1956 = vld [vmem:[%s876 + $0x4] sm:$0xf]
        %v1957 = vld [vmem:[%s876 + $0x8] sm:$0xf]
        %v1958 = vld [vmem:[%s876 + $0xc] sm:$0xf]
        %v1963 = vunpack.c.l.b16 %v1955
        %v1964 = vunpack.c.l.b16 %v1956
        %v1965 = vunpack.c.l.b16 %v1957
        %v1966 = vunpack.c.l.b16 %v1958
        %v1967 = vpack.c.b16 %v1964, %v1963
        %v1968 = vpack.c.b16 %v1966, %v1965
        %s1971 = scalar_lea.vmem %s876, 16 [#allocation11]
        %v1972 = vld [vmem:[%s1971] sm:$0xf]
        %v1973 = vld [vmem:[%s1971 + $0x4] sm:$0xf]
        %v1974 = vld [vmem:[%s1971 + $0x8] sm:$0xf]
        %v1975 = vld [vmem:[%s1971 + $0xc] sm:$0xf]
        %v1980 = vunpack.c.l.b16 %v1972
        %v1981 = vunpack.c.l.b16 %v1973
        %v1982 = vunpack.c.l.b16 %v1974
        %v1983 = vunpack.c.l.b16 %v1975
        %v1984 = vpack.c.b16 %v1981, %v1980
        %v1985 = vpack.c.b16 %v1983, %v1982
        %v1990 = vunpack.c.l.b16 %v1951
        %v1991 = vunpack.c.h.b16 %v1951
        %v1992 = vunpack.c.l.b16 %v1952
        %v1993 = vunpack.c.h.b16 %v1952
        %v1994 = vpack.c.b16 %v1963, %v1963
        %v1995 = vpack.c.b16 %v1964, %v1964
        %v1996 = vpack.c.b16 %v1990, %v1990
        %v1997 = vpack.c.b16 %v1991, %v1991
        %v1998 = vpack.c.b16 %v1965, %v1965
        %v1999 = vpack.c.b16 %v1966, %v1966
        %v2000 = vpack.c.b16 %v1992, %v1992
        %v2001 = vpack.c.b16 %v1993, %v1993
        %2010 = vst [vmem:[%s1008] sm:$0xf] %v1994
        %2011 = vst [vmem:[%s1008 + $0x4] sm:$0xf] %v1995
        %2012 = vst [vmem:[%s1008 + $0x8] sm:$0xf] %v1996
        %2013 = vst [vmem:[%s1008 + $0xc] sm:$0xf] %v1997
        %2014 = vst [vmem:[%s1008 + $0x10] sm:$0xf] %v1998
        %2015 = vst [vmem:[%s1008 + $0x14] sm:$0xf] %v1999
        %2016 = vst [vmem:[%s1008 + $0x18] sm:$0xf] %v2000
        %2017 = vst [vmem:[%s1008 + $0x1c] sm:$0xf] %v2001
        %v2020 = vunpack.c.l.b16 %v1953
        %v2021 = vunpack.c.h.b16 %v1953
        %v2022 = vunpack.c.l.b16 %v1954
        %v2023 = vunpack.c.h.b16 %v1954
        %v2024 = vpack.c.b16 %v1980, %v1980
        %v2025 = vpack.c.b16 %v1981, %v1981
        %v2026 = vpack.c.b16 %v2020, %v2020
        %v2027 = vpack.c.b16 %v2021, %v2021
        %v2028 = vpack.c.b16 %v1982, %v1982
        %v2029 = vpack.c.b16 %v1983, %v1983
        %v2030 = vpack.c.b16 %v2022, %v2022
        %v2031 = vpack.c.b16 %v2023, %v2023
        %s2040 = scalar_lea.vmem %s1008, 32 [#allocation32]
        %2041 = vst [vmem:[%s2040] sm:$0xf] %v2024
        %2042 = vst [vmem:[%s2040 + $0x4] sm:$0xf] %v2025
        %2043 = vst [vmem:[%s2040 + $0x8] sm:$0xf] %v2026
        %2044 = vst [vmem:[%s2040 + $0xc] sm:$0xf] %v2027
        %2045 = vst [vmem:[%s2040 + $0x10] sm:$0xf] %v2028
        %2046 = vst [vmem:[%s2040 + $0x14] sm:$0xf] %v2029
        %2047 = vst [vmem:[%s2040 + $0x18] sm:$0xf] %v2030
        %2048 = vst [vmem:[%s2040 + $0x1c] sm:$0xf] %v2031
        %v2049 = vmul.f32 %v1887, 0.088388346
        %v2050 = vmul.f32 %v1888, 0.088388346
        %v2051 = vmul.f32 %v1889, 0.088388346
        %v2052 = vmul.f32 %v1890, 0.088388346
        %v2053 = vpack.c.bf16 %v2050, %v2049
        %v2054 = vpack.c.bf16 %v2052, %v2051
        %2055 = vmatprep.subr.bf16.mxu0 0
        %2056 = vmatpush1.bf16.xpose.msra.mxu0 %v1967
        %2057 = vmatprep.subr.bf16.mxu0 0
        %2058 = vmatpush1.bf16.xpose.msra.mxu0 %v1951
        %2059 = vmatprep.subr.bf16.mxu0 0
        %2060 = vmatpush1.bf16.xpose.msra.mxu0 0
        %2061 = vmatprep.subr.bf16.mxu0 0
        %2062 = vmatpush1.bf16.xpose.msra.mxu0 0
        %2063 = vmatprep.subr.bf16.mxu0 0
        %2064 = vmatpush1.bf16.xpose.msra.mxu0 0
        %2065 = vmatprep.subr.bf16.mxu0 0
        %2066 = vmatpush1.bf16.xpose.msra.mxu0 0
        %2067 = vmatprep.subr.bf16.mxu0 0
        %2068 = vmatpush1.bf16.xpose.msra.mxu0 0
        %2069 = vmatprep.subr.bf16.mxu0 0
        %2070 = vmatpush1.bf16.xpose.msra.mxu0 0
        %2071 = vmatprep.subr.bf16.mxu0 0
        %2072 = vmatpush1.bf16.xpose.msra.mxu0 0
        %2073 = vmatprep.subr.bf16.mxu0 0
        %2074 = vmatpush1.bf16.xpose.msra.mxu0 0
        %2075 = vmatprep.subr.bf16.mxu0 0
        %2076 = vmatpush1.bf16.xpose.msra.mxu0 0
        %2077 = vmatprep.subr.bf16.mxu0 0
        %2078 = vmatpush1.bf16.xpose.msra.mxu0 0
        %2079 = vmatprep.subr.bf16.mxu0 0
        %2080 = vmatpush1.bf16.xpose.msra.mxu0 0
        %2081 = vmatprep.subr.bf16.mxu0 0
        %2082 = vmatpush1.bf16.xpose.msra.mxu0 0
        %2083 = vmatprep.subr.bf16.mxu0 0
        %2084 = vmatpush1.bf16.xpose.msra.mxu0 0
        %2085 = vmatprep.subr.bf16.mxu0 0
        %2086 = vmatpush1.bf16.xpose.msra.mxu0 0
        %2087 = vmatprep.mubr.bf16.mxu0 0
        %2088 = vmatmul.mubr.bf16.gmra.mrb[0].mxu0 %v2053
        %v2089 = vpop.f32.mrb[0].mxu0
        %v2090 = vadd.f32 0.0, %v2089
        %v2091 = vpop.f32.mrb[0].mxu0
        %v2092 = vpop.f32.mrb[0].mxu0
        %v2093 = vadd.f32 0.0, %v2092
        %v2094 = vpop.f32.mrb[0].mxu0
        %2095 = vdwg.mxu0
        %2096 = vmatprep.subr.bf16.mxu0 0
        %2097 = vmatpush1.bf16.xpose.msra.mxu0 %v1968
        %2098 = vmatprep.subr.bf16.mxu0 0
        %2099 = vmatpush1.bf16.xpose.msra.mxu0 %v1952
        %2100 = vmatprep.subr.bf16.mxu0 0
        %2101 = vmatpush1.bf16.xpose.msra.mxu0 0
        %2102 = vmatprep.subr.bf16.mxu0 0
        %2103 = vmatpush1.bf16.xpose.msra.mxu0 0
        %2104 = vmatprep.subr.bf16.mxu0 0
        %2105 = vmatpush1.bf16.xpose.msra.mxu0 0
        %2106 = vmatprep.subr.bf16.mxu0 0
        %2107 = vmatpush1.bf16.xpose.msra.mxu0 0
        %2108 = vmatprep.subr.bf16.mxu0 0
        %2109 = vmatpush1.bf16.xpose.msra.mxu0 0
        %2110 = vmatprep.subr.bf16.mxu0 0
        %2111 = vmatpush1.bf16.xpose.msra.mxu0 0
        %2112 = vmatprep.subr.bf16.mxu0 0
        %2113 = vmatpush1.bf16.xpose.msra.mxu0 0
        %2114 = vmatprep.subr.bf16.mxu0 0
        %2115 = vmatpush1.bf16.xpose.msra.mxu0 0
        %2116 = vmatprep.subr.bf16.mxu0 0
        %2117 = vmatpush1.bf16.xpose.msra.mxu0 0
        %2118 = vmatprep.subr.bf16.mxu0 0
        %2119 = vmatpush1.bf16.xpose.msra.mxu0 0
        %2120 = vmatprep.subr.bf16.mxu0 0
        %2121 = vmatpush1.bf16.xpose.msra.mxu0 0
        %2122 = vmatprep.subr.bf16.mxu0 0
        %2123 = vmatpush1.bf16.xpose.msra.mxu0 0
        %2124 = vmatprep.subr.bf16.mxu0 0
        %2125 = vmatpush1.bf16.xpose.msra.mxu0 0
        %2126 = vmatprep.subr.bf16.mxu0 0
        %2127 = vmatpush1.bf16.xpose.msra.mxu0 0
        %2128 = vmatprep.mubr.bf16.mxu0 0
        %2129 = vmatmul.mubr.bf16.gmra.mrb[0].mxu0 %v2054
        %v2130 = vpop.f32.mrb[0].mxu0
        %v2131 = vadd.f32 0.0, %v2130
        %v2132 = vpop.f32.mrb[0].mxu0
        %v2133 = vpop.f32.mrb[0].mxu0
        %v2134 = vadd.f32 0.0, %v2133
        %v2135 = vpop.f32.mrb[0].mxu0
        %2136 = vdwg.mxu0
        %v2137 = vld [vmem:[%s840] sm:$0x3]
        %v2138 = vld [vmem:[%s840 + $0x2] sm:$0x3]
        %vm2139 = vnez %v2137
        %vm2140 = vnez %v2138
        %v2141 = vsel %vm2139, 16843009, 0
        %v2142 = vsel %vm2140, 16843009, 0
        %v2143 = vunpack.c.0.s8 %v2141
        %v2144 = vunpack.c.0.s8 %v2142
        %vm2145 = vcmp.ne.s32.totalorder %v2143, 0
        %vm2146 = vcmp.ne.s32.totalorder %v2144, 0
        %v2147 = vsel %vm2145, 1, 0
        %v2148 = vsel %vm2146, 1, 0
        %vm2149 = vcmp.eq.s32.totalorder %v2147, 1
        %vm2150 = vcmp.eq.s32.totalorder %v2148, 1
        %v2151 = vsel %vm2149, -10000.0, %v2090
        %v2152 = vsel %vm2150, -10000.0, %v2093
        %v2153 = vsel %vm2149, -10000.0, %v2131
        %v2154 = vsel %vm2150, -10000.0, %v2134
        %v2155 = vsel %vm1866, %v2151, -inf
        %2156 = vmax.xlane.f32.xlu0 %v2155
        %v2157 = vpop.xlane.xlu0 %2156
        %v2158 = vsel %vm1866, %v2152, -inf
        %2159 = vmax.xlane.f32.xlu0 %v2158
        %v2160 = vpop.xlane.xlu0 %2159
        %v2161 = vsel %vm1866, %v2153, -inf
        %2162 = vmax.xlane.f32.xlu0 %v2161
        %v2163 = vpop.xlane.xlu0 %2162
        %v2164 = vsel %vm1866, %v2154, -inf
        %2165 = vmax.xlane.f32.xlu0 %v2164
        %v2166 = vpop.xlane.xlu0 %2165
        %v2167 = vsub.f32 %v2151, %v2157
        %v2168 = vsub.f32 %v2152, %v2160
        %v2169 = vsub.f32 %v2153, %v2163
        %v2170 = vsub.f32 %v2154, %v2166
        %v2171 = vmul.f32 %v2167, 1.442695
        %v2172 = vpow.pop %v2171
        %v2173 = vmul.f32 %v2168, 1.442695
        %v2174 = vpow.pop %v2173
        %v2175 = vmul.f32 %v2169, 1.442695
        %v2176 = vpow.pop %v2175
        %v2177 = vmul.f32 %v2170, 1.442695
        %v2178 = vpow.pop %v2177
        %v2179 = vsel %vm1866, %v2172, 0.0
        %2180 = vadd.xlane.f32.xlu0 %v2179
        %v2181 = vpop.xlane.xlu0 %2180
        %v2182 = vsel %vm1866, %v2174, 0.0
        %2183 = vadd.xlane.f32.xlu0 %v2182
        %v2184 = vpop.xlane.xlu0 %2183
        %v2185 = vsel %vm1866, %v2176, 0.0
        %2186 = vadd.xlane.f32.xlu0 %v2185
        %v2187 = vpop.xlane.xlu0 %2186
        %v2188 = vsel %vm1866, %v2178, 0.0
        %2189 = vadd.xlane.f32.xlu0 %v2188
        %v2190 = vpop.xlane.xlu0 %2189
        %v2191 = vrcp.pop %v2181
        %v2192 = vrcp.pop %v2184
        %v2193 = vrcp.pop %v2187
        %v2194 = vrcp.pop %v2190
        %v2195 = vmul.f32 %v2172, %v2191
        %v2196 = vmul.f32 %v2174, %v2192
        %v2197 = vmul.f32 %v2176, %v2193
        %v2198 = vmul.f32 %v2178, %v2194
        %v2199 = vpack.c.bf16 %v2196, %v2195
        %v2200 = vpack.c.bf16 %v2198, %v2197
        %v2202 = vsel %vm1866, %v2199, 0
        %2204 = vmatprep.subr.bf16.mxu0 0
        %2205 = vmatpush1.bf16.msra.mxu0 %v1984
        %2206 = vmatprep.subr.bf16.mxu0 0
        %2207 = vmatpush1.bf16.msra.mxu0 %v1953
        %2208 = vmatprep.subr.bf16.mxu0 0
        %2209 = vmatpush1.bf16.msra.mxu0 0
        %2210 = vmatprep.subr.bf16.mxu0 0
        %2211 = vmatpush1.bf16.msra.mxu0 0
        %2212 = vmatprep.subr.bf16.mxu0 0
        %2213 = vmatpush1.bf16.msra.mxu0 0
        %2214 = vmatprep.subr.bf16.mxu0 0
        %2215 = vmatpush1.bf16.msra.mxu0 0
        %2216 = vmatprep.subr.bf16.mxu0 0
        %2217 = vmatpush1.bf16.msra.mxu0 0
        %2218 = vmatprep.subr.bf16.mxu0 0
        %2219 = vmatpush1.bf16.msra.mxu0 0
        %2220 = vmatprep.subr.bf16.mxu0 0
        %2221 = vmatpush1.bf16.msra.mxu0 0
        %2222 = vmatprep.subr.bf16.mxu0 0
        %2223 = vmatpush1.bf16.msra.mxu0 0
        %2224 = vmatprep.subr.bf16.mxu0 0
        %2225 = vmatpush1.bf16.msra.mxu0 0
        %2226 = vmatprep.subr.bf16.mxu0 0
        %2227 = vmatpush1.bf16.msra.mxu0 0
        %2228 = vmatprep.subr.bf16.mxu0 0
        %2229 = vmatpush1.bf16.msra.mxu0 0
        %2230 = vmatprep.subr.bf16.mxu0 0
        %2231 = vmatpush1.bf16.msra.mxu0 0
        %2232 = vmatprep.subr.bf16.mxu0 0
        %2233 = vmatpush1.bf16.msra.mxu0 0
        %2234 = vmatprep.subr.bf16.mxu0 0
        %2235 = vmatpush1.bf16.msra.mxu0 0
        %2236 = vmatprep.mubr.bf16.mxu0 0
        %2237 = vmatmul.mubr.bf16.gmra.mrb[0].mxu0 %v2202
        %v2238 = vpop.f32.mrb[0].mxu0
        %v2239 = vadd.f32 0.0, %v2238
        %v2240 = vpop.f32.mrb[0].mxu0
        %v2241 = vpop.f32.mrb[0].mxu0
        %v2242 = vadd.f32 0.0, %v2241
        %v2243 = vpop.f32.mrb[0].mxu0
        %2244 = vdwg.mxu0
        %v2246 = vsel %vm1866, %v2200, 0
        %2248 = vmatprep.subr.bf16.mxu0 0
        %2249 = vmatpush1.bf16.msra.mxu0 %v1985
        %2250 = vmatprep.subr.bf16.mxu0 0
        %2251 = vmatpush1.bf16.msra.mxu0 %v1954
        %2252 = vmatprep.subr.bf16.mxu0 0
        %2253 = vmatpush1.bf16.msra.mxu0 0
        %2254 = vmatprep.subr.bf16.mxu0 0
        %2255 = vmatpush1.bf16.msra.mxu0 0
        %2256 = vmatprep.subr.bf16.mxu0 0
        %2257 = vmatpush1.bf16.msra.mxu0 0
        %2258 = vmatprep.subr.bf16.mxu0 0
        %2259 = vmatpush1.bf16.msra.mxu0 0
        %2260 = vmatprep.subr.bf16.mxu0 0
        %2261 = vmatpush1.bf16.msra.mxu0 0
        %2262 = vmatprep.subr.bf16.mxu0 0
        %2263 = vmatpush1.bf16.msra.mxu0 0
        %2264 = vmatprep.subr.bf16.mxu0 0
        %2265 = vmatpush1.bf16.msra.mxu0 0
        %2266 = vmatprep.subr.bf16.mxu0 0
        %2267 = vmatpush1.bf16.msra.mxu0 0
        %2268 = vmatprep.subr.bf16.mxu0 0
        %2269 = vmatpush1.bf16.msra.mxu0 0
        %2270 = vmatprep.subr.bf16.mxu0 0
        %2271 = vmatpush1.bf16.msra.mxu0 0
        %2272 = vmatprep.subr.bf16.mxu0 0
        %2273 = vmatpush1.bf16.msra.mxu0 0
        %2274 = vmatprep.subr.bf16.mxu0 0
        %2275 = vmatpush1.bf16.msra.mxu0 0
        %2276 = vmatprep.subr.bf16.mxu0 0
        %2277 = vmatpush1.bf16.msra.mxu0 0
        %2278 = vmatprep.subr.bf16.mxu0 0
        %2279 = vmatpush1.bf16.msra.mxu0 0
        %2280 = vmatprep.mubr.bf16.mxu0 0
        %2281 = vmatmul.mubr.bf16.gmra.mrb[0].mxu0 %v2246
        %v2282 = vpop.f32.mrb[0].mxu0
        %v2283 = vadd.f32 0.0, %v2282
        %v2284 = vpop.f32.mrb[0].mxu0
        %v2285 = vpop.f32.mrb[0].mxu0
        %v2286 = vadd.f32 0.0, %v2285
        %v2287 = vpop.f32.mrb[0].mxu0
        %2288 = vdwg.mxu0
        %v2289 = vpack.c.bf16 %v2242, %v2239
        %v2290 = vpack.c.bf16 %v2286, %v2283
        %v2291 = vld [vmem:[#allocation16] sm:$0xff]
        %v2292 = vld [vmem:[#allocation16 + $0x8] sm:$0xff]
        %v2293 = vld [vmem:[#allocation16 + $0x10] sm:$0xff]
        %v2294 = vld [vmem:[#allocation16 + $0x18] sm:$0xff]
        %v2295 = vld [vmem:[#allocation16 + $0x20] sm:$0xff]
        %v2296 = vld [vmem:[#allocation16 + $0x28] sm:$0xff]
        %v2297 = vld [vmem:[#allocation16 + $0x30] sm:$0xff]
        %v2298 = vld [vmem:[#allocation16 + $0x38] sm:$0xff]
        %v2299 = vld [vmem:[#allocation16 + $0x40] sm:$0xff]
        %v2300 = vld [vmem:[#allocation16 + $0x48] sm:$0xff]
        %v2301 = vld [vmem:[#allocation16 + $0x50] sm:$0xff]
        %v2302 = vld [vmem:[#allocation16 + $0x58] sm:$0xff]
        %v2303 = vld [vmem:[#allocation16 + $0x60] sm:$0xff]
        %v2304 = vld [vmem:[#allocation16 + $0x68] sm:$0xff]
        %v2305 = vld [vmem:[#allocation16 + $0x70] sm:$0xff]
        %v2306 = vld [vmem:[#allocation16 + $0x78] sm:$0xff]
        %v2307 = vld [vmem:[#allocation16 + $0x80] sm:$0xff]
        %v2308 = vld [vmem:[#allocation16 + $0x88] sm:$0xff]
        %v2309 = vld [vmem:[#allocation16 + $0x90] sm:$0xff]
        %v2310 = vld [vmem:[#allocation16 + $0x98] sm:$0xff]
        %v2311 = vld [vmem:[#allocation16 + $0xa0] sm:$0xff]
        %v2312 = vld [vmem:[#allocation16 + $0xa8] sm:$0xff]
        %v2313 = vld [vmem:[#allocation16 + $0xb0] sm:$0xff]
        %v2314 = vld [vmem:[#allocation16 + $0xb8] sm:$0xff]
        %v2315 = vld [vmem:[#allocation16 + $0xc0] sm:$0xff]
        %v2316 = vld [vmem:[#allocation16 + $0xc8] sm:$0xff]
        %v2317 = vld [vmem:[#allocation16 + $0xd0] sm:$0xff]
        %v2318 = vld [vmem:[#allocation16 + $0xd8] sm:$0xff]
        %v2319 = vld [vmem:[#allocation16 + $0xe0] sm:$0xff]
        %v2320 = vld [vmem:[#allocation16 + $0xe8] sm:$0xff]
        %v2321 = vld [vmem:[#allocation16 + $0xf0] sm:$0xff]
        %v2322 = vld [vmem:[#allocation16 + $0xf8] sm:$0xff]
        %v2323 = vld [vmem:[#allocation17] sm:$0x3]
        %v2325 = vlaneseq
        %v2326 = vshrl.u32 %v2325, 7
        %v2327 = vsub.s32 0, %v2326
        %v2328 = vrot.slane %v2323, %v2327
        %v2329 = vlaneseq
        %v2330 = vshrl.u32 %v2329, 7
        %v2331 = vsub.s32 1, %v2330
        %v2332 = vrot.slane %v2323, %v2331
        %v2367 = vunpack.c.l.b16 %v2291
        %v2368 = vunpack.c.h.b16 %v2291
        %v2369 = vunpack.c.l.b16 %v2292
        %v2370 = vunpack.c.h.b16 %v2292
        %v2371 = vunpack.c.l.b16 %v2293
        %v2372 = vunpack.c.h.b16 %v2293
        %v2373 = vunpack.c.l.b16 %v2294
        %v2374 = vunpack.c.h.b16 %v2294
        %v2375 = vunpack.c.l.b16 %v2295
        %v2376 = vunpack.c.h.b16 %v2295
        %v2377 = vunpack.c.l.b16 %v2296
        %v2378 = vunpack.c.h.b16 %v2296
        %v2379 = vunpack.c.l.b16 %v2297
        %v2380 = vunpack.c.h.b16 %v2297
        %v2381 = vunpack.c.l.b16 %v2298
        %v2382 = vunpack.c.h.b16 %v2298
        %v2383 = vunpack.c.l.b16 %v2299
        %v2384 = vunpack.c.h.b16 %v2299
        %v2385 = vunpack.c.l.b16 %v2300
        %v2386 = vunpack.c.h.b16 %v2300
        %v2387 = vunpack.c.l.b16 %v2301
        %v2388 = vunpack.c.h.b16 %v2301
        %v2389 = vunpack.c.l.b16 %v2302
        %v2390 = vunpack.c.h.b16 %v2302
        %v2391 = vunpack.c.l.b16 %v2303
        %v2392 = vunpack.c.h.b16 %v2303
        %v2393 = vunpack.c.l.b16 %v2304
        %v2394 = vunpack.c.h.b16 %v2304
        %v2395 = vunpack.c.l.b16 %v2305
        %v2396 = vunpack.c.h.b16 %v2305
        %v2397 = vunpack.c.l.b16 %v2306
        %v2398 = vunpack.c.h.b16 %v2306
        %v2399 = vunpack.c.l.b16 %v2307
        %v2400 = vunpack.c.h.b16 %v2307
        %v2401 = vunpack.c.l.b16 %v2308
        %v2402 = vunpack.c.h.b16 %v2308
        %v2403 = vunpack.c.l.b16 %v2309
        %v2404 = vunpack.c.h.b16 %v2309
        %v2405 = vunpack.c.l.b16 %v2310
        %v2406 = vunpack.c.h.b16 %v2310
        %v2407 = vunpack.c.l.b16 %v2311
        %v2408 = vunpack.c.h.b16 %v2311
        %v2409 = vunpack.c.l.b16 %v2312
        %v2410 = vunpack.c.h.b16 %v2312
        %v2411 = vunpack.c.l.b16 %v2313
        %v2412 = vunpack.c.h.b16 %v2313
        %v2413 = vunpack.c.l.b16 %v2314
        %v2414 = vunpack.c.h.b16 %v2314
        %v2415 = vunpack.c.l.b16 %v2315
        %v2416 = vunpack.c.h.b16 %v2315
        %v2417 = vunpack.c.l.b16 %v2316
        %v2418 = vunpack.c.h.b16 %v2316
        %v2419 = vunpack.c.l.b16 %v2317
        %v2420 = vunpack.c.h.b16 %v2317
        %v2421 = vunpack.c.l.b16 %v2318
        %v2422 = vunpack.c.h.b16 %v2318
        %v2423 = vunpack.c.l.b16 %v2319
        %v2424 = vunpack.c.h.b16 %v2319
        %v2425 = vunpack.c.l.b16 %v2320
        %v2426 = vunpack.c.h.b16 %v2320
        %v2427 = vunpack.c.l.b16 %v2321
        %v2428 = vunpack.c.h.b16 %v2321
        %v2429 = vunpack.c.l.b16 %v2322
        %v2430 = vunpack.c.h.b16 %v2322
        %v2431 = vpack.c.b16 %v2369, %v2367
        %v2432 = vpack.c.b16 %v2370, %v2368
        %v2433 = vpack.c.b16 %v2373, %v2371
        %v2434 = vpack.c.b16 %v2374, %v2372
        %v2435 = vpack.c.b16 %v2377, %v2375
        %v2436 = vpack.c.b16 %v2378, %v2376
        %v2437 = vpack.c.b16 %v2381, %v2379
        %v2438 = vpack.c.b16 %v2382, %v2380
        %v2439 = vpack.c.b16 %v2385, %v2383
        %v2440 = vpack.c.b16 %v2386, %v2384
        %v2441 = vpack.c.b16 %v2389, %v2387
        %v2442 = vpack.c.b16 %v2390, %v2388
        %v2443 = vpack.c.b16 %v2393, %v2391
        %v2444 = vpack.c.b16 %v2394, %v2392
        %v2445 = vpack.c.b16 %v2397, %v2395
        %v2446 = vpack.c.b16 %v2398, %v2396
        %v2447 = vpack.c.b16 %v2401, %v2399
        %v2448 = vpack.c.b16 %v2402, %v2400
        %v2449 = vpack.c.b16 %v2405, %v2403
        %v2450 = vpack.c.b16 %v2406, %v2404
        %v2451 = vpack.c.b16 %v2409, %v2407
        %v2452 = vpack.c.b16 %v2410, %v2408
        %v2453 = vpack.c.b16 %v2413, %v2411
        %v2454 = vpack.c.b16 %v2414, %v2412
        %v2455 = vpack.c.b16 %v2417, %v2415
        %v2456 = vpack.c.b16 %v2418, %v2416
        %v2457 = vpack.c.b16 %v2421, %v2419
        %v2458 = vpack.c.b16 %v2422, %v2420
        %v2459 = vpack.c.b16 %v2425, %v2423
        %v2460 = vpack.c.b16 %v2426, %v2424
        %v2461 = vpack.c.b16 %v2429, %v2427
        %v2462 = vpack.c.b16 %v2430, %v2428
        %2495 = vmatprep.subr.bf16.mxu0 %v2432
        %2496 = vmatpush1.bf16.msra.mxu0 %v2431
        %2497 = vmatprep.subr.bf16.mxu0 %v2434
        %2498 = vmatpush1.bf16.msra.mxu0 %v2433
        %2499 = vmatprep.subr.bf16.mxu0 %v2436
        %2500 = vmatpush1.bf16.msra.mxu0 %v2435
        %2501 = vmatprep.subr.bf16.mxu0 %v2438
        %2502 = vmatpush1.bf16.msra.mxu0 %v2437
        %2503 = vmatprep.subr.bf16.mxu0 %v2440
        %2504 = vmatpush1.bf16.msra.mxu0 %v2439
        %2505 = vmatprep.subr.bf16.mxu0 %v2442
        %2506 = vmatpush1.bf16.msra.mxu0 %v2441
        %2507 = vmatprep.subr.bf16.mxu0 %v2444
        %2508 = vmatpush1.bf16.msra.mxu0 %v2443
        %2509 = vmatprep.subr.bf16.mxu0 %v2446
        %2510 = vmatpush1.bf16.msra.mxu0 %v2445
        %2511 = vmatprep.subr.bf16.mxu0 %v2448
        %2512 = vmatpush1.bf16.msra.mxu0 %v2447
        %2513 = vmatprep.subr.bf16.mxu0 %v2450
        %2514 = vmatpush1.bf16.msra.mxu0 %v2449
        %2515 = vmatprep.subr.bf16.mxu0 %v2452
        %2516 = vmatpush1.bf16.msra.mxu0 %v2451
        %2517 = vmatprep.subr.bf16.mxu0 %v2454
        %2518 = vmatpush1.bf16.msra.mxu0 %v2453
        %2519 = vmatprep.subr.bf16.mxu0 %v2456
        %2520 = vmatpush1.bf16.msra.mxu0 %v2455
        %2521 = vmatprep.subr.bf16.mxu0 %v2458
        %2522 = vmatpush1.bf16.msra.mxu0 %v2457
        %2523 = vmatprep.subr.bf16.mxu0 %v2460
        %2524 = vmatpush1.bf16.msra.mxu0 %v2459
        %2525 = vmatprep.subr.bf16.mxu0 %v2462
        %2526 = vmatpush1.bf16.msra.mxu0 %v2461
        %2527 = vmatprep.mubr.bf16.mxu0 %v2290
        %2528 = vmatmul.mubr.bf16.gmra.mrb[0].mxu0 %v2289
        %v2529 = vpop.f32.mrb[0].mxu0
        %v2530 = vadd.f32 %v2328, %v2529
        %v2531 = vpop.f32.mrb[0].mxu0
        %v2532 = vadd.f32 %v2332, %v2531
        %v2533 = vpop.f32.mrb[0].mxu0
        %v2534 = vadd.f32 %v2328, %v2533
        %v2535 = vpop.f32.mrb[0].mxu0
        %v2536 = vadd.f32 %v2332, %v2535
        %2537 = vdwg.mxu0
        %v2538 = vmul.f32 %v1077, 7.483315
        %v2539 = vmul.f32 %v1078, 7.483315
        %v2540 = vmul.f32 %v1079, 7.483315
        %v2541 = vmul.f32 %v1080, 7.483315
        %v2542 = vadd.f32 %v2538, %v2530
        %v2543 = vadd.f32 %v2539, %v2532
        %v2544 = vadd.f32 %v2540, %v2534
        %v2545 = vadd.f32 %v2541, %v2536
        %v2546 = vld [vmem:[#allocation22] sm:$0x3]
        %v2547 = vld [vmem:[#allocation23] sm:$0x3]
        %v2548 = vadd.f32 %v2542, %v2543
        %2549 = vadd.xlane.f32.xlu0 %v2548
        %v2550 = vpop.xlane.xlu0 %2549
        %v2551 = vadd.f32 %v2544, %v2545
        %2552 = vadd.xlane.f32.xlu0 %v2551
        %v2553 = vpop.xlane.xlu0 %2552
        %v2554 = vmul.f32 %v2550, %v1024
        %v2555 = vmul.f32 %v2553, %v1024
        %v2556 = vsub.f32 %v2542, %v2554
        %v2557 = vsub.f32 %v2543, %v2554
        %v2558 = vsub.f32 %v2544, %v2555
        %v2559 = vsub.f32 %v2545, %v2555
        %v2560 = vmul.f32 %v2556, %v2556
        %v2561 = vmul.f32 %v2557, %v2557
        %v2562 = vmul.f32 %v2558, %v2558
        %v2563 = vmul.f32 %v2559, %v2559
        %v2564 = vadd.f32 %v2560, %v2561
        %2565 = vadd.xlane.f32.xlu0 %v2564
        %v2566 = vpop.xlane.xlu0 %2565
        %v2567 = vadd.f32 %v2562, %v2563
        %2568 = vadd.xlane.f32.xlu0 %v2567
        %v2569 = vpop.xlane.xlu0 %2568
        %v2570 = vmul.f32 %v2566, %v1024
        %v2571 = vmul.f32 %v2569, %v1024
        %v2572 = vadd.f32 %v2570, 1e-05
        %v2573 = vadd.f32 %v2571, 1e-05
        %v2574 = vrsqrt.pop %v2572
        %v2575 = vrsqrt.pop %v2573
        %v2576 = vmul.f32 %v2556, %v2574
        %v2577 = vmul.f32 %v2557, %v2574
        %v2578 = vmul.f32 %v2558, %v2575
        %v2579 = vmul.f32 %v2559, %v2575
        %v2581 = vlaneseq
        %v2582 = vshrl.u32 %v2581, 7
        %v2583 = vsub.s32 0, %v2582
        %v2584 = vrot.slane %v2546, %v2583
        %v2585 = vlaneseq
        %v2586 = vshrl.u32 %v2585, 7
        %v2587 = vsub.s32 1, %v2586
        %v2588 = vrot.slane %v2546, %v2587
        %v2591 = vmul.f32 %v2576, %v2584
        %v2592 = vmul.f32 %v2577, %v2588
        %v2593 = vmul.f32 %v2578, %v2584
        %v2594 = vmul.f32 %v2579, %v2588
        %v2596 = vlaneseq
        %v2597 = vshrl.u32 %v2596, 7
        %v2598 = vsub.s32 0, %v2597
        %v2599 = vrot.slane %v2547, %v2598
        %v2600 = vlaneseq
        %v2601 = vshrl.u32 %v2600, 7
        %v2602 = vsub.s32 1, %v2601
        %v2603 = vrot.slane %v2547, %v2602
        %v2606 = vadd.f32 %v2591, %v2599
        %v2607 = vadd.f32 %v2592, %v2603
        %v2608 = vadd.f32 %v2593, %v2599
        %v2609 = vadd.f32 %v2594, %v2603
        %v2610 = vpack.c.bf16 %v2608, %v2606
        %v2611 = vpack.c.bf16 %v2609, %v2607
        %v2612 = vld [vmem:[#allocation25] sm:$0xff]
        %v2613 = vld [vmem:[#allocation25 + $0x8] sm:$0xff]
        %v2614 = vld [vmem:[#allocation25 + $0x10] sm:$0xff]
        %v2615 = vld [vmem:[#allocation25 + $0x18] sm:$0xff]
        %v2616 = vld [vmem:[#allocation25 + $0x20] sm:$0xff]
        %v2617 = vld [vmem:[#allocation25 + $0x28] sm:$0xff]
        %v2618 = vld [vmem:[#allocation25 + $0x30] sm:$0xff]
        %v2619 = vld [vmem:[#allocation25 + $0x38] sm:$0xff]
        %v2620 = vld [vmem:[#allocation25 + $0x40] sm:$0xff]
        %v2621 = vld [vmem:[#allocation25 + $0x48] sm:$0xff]
        %v2622 = vld [vmem:[#allocation25 + $0x50] sm:$0xff]
        %v2623 = vld [vmem:[#allocation25 + $0x58] sm:$0xff]
        %v2624 = vld [vmem:[#allocation25 + $0x60] sm:$0xff]
        %v2625 = vld [vmem:[#allocation25 + $0x68] sm:$0xff]
        %v2626 = vld [vmem:[#allocation25 + $0x70] sm:$0xff]
        %v2627 = vld [vmem:[#allocation25 + $0x78] sm:$0xff]
        %v2628 = vld [vmem:[#allocation25 + $0x80] sm:$0xff]
        %v2629 = vld [vmem:[#allocation25 + $0x88] sm:$0xff]
        %v2630 = vld [vmem:[#allocation25 + $0x90] sm:$0xff]
        %v2631 = vld [vmem:[#allocation25 + $0x98] sm:$0xff]
        %v2632 = vld [vmem:[#allocation25 + $0xa0] sm:$0xff]
        %v2633 = vld [vmem:[#allocation25 + $0xa8] sm:$0xff]
        %v2634 = vld [vmem:[#allocation25 + $0xb0] sm:$0xff]
        %v2635 = vld [vmem:[#allocation25 + $0xb8] sm:$0xff]
        %v2636 = vld [vmem:[#allocation25 + $0xc0] sm:$0xff]
        %v2637 = vld [vmem:[#allocation25 + $0xc8] sm:$0xff]
        %v2638 = vld [vmem:[#allocation25 + $0xd0] sm:$0xff]
        %v2639 = vld [vmem:[#allocation25 + $0xd8] sm:$0xff]
        %v2640 = vld [vmem:[#allocation25 + $0xe0] sm:$0xff]
        %v2641 = vld [vmem:[#allocation25 + $0xe8] sm:$0xff]
        %v2642 = vld [vmem:[#allocation25 + $0xf0] sm:$0xff]
        %v2643 = vld [vmem:[#allocation25 + $0xf8] sm:$0xff]
        %v2644 = vld [vmem:[#allocation25 + $0x100] sm:$0xff]
        %v2645 = vld [vmem:[#allocation25 + $0x108] sm:$0xff]
        %v2646 = vld [vmem:[#allocation25 + $0x110] sm:$0xff]
        %v2647 = vld [vmem:[#allocation25 + $0x118] sm:$0xff]
        %v2648 = vld [vmem:[#allocation25 + $0x120] sm:$0xff]
        %v2649 = vld [vmem:[#allocation25 + $0x128] sm:$0xff]
        %v2650 = vld [vmem:[#allocation25 + $0x130] sm:$0xff]
        %v2651 = vld [vmem:[#allocation25 + $0x138] sm:$0xff]
        %v2652 = vld [vmem:[#allocation25 + $0x140] sm:$0xff]
        %v2653 = vld [vmem:[#allocation25 + $0x148] sm:$0xff]
        %v2654 = vld [vmem:[#allocation25 + $0x150] sm:$0xff]
        %v2655 = vld [vmem:[#allocation25 + $0x158] sm:$0xff]
        %v2656 = vld [vmem:[#allocation25 + $0x160] sm:$0xff]
        %v2657 = vld [vmem:[#allocation25 + $0x168] sm:$0xff]
        %v2658 = vld [vmem:[#allocation25 + $0x170] sm:$0xff]
        %v2659 = vld [vmem:[#allocation25 + $0x178] sm:$0xff]
        %v2660 = vld [vmem:[#allocation25 + $0x180] sm:$0xff]
        %v2661 = vld [vmem:[#allocation25 + $0x188] sm:$0xff]
        %v2662 = vld [vmem:[#allocation25 + $0x190] sm:$0xff]
        %v2663 = vld [vmem:[#allocation25 + $0x198] sm:$0xff]
        %v2664 = vld [vmem:[#allocation25 + $0x1a0] sm:$0xff]
        %v2665 = vld [vmem:[#allocation25 + $0x1a8] sm:$0xff]
        %v2666 = vld [vmem:[#allocation25 + $0x1b0] sm:$0xff]
        %v2667 = vld [vmem:[#allocation25 + $0x1b8] sm:$0xff]
        %v2668 = vld [vmem:[#allocation25 + $0x1c0] sm:$0xff]
        %v2669 = vld [vmem:[#allocation25 + $0x1c8] sm:$0xff]
        %v2670 = vld [vmem:[#allocation25 + $0x1d0] sm:$0xff]
        %v2671 = vld [vmem:[#allocation25 + $0x1d8] sm:$0xff]
        %v2672 = vld [vmem:[#allocation25 + $0x1e0] sm:$0xff]
        %v2673 = vld [vmem:[#allocation25 + $0x1e8] sm:$0xff]
        %v2674 = vld [vmem:[#allocation25 + $0x1f0] sm:$0xff]
        %v2675 = vld [vmem:[#allocation25 + $0x1f8] sm:$0xff]
        %v2676 = vld [vmem:[#allocation25 + $0x200] sm:$0xff]
        %v2677 = vld [vmem:[#allocation25 + $0x208] sm:$0xff]
        %v2678 = vld [vmem:[#allocation25 + $0x210] sm:$0xff]
        %v2679 = vld [vmem:[#allocation25 + $0x218] sm:$0xff]
        %v2680 = vld [vmem:[#allocation25 + $0x220] sm:$0xff]
        %v2681 = vld [vmem:[#allocation25 + $0x228] sm:$0xff]
        %v2682 = vld [vmem:[#allocation25 + $0x230] sm:$0xff]
        %v2683 = vld [vmem:[#allocation25 + $0x238] sm:$0xff]
        %v2684 = vld [vmem:[#allocation25 + $0x240] sm:$0xff]
        %v2685 = vld [vmem:[#allocation25 + $0x248] sm:$0xff]
        %v2686 = vld [vmem:[#allocation25 + $0x250] sm:$0xff]
        %v2687 = vld [vmem:[#allocation25 + $0x258] sm:$0xff]
        %v2688 = vld [vmem:[#allocation25 + $0x260] sm:$0xff]
        %v2689 = vld [vmem:[#allocation25 + $0x268] sm:$0xff]
        %v2690 = vld [vmem:[#allocation25 + $0x270] sm:$0xff]
        %v2691 = vld [vmem:[#allocation25 + $0x278] sm:$0xff]
        %v2692 = vld [vmem:[#allocation25 + $0x280] sm:$0xff]
        %v2693 = vld [vmem:[#allocation25 + $0x288] sm:$0xff]
        %v2694 = vld [vmem:[#allocation25 + $0x290] sm:$0xff]
        %v2695 = vld [vmem:[#allocation25 + $0x298] sm:$0xff]
        %v2696 = vld [vmem:[#allocation25 + $0x2a0] sm:$0xff]
        %v2697 = vld [vmem:[#allocation25 + $0x2a8] sm:$0xff]
        %v2698 = vld [vmem:[#allocation25 + $0x2b0] sm:$0xff]
        %v2699 = vld [vmem:[#allocation25 + $0x2b8] sm:$0xff]
        %v2700 = vld [vmem:[#allocation25 + $0x2c0] sm:$0xff]
        %v2701 = vld [vmem:[#allocation25 + $0x2c8] sm:$0xff]
        %v2702 = vld [vmem:[#allocation25 + $0x2d0] sm:$0xff]
        %v2703 = vld [vmem:[#allocation25 + $0x2d8] sm:$0xff]
        %v2704 = vld [vmem:[#allocation25 + $0x2e0] sm:$0xff]
        %v2705 = vld [vmem:[#allocation25 + $0x2e8] sm:$0xff]
        %v2706 = vld [vmem:[#allocation25 + $0x2f0] sm:$0xff]
        %v2707 = vld [vmem:[#allocation25 + $0x2f8] sm:$0xff]
        %v2708 = vld [vmem:[#allocation25 + $0x300] sm:$0xff]
        %v2709 = vld [vmem:[#allocation25 + $0x308] sm:$0xff]
        %v2710 = vld [vmem:[#allocation25 + $0x310] sm:$0xff]
        %v2711 = vld [vmem:[#allocation25 + $0x318] sm:$0xff]
        %v2712 = vld [vmem:[#allocation25 + $0x320] sm:$0xff]
        %v2713 = vld [vmem:[#allocation25 + $0x328] sm:$0xff]
        %v2714 = vld [vmem:[#allocation25 + $0x330] sm:$0xff]
        %v2715 = vld [vmem:[#allocation25 + $0x338] sm:$0xff]
        %v2716 = vld [vmem:[#allocation25 + $0x340] sm:$0xff]
        %v2717 = vld [vmem:[#allocation25 + $0x348] sm:$0xff]
        %v2718 = vld [vmem:[#allocation25 + $0x350] sm:$0xff]
        %v2719 = vld [vmem:[#allocation25 + $0x358] sm:$0xff]
        %v2720 = vld [vmem:[#allocation25 + $0x360] sm:$0xff]
        %v2721 = vld [vmem:[#allocation25 + $0x368] sm:$0xff]
        %v2722 = vld [vmem:[#allocation25 + $0x370] sm:$0xff]
        %v2723 = vld [vmem:[#allocation25 + $0x378] sm:$0xff]
        %v2724 = vld [vmem:[#allocation25 + $0x380] sm:$0xff]
        %v2725 = vld [vmem:[#allocation25 + $0x388] sm:$0xff]
        %v2726 = vld [vmem:[#allocation25 + $0x390] sm:$0xff]
        %v2727 = vld [vmem:[#allocation25 + $0x398] sm:$0xff]
        %v2728 = vld [vmem:[#allocation25 + $0x3a0] sm:$0xff]
        %v2729 = vld [vmem:[#allocation25 + $0x3a8] sm:$0xff]
        %v2730 = vld [vmem:[#allocation25 + $0x3b0] sm:$0xff]
        %v2731 = vld [vmem:[#allocation25 + $0x3b8] sm:$0xff]
        %v2732 = vld [vmem:[#allocation25 + $0x3c0] sm:$0xff]
        %v2733 = vld [vmem:[#allocation25 + $0x3c8] sm:$0xff]
        %v2734 = vld [vmem:[#allocation25 + $0x3d0] sm:$0xff]
        %v2735 = vld [vmem:[#allocation25 + $0x3d8] sm:$0xff]
        %v2736 = vld [vmem:[#allocation25 + $0x3e0] sm:$0xff]
        %v2737 = vld [vmem:[#allocation25 + $0x3e8] sm:$0xff]
        %v2738 = vld [vmem:[#allocation25 + $0x3f0] sm:$0xff]
        %v2739 = vld [vmem:[#allocation25 + $0x3f8] sm:$0xff]
        %v2740 = vld [vmem:[#allocation26] sm:$0xff]
        %v2742 = vlaneseq
        %v2743 = vshrl.u32 %v2742, 7
        %v2744 = vsub.s32 0, %v2743
        %v2745 = vrot.slane %v2740, %v2744
        %v2746 = vlaneseq
        %v2747 = vshrl.u32 %v2746, 7
        %v2748 = vsub.s32 1, %v2747
        %v2749 = vrot.slane %v2740, %v2748
        %v2750 = vlaneseq
        %v2751 = vshrl.u32 %v2750, 7
        %v2752 = vsub.s32 2, %v2751
        %v2753 = vrot.slane %v2740, %v2752
        %v2754 = vlaneseq
        %v2755 = vshrl.u32 %v2754, 7
        %v2756 = vsub.s32 3, %v2755
        %v2757 = vrot.slane %v2740, %v2756
        %v2758 = vlaneseq
        %v2759 = vshrl.u32 %v2758, 7
        %v2760 = vsub.s32 4, %v2759
        %v2761 = vrot.slane %v2740, %v2760
        %v2762 = vlaneseq
        %v2763 = vshrl.u32 %v2762, 7
        %v2764 = vsub.s32 5, %v2763
        %v2765 = vrot.slane %v2740, %v2764
        %v2766 = vlaneseq
        %v2767 = vshrl.u32 %v2766, 7
        %v2768 = vsub.s32 6, %v2767
        %v2769 = vrot.slane %v2740, %v2768
        %v2770 = vlaneseq
        %v2771 = vshrl.u32 %v2770, 7
        %v2772 = vsub.s32 7, %v2771
        %v2773 = vrot.slane %v2740, %v2772
        %v2910 = vunpack.c.l.b16 %v2612
        %v2911 = vunpack.c.h.b16 %v2612
        %v2912 = vunpack.c.l.b16 %v2613
        %v2913 = vunpack.c.h.b16 %v2613
        %v2914 = vunpack.c.l.b16 %v2614
        %v2915 = vunpack.c.h.b16 %v2614
        %v2916 = vunpack.c.l.b16 %v2615
        %v2917 = vunpack.c.h.b16 %v2615
        %v2918 = vunpack.c.l.b16 %v2616
        %v2919 = vunpack.c.h.b16 %v2616
        %v2920 = vunpack.c.l.b16 %v2617
        %v2921 = vunpack.c.h.b16 %v2617
        %v2922 = vunpack.c.l.b16 %v2618
        %v2923 = vunpack.c.h.b16 %v2618
        %v2924 = vunpack.c.l.b16 %v2619
        %v2925 = vunpack.c.h.b16 %v2619
        %v2926 = vunpack.c.l.b16 %v2620
        %v2927 = vunpack.c.h.b16 %v2620
        %v2928 = vunpack.c.l.b16 %v2621
        %v2929 = vunpack.c.h.b16 %v2621
        %v2930 = vunpack.c.l.b16 %v2622
        %v2931 = vunpack.c.h.b16 %v2622
        %v2932 = vunpack.c.l.b16 %v2623
        %v2933 = vunpack.c.h.b16 %v2623
        %v2934 = vunpack.c.l.b16 %v2624
        %v2935 = vunpack.c.h.b16 %v2624
        %v2936 = vunpack.c.l.b16 %v2625
        %v2937 = vunpack.c.h.b16 %v2625
        %v2938 = vunpack.c.l.b16 %v2626
        %v2939 = vunpack.c.h.b16 %v2626
        %v2940 = vunpack.c.l.b16 %v2627
        %v2941 = vunpack.c.h.b16 %v2627
        %v2942 = vunpack.c.l.b16 %v2628
        %v2943 = vunpack.c.h.b16 %v2628
        %v2944 = vunpack.c.l.b16 %v2629
        %v2945 = vunpack.c.h.b16 %v2629
        %v2946 = vunpack.c.l.b16 %v2630
        %v2947 = vunpack.c.h.b16 %v2630
        %v2948 = vunpack.c.l.b16 %v2631
        %v2949 = vunpack.c.h.b16 %v2631
        %v2950 = vunpack.c.l.b16 %v2632
        %v2951 = vunpack.c.h.b16 %v2632
        %v2952 = vunpack.c.l.b16 %v2633
        %v2953 = vunpack.c.h.b16 %v2633
        %v2954 = vunpack.c.l.b16 %v2634
        %v2955 = vunpack.c.h.b16 %v2634
        %v2956 = vunpack.c.l.b16 %v2635
        %v2957 = vunpack.c.h.b16 %v2635
        %v2958 = vunpack.c.l.b16 %v2636
        %v2959 = vunpack.c.h.b16 %v2636
        %v2960 = vunpack.c.l.b16 %v2637
        %v2961 = vunpack.c.h.b16 %v2637
        %v2962 = vunpack.c.l.b16 %v2638
        %v2963 = vunpack.c.h.b16 %v2638
        %v2964 = vunpack.c.l.b16 %v2639
        %v2965 = vunpack.c.h.b16 %v2639
        %v2966 = vunpack.c.l.b16 %v2640
        %v2967 = vunpack.c.h.b16 %v2640
        %v2968 = vunpack.c.l.b16 %v2641
        %v2969 = vunpack.c.h.b16 %v2641
        %v2970 = vunpack.c.l.b16 %v2642
        %v2971 = vunpack.c.h.b16 %v2642
        %v2972 = vunpack.c.l.b16 %v2643
        %v2973 = vunpack.c.h.b16 %v2643
        %v2974 = vunpack.c.l.b16 %v2644
        %v2975 = vunpack.c.h.b16 %v2644
        %v2976 = vunpack.c.l.b16 %v2645
        %v2977 = vunpack.c.h.b16 %v2645
        %v2978 = vunpack.c.l.b16 %v2646
        %v2979 = vunpack.c.h.b16 %v2646
        %v2980 = vunpack.c.l.b16 %v2647
        %v2981 = vunpack.c.h.b16 %v2647
        %v2982 = vunpack.c.l.b16 %v2648
        %v2983 = vunpack.c.h.b16 %v2648
        %v2984 = vunpack.c.l.b16 %v2649
        %v2985 = vunpack.c.h.b16 %v2649
        %v2986 = vunpack.c.l.b16 %v2650
        %v2987 = vunpack.c.h.b16 %v2650
        %v2988 = vunpack.c.l.b16 %v2651
        %v2989 = vunpack.c.h.b16 %v2651
        %v2990 = vunpack.c.l.b16 %v2652
        %v2991 = vunpack.c.h.b16 %v2652
        %v2992 = vunpack.c.l.b16 %v2653
        %v2993 = vunpack.c.h.b16 %v2653
        %v2994 = vunpack.c.l.b16 %v2654
        %v2995 = vunpack.c.h.b16 %v2654
        %v2996 = vunpack.c.l.b16 %v2655
        %v2997 = vunpack.c.h.b16 %v2655
        %v2998 = vunpack.c.l.b16 %v2656
        %v2999 = vunpack.c.h.b16 %v2656
        %v3000 = vunpack.c.l.b16 %v2657
        %v3001 = vunpack.c.h.b16 %v2657
        %v3002 = vunpack.c.l.b16 %v2658
        %v3003 = vunpack.c.h.b16 %v2658
        %v3004 = vunpack.c.l.b16 %v2659
        %v3005 = vunpack.c.h.b16 %v2659
        %v3006 = vunpack.c.l.b16 %v2660
        %v3007 = vunpack.c.h.b16 %v2660
        %v3008 = vunpack.c.l.b16 %v2661
        %v3009 = vunpack.c.h.b16 %v2661
        %v3010 = vunpack.c.l.b16 %v2662
        %v3011 = vunpack.c.h.b16 %v2662
        %v3012 = vunpack.c.l.b16 %v2663
        %v3013 = vunpack.c.h.b16 %v2663
        %v3014 = vunpack.c.l.b16 %v2664
        %v3015 = vunpack.c.h.b16 %v2664
        %v3016 = vunpack.c.l.b16 %v2665
        %v3017 = vunpack.c.h.b16 %v2665
        %v3018 = vunpack.c.l.b16 %v2666
        %v3019 = vunpack.c.h.b16 %v2666
        %v3020 = vunpack.c.l.b16 %v2667
        %v3021 = vunpack.c.h.b16 %v2667
        %v3022 = vunpack.c.l.b16 %v2668
        %v3023 = vunpack.c.h.b16 %v2668
        %v3024 = vunpack.c.l.b16 %v2669
        %v3025 = vunpack.c.h.b16 %v2669
        %v3026 = vunpack.c.l.b16 %v2670
        %v3027 = vunpack.c.h.b16 %v2670
        %v3028 = vunpack.c.l.b16 %v2671
        %v3029 = vunpack.c.h.b16 %v2671
        %v3030 = vunpack.c.l.b16 %v2672
        %v3031 = vunpack.c.h.b16 %v2672
        %v3032 = vunpack.c.l.b16 %v2673
        %v3033 = vunpack.c.h.b16 %v2673
        %v3034 = vunpack.c.l.b16 %v2674
        %v3035 = vunpack.c.h.b16 %v2674
        %v3036 = vunpack.c.l.b16 %v2675
        %v3037 = vunpack.c.h.b16 %v2675
        %v3038 = vunpack.c.l.b16 %v2676
        %v3039 = vunpack.c.h.b16 %v2676
        %v3040 = vunpack.c.l.b16 %v2677
        %v3041 = vunpack.c.h.b16 %v2677
        %v3042 = vunpack.c.l.b16 %v2678
        %v3043 = vunpack.c.h.b16 %v2678
        %v3044 = vunpack.c.l.b16 %v2679
        %v3045 = vunpack.c.h.b16 %v2679
        %v3046 = vunpack.c.l.b16 %v2680
        %v3047 = vunpack.c.h.b16 %v2680
        %v3048 = vunpack.c.l.b16 %v2681
        %v3049 = vunpack.c.h.b16 %v2681
        %v3050 = vunpack.c.l.b16 %v2682
        %v3051 = vunpack.c.h.b16 %v2682
        %v3052 = vunpack.c.l.b16 %v2683
        %v3053 = vunpack.c.h.b16 %v2683
        %v3054 = vunpack.c.l.b16 %v2684
        %v3055 = vunpack.c.h.b16 %v2684
        %v3056 = vunpack.c.l.b16 %v2685
        %v3057 = vunpack.c.h.b16 %v2685
        %v3058 = vunpack.c.l.b16 %v2686
        %v3059 = vunpack.c.h.b16 %v2686
        %v3060 = vunpack.c.l.b16 %v2687
        %v3061 = vunpack.c.h.b16 %v2687
        %v3062 = vunpack.c.l.b16 %v2688
        %v3063 = vunpack.c.h.b16 %v2688
        %v3064 = vunpack.c.l.b16 %v2689
        %v3065 = vunpack.c.h.b16 %v2689
        %v3066 = vunpack.c.l.b16 %v2690
        %v3067 = vunpack.c.h.b16 %v2690
        %v3068 = vunpack.c.l.b16 %v2691
        %v3069 = vunpack.c.h.b16 %v2691
        %v3070 = vunpack.c.l.b16 %v2692
        %v3071 = vunpack.c.h.b16 %v2692
        %v3072 = vunpack.c.l.b16 %v2693
        %v3073 = vunpack.c.h.b16 %v2693
        %v3074 = vunpack.c.l.b16 %v2694
        %v3075 = vunpack.c.h.b16 %v2694
        %v3076 = vunpack.c.l.b16 %v2695
        %v3077 = vunpack.c.h.b16 %v2695
        %v3078 = vunpack.c.l.b16 %v2696
        %v3079 = vunpack.c.h.b16 %v2696
        %v3080 = vunpack.c.l.b16 %v2697
        %v3081 = vunpack.c.h.b16 %v2697
        %v3082 = vunpack.c.l.b16 %v2698
        %v3083 = vunpack.c.h.b16 %v2698
        %v3084 = vunpack.c.l.b16 %v2699
        %v3085 = vunpack.c.h.b16 %v2699
        %v3086 = vunpack.c.l.b16 %v2700
        %v3087 = vunpack.c.h.b16 %v2700
        %v3088 = vunpack.c.l.b16 %v2701
        %v3089 = vunpack.c.h.b16 %v2701
        %v3090 = vunpack.c.l.b16 %v2702
        %v3091 = vunpack.c.h.b16 %v2702
        %v3092 = vunpack.c.l.b16 %v2703
        %v3093 = vunpack.c.h.b16 %v2703
        %v3094 = vunpack.c.l.b16 %v2704
        %v3095 = vunpack.c.h.b16 %v2704
        %v3096 = vunpack.c.l.b16 %v2705
        %v3097 = vunpack.c.h.b16 %v2705
        %v3098 = vunpack.c.l.b16 %v2706
        %v3099 = vunpack.c.h.b16 %v2706
        %v3100 = vunpack.c.l.b16 %v2707
        %v3101 = vunpack.c.h.b16 %v2707
        %v3102 = vunpack.c.l.b16 %v2708
        %v3103 = vunpack.c.h.b16 %v2708
        %v3104 = vunpack.c.l.b16 %v2709
        %v3105 = vunpack.c.h.b16 %v2709
        %v3106 = vunpack.c.l.b16 %v2710
        %v3107 = vunpack.c.h.b16 %v2710
        %v3108 = vunpack.c.l.b16 %v2711
        %v3109 = vunpack.c.h.b16 %v2711
        %v3110 = vunpack.c.l.b16 %v2712
        %v3111 = vunpack.c.h.b16 %v2712
        %v3112 = vunpack.c.l.b16 %v2713
        %v3113 = vunpack.c.h.b16 %v2713
        %v3114 = vunpack.c.l.b16 %v2714
        %v3115 = vunpack.c.h.b16 %v2714
        %v3116 = vunpack.c.l.b16 %v2715
        %v3117 = vunpack.c.h.b16 %v2715
        %v3118 = vunpack.c.l.b16 %v2716
        %v3119 = vunpack.c.h.b16 %v2716
        %v3120 = vunpack.c.l.b16 %v2717
        %v3121 = vunpack.c.h.b16 %v2717
        %v3122 = vunpack.c.l.b16 %v2718
        %v3123 = vunpack.c.h.b16 %v2718
        %v3124 = vunpack.c.l.b16 %v2719
        %v3125 = vunpack.c.h.b16 %v2719
        %v3126 = vunpack.c.l.b16 %v2720
        %v3127 = vunpack.c.h.b16 %v2720
        %v3128 = vunpack.c.l.b16 %v2721
        %v3129 = vunpack.c.h.b16 %v2721
        %v3130 = vunpack.c.l.b16 %v2722
        %v3131 = vunpack.c.h.b16 %v2722
        %v3132 = vunpack.c.l.b16 %v2723
        %v3133 = vunpack.c.h.b16 %v2723
        %v3134 = vunpack.c.l.b16 %v2724
        %v3135 = vunpack.c.h.b16 %v2724
        %v3136 = vunpack.c.l.b16 %v2725
        %v3137 = vunpack.c.h.b16 %v2725
        %v3138 = vunpack.c.l.b16 %v2726
        %v3139 = vunpack.c.h.b16 %v2726
        %v3140 = vunpack.c.l.b16 %v2727
        %v3141 = vunpack.c.h.b16 %v2727
        %v3142 = vunpack.c.l.b16 %v2728
        %v3143 = vunpack.c.h.b16 %v2728
        %v3144 = vunpack.c.l.b16 %v2729
        %v3145 = vunpack.c.h.b16 %v2729
        %v3146 = vunpack.c.l.b16 %v2730
        %v3147 = vunpack.c.h.b16 %v2730
        %v3148 = vunpack.c.l.b16 %v2731
        %v3149 = vunpack.c.h.b16 %v2731
        %v3150 = vunpack.c.l.b16 %v2732
        %v3151 = vunpack.c.h.b16 %v2732
        %v3152 = vunpack.c.l.b16 %v2733
        %v3153 = vunpack.c.h.b16 %v2733
        %v3154 = vunpack.c.l.b16 %v2734
        %v3155 = vunpack.c.h.b16 %v2734
        %v3156 = vunpack.c.l.b16 %v2735
        %v3157 = vunpack.c.h.b16 %v2735
        %v3158 = vunpack.c.l.b16 %v2736
        %v3159 = vunpack.c.h.b16 %v2736
        %v3160 = vunpack.c.l.b16 %v2737
        %v3161 = vunpack.c.h.b16 %v2737
        %v3162 = vunpack.c.l.b16 %v2738
        %v3163 = vunpack.c.h.b16 %v2738
        %v3164 = vunpack.c.l.b16 %v2739
        %v3165 = vunpack.c.h.b16 %v2739
        %v3166 = vpack.c.b16 %v2918, %v2910
        %v3167 = vpack.c.b16 %v2919, %v2911
        %v3168 = vpack.c.b16 %v2920, %v2912
        %v3169 = vpack.c.b16 %v2921, %v2913
        %v3170 = vpack.c.b16 %v2922, %v2914
        %v3171 = vpack.c.b16 %v2923, %v2915
        %v3172 = vpack.c.b16 %v2924, %v2916
        %v3173 = vpack.c.b16 %v2925, %v2917
        %v3174 = vpack.c.b16 %v2934, %v2926
        %v3175 = vpack.c.b16 %v2935, %v2927
        %v3176 = vpack.c.b16 %v2936, %v2928
        %v3177 = vpack.c.b16 %v2937, %v2929
        %v3178 = vpack.c.b16 %v2938, %v2930
        %v3179 = vpack.c.b16 %v2939, %v2931
        %v3180 = vpack.c.b16 %v2940, %v2932
        %v3181 = vpack.c.b16 %v2941, %v2933
        %v3182 = vpack.c.b16 %v2950, %v2942
        %v3183 = vpack.c.b16 %v2951, %v2943
        %v3184 = vpack.c.b16 %v2952, %v2944
        %v3185 = vpack.c.b16 %v2953, %v2945
        %v3186 = vpack.c.b16 %v2954, %v2946
        %v3187 = vpack.c.b16 %v2955, %v2947
        %v3188 = vpack.c.b16 %v2956, %v2948
        %v3189 = vpack.c.b16 %v2957, %v2949
        %v3190 = vpack.c.b16 %v2966, %v2958
        %v3191 = vpack.c.b16 %v2967, %v2959
        %v3192 = vpack.c.b16 %v2968, %v2960
        %v3193 = vpack.c.b16 %v2969, %v2961
        %v3194 = vpack.c.b16 %v2970, %v2962
        %v3195 = vpack.c.b16 %v2971, %v2963
        %v3196 = vpack.c.b16 %v2972, %v2964
        %v3197 = vpack.c.b16 %v2973, %v2965
        %v3198 = vpack.c.b16 %v2982, %v2974
        %v3199 = vpack.c.b16 %v2983, %v2975
        %v3200 = vpack.c.b16 %v2984, %v2976
        %v3201 = vpack.c.b16 %v2985, %v2977
        %v3202 = vpack.c.b16 %v2986, %v2978
        %v3203 = vpack.c.b16 %v2987, %v2979
        %v3204 = vpack.c.b16 %v2988, %v2980
        %v3205 = vpack.c.b16 %v2989, %v2981
        %v3206 = vpack.c.b16 %v2998, %v2990
        %v3207 = vpack.c.b16 %v2999, %v2991
        %v3208 = vpack.c.b16 %v3000, %v2992
        %v3209 = vpack.c.b16 %v3001, %v2993
        %v3210 = vpack.c.b16 %v3002, %v2994
        %v3211 = vpack.c.b16 %v3003, %v2995
        %v3212 = vpack.c.b16 %v3004, %v2996
        %v3213 = vpack.c.b16 %v3005, %v2997
        %v3214 = vpack.c.b16 %v3014, %v3006
        %v3215 = vpack.c.b16 %v3015, %v3007
        %v3216 = vpack.c.b16 %v3016, %v3008
        %v3217 = vpack.c.b16 %v3017, %v3009
        %v3218 = vpack.c.b16 %v3018, %v3010
        %v3219 = vpack.c.b16 %v3019, %v3011
        %v3220 = vpack.c.b16 %v3020, %v3012
        %v3221 = vpack.c.b16 %v3021, %v3013
        %v3222 = vpack.c.b16 %v3030, %v3022
        %v3223 = vpack.c.b16 %v3031, %v3023
        %v3224 = vpack.c.b16 %v3032, %v3024
        %v3225 = vpack.c.b16 %v3033, %v3025
        %v3226 = vpack.c.b16 %v3034, %v3026
        %v3227 = vpack.c.b16 %v3035, %v3027
        %v3228 = vpack.c.b16 %v3036, %v3028
        %v3229 = vpack.c.b16 %v3037, %v3029
        %v3230 = vpack.c.b16 %v3046, %v3038
        %v3231 = vpack.c.b16 %v3047, %v3039
        %v3232 = vpack.c.b16 %v3048, %v3040
        %v3233 = vpack.c.b16 %v3049, %v3041
        %v3234 = vpack.c.b16 %v3050, %v3042
        %v3235 = vpack.c.b16 %v3051, %v3043
        %v3236 = vpack.c.b16 %v3052, %v3044
        %v3237 = vpack.c.b16 %v3053, %v3045
        %v3238 = vpack.c.b16 %v3062, %v3054
        %v3239 = vpack.c.b16 %v3063, %v3055
        %v3240 = vpack.c.b16 %v3064, %v3056
        %v3241 = vpack.c.b16 %v3065, %v3057
        %v3242 = vpack.c.b16 %v3066, %v3058
        %v3243 = vpack.c.b16 %v3067, %v3059
        %v3244 = vpack.c.b16 %v3068, %v3060
        %v3245 = vpack.c.b16 %v3069, %v3061
        %v3246 = vpack.c.b16 %v3078, %v3070
        %v3247 = vpack.c.b16 %v3079, %v3071
        %v3248 = vpack.c.b16 %v3080, %v3072
        %v3249 = vpack.c.b16 %v3081, %v3073
        %v3250 = vpack.c.b16 %v3082, %v3074
        %v3251 = vpack.c.b16 %v3083, %v3075
        %v3252 = vpack.c.b16 %v3084, %v3076
        %v3253 = vpack.c.b16 %v3085, %v3077
        %v3254 = vpack.c.b16 %v3094, %v3086
        %v3255 = vpack.c.b16 %v3095, %v3087
        %v3256 = vpack.c.b16 %v3096, %v3088
        %v3257 = vpack.c.b16 %v3097, %v3089
        %v3258 = vpack.c.b16 %v3098, %v3090
        %v3259 = vpack.c.b16 %v3099, %v3091
        %v3260 = vpack.c.b16 %v3100, %v3092
        %v3261 = vpack.c.b16 %v3101, %v3093
        %v3262 = vpack.c.b16 %v3110, %v3102
        %v3263 = vpack.c.b16 %v3111, %v3103
        %v3264 = vpack.c.b16 %v3112, %v3104
        %v3265 = vpack.c.b16 %v3113, %v3105
        %v3266 = vpack.c.b16 %v3114, %v3106
        %v3267 = vpack.c.b16 %v3115, %v3107
        %v3268 = vpack.c.b16 %v3116, %v3108
        %v3269 = vpack.c.b16 %v3117, %v3109
        %v3270 = vpack.c.b16 %v3126, %v3118
        %v3271 = vpack.c.b16 %v3127, %v3119
        %v3272 = vpack.c.b16 %v3128, %v3120
        %v3273 = vpack.c.b16 %v3129, %v3121
        %v3274 = vpack.c.b16 %v3130, %v3122
        %v3275 = vpack.c.b16 %v3131, %v3123
        %v3276 = vpack.c.b16 %v3132, %v3124
        %v3277 = vpack.c.b16 %v3133, %v3125
        %v3278 = vpack.c.b16 %v3142, %v3134
        %v3279 = vpack.c.b16 %v3143, %v3135
        %v3280 = vpack.c.b16 %v3144, %v3136
        %v3281 = vpack.c.b16 %v3145, %v3137
        %v3282 = vpack.c.b16 %v3146, %v3138
        %v3283 = vpack.c.b16 %v3147, %v3139
        %v3284 = vpack.c.b16 %v3148, %v3140
        %v3285 = vpack.c.b16 %v3149, %v3141
        %v3286 = vpack.c.b16 %v3158, %v3150
        %v3287 = vpack.c.b16 %v3159, %v3151
        %v3288 = vpack.c.b16 %v3160, %v3152
        %v3289 = vpack.c.b16 %v3161, %v3153
        %v3290 = vpack.c.b16 %v3162, %v3154
        %v3291 = vpack.c.b16 %v3163, %v3155
        %v3292 = vpack.c.b16 %v3164, %v3156
        %v3293 = vpack.c.b16 %v3165, %v3157
        %3422 = vmatprep.subr.bf16.mxu0 %v3167
        %3423 = vmatpush1.bf16.msra.mxu0 %v3166
        %3424 = vmatprep.subr.bf16.mxu0 %v3175
        %3425 = vmatpush1.bf16.msra.mxu0 %v3174
        %3426 = vmatprep.subr.bf16.mxu0 %v3183
        %3427 = vmatpush1.bf16.msra.mxu0 %v3182
        %3428 = vmatprep.subr.bf16.mxu0 %v3191
        %3429 = vmatpush1.bf16.msra.mxu0 %v3190
        %3430 = vmatprep.subr.bf16.mxu0 %v3199
        %3431 = vmatpush1.bf16.msra.mxu0 %v3198
        %3432 = vmatprep.subr.bf16.mxu0 %v3207
        %3433 = vmatpush1.bf16.msra.mxu0 %v3206
        %3434 = vmatprep.subr.bf16.mxu0 %v3215
        %3435 = vmatpush1.bf16.msra.mxu0 %v3214
        %3436 = vmatprep.subr.bf16.mxu0 %v3223
        %3437 = vmatpush1.bf16.msra.mxu0 %v3222
        %3438 = vmatprep.subr.bf16.mxu0 %v3231
        %3439 = vmatpush1.bf16.msra.mxu0 %v3230
        %3440 = vmatprep.subr.bf16.mxu0 %v3239
        %3441 = vmatpush1.bf16.msra.mxu0 %v3238
        %3442 = vmatprep.subr.bf16.mxu0 %v3247
        %3443 = vmatpush1.bf16.msra.mxu0 %v3246
        %3444 = vmatprep.subr.bf16.mxu0 %v3255
        %3445 = vmatpush1.bf16.msra.mxu0 %v3254
        %3446 = vmatprep.subr.bf16.mxu0 %v3263
        %3447 = vmatpush1.bf16.msra.mxu0 %v3262
        %3448 = vmatprep.subr.bf16.mxu0 %v3271
        %3449 = vmatpush1.bf16.msra.mxu0 %v3270
        %3450 = vmatprep.subr.bf16.mxu0 %v3279
        %3451 = vmatpush1.bf16.msra.mxu0 %v3278
        %3452 = vmatprep.subr.bf16.mxu0 %v3287
        %3453 = vmatpush1.bf16.msra.mxu0 %v3286
        %3454 = vmatprep.mubr.bf16.mxu0 %v2611
        %3455 = vmatmul.mubr.bf16.gmra.mrb[0].mxu0 %v2610
        %v3456 = vpop.f32.mrb[0].mxu0
        %v3457 = vadd.f32 %v2745, %v3456
        %v3458 = vpop.f32.mrb[0].mxu0
        %v3459 = vadd.f32 %v2749, %v3458
        %v3460 = vpop.f32.mrb[0].mxu0
        %v3461 = vadd.f32 %v2745, %v3460
        %v3462 = vpop.f32.mrb[0].mxu0
        %v3463 = vadd.f32 %v2749, %v3462
        %3464 = vdwg.mxu0
        %3465 = vmatprep.subr.bf16.mxu0 %v3169
        %3466 = vmatpush1.bf16.msra.mxu0 %v3168
        %3467 = vmatprep.subr.bf16.mxu0 %v3177
        %3468 = vmatpush1.bf16.msra.mxu0 %v3176
        %3469 = vmatprep.subr.bf16.mxu0 %v3185
        %3470 = vmatpush1.bf16.msra.mxu0 %v3184
        %3471 = vmatprep.subr.bf16.mxu0 %v3193
        %3472 = vmatpush1.bf16.msra.mxu0 %v3192
        %3473 = vmatprep.subr.bf16.mxu0 %v3201
        %3474 = vmatpush1.bf16.msra.mxu0 %v3200
        %3475 = vmatprep.subr.bf16.mxu0 %v3209
        %3476 = vmatpush1.bf16.msra.mxu0 %v3208
        %3477 = vmatprep.subr.bf16.mxu0 %v3217
        %3478 = vmatpush1.bf16.msra.mxu0 %v3216
        %3479 = vmatprep.subr.bf16.mxu0 %v3225
        %3480 = vmatpush1.bf16.msra.mxu0 %v3224
        %3481 = vmatprep.subr.bf16.mxu0 %v3233
        %3482 = vmatpush1.bf16.msra.mxu0 %v3232
        %3483 = vmatprep.subr.bf16.mxu0 %v3241
        %3484 = vmatpush1.bf16.msra.mxu0 %v3240
        %3485 = vmatprep.subr.bf16.mxu0 %v3249
        %3486 = vmatpush1.bf16.msra.mxu0 %v3248
        %3487 = vmatprep.subr.bf16.mxu0 %v3257
        %3488 = vmatpush1.bf16.msra.mxu0 %v3256
        %3489 = vmatprep.subr.bf16.mxu0 %v3265
        %3490 = vmatpush1.bf16.msra.mxu0 %v3264
        %3491 = vmatprep.subr.bf16.mxu0 %v3273
        %3492 = vmatpush1.bf16.msra.mxu0 %v3272
        %3493 = vmatprep.subr.bf16.mxu0 %v3281
        %3494 = vmatpush1.bf16.msra.mxu0 %v3280
        %3495 = vmatprep.subr.bf16.mxu0 %v3289
        %3496 = vmatpush1.bf16.msra.mxu0 %v3288
        %3497 = vmatprep.mubr.bf16.mxu0 %v2611
        %3498 = vmatmul.mubr.bf16.gmra.mrb[0].mxu0 %v2610
        %v3499 = vpop.f32.mrb[0].mxu0
        %v3500 = vadd.f32 %v2753, %v3499
        %v3501 = vpop.f32.mrb[0].mxu0
        %v3502 = vadd.f32 %v2757, %v3501
        %v3503 = vpop.f32.mrb[0].mxu0
        %v3504 = vadd.f32 %v2753, %v3503
        %v3505 = vpop.f32.mrb[0].mxu0
        %v3506 = vadd.f32 %v2757, %v3505
        %3507 = vdwg.mxu0
        %3508 = vmatprep.subr.bf16.mxu0 %v3171
        %3509 = vmatpush1.bf16.msra.mxu0 %v3170
        %3510 = vmatprep.subr.bf16.mxu0 %v3179
        %3511 = vmatpush1.bf16.msra.mxu0 %v3178
        %3512 = vmatprep.subr.bf16.mxu0 %v3187
        %3513 = vmatpush1.bf16.msra.mxu0 %v3186
        %3514 = vmatprep.subr.bf16.mxu0 %v3195
        %3515 = vmatpush1.bf16.msra.mxu0 %v3194
        %3516 = vmatprep.subr.bf16.mxu0 %v3203
        %3517 = vmatpush1.bf16.msra.mxu0 %v3202
        %3518 = vmatprep.subr.bf16.mxu0 %v3211
        %3519 = vmatpush1.bf16.msra.mxu0 %v3210
        %3520 = vmatprep.subr.bf16.mxu0 %v3219
        %3521 = vmatpush1.bf16.msra.mxu0 %v3218
        %3522 = vmatprep.subr.bf16.mxu0 %v3227
        %3523 = vmatpush1.bf16.msra.mxu0 %v3226
        %3524 = vmatprep.subr.bf16.mxu0 %v3235
        %3525 = vmatpush1.bf16.msra.mxu0 %v3234
        %3526 = vmatprep.subr.bf16.mxu0 %v3243
        %3527 = vmatpush1.bf16.msra.mxu0 %v3242
        %3528 = vmatprep.subr.bf16.mxu0 %v3251
        %3529 = vmatpush1.bf16.msra.mxu0 %v3250
        %3530 = vmatprep.subr.bf16.mxu0 %v3259
        %3531 = vmatpush1.bf16.msra.mxu0 %v3258
        %3532 = vmatprep.subr.bf16.mxu0 %v3267
        %3533 = vmatpush1.bf16.msra.mxu0 %v3266
        %3534 = vmatprep.subr.bf16.mxu0 %v3275
        %3535 = vmatpush1.bf16.msra.mxu0 %v3274
        %3536 = vmatprep.subr.bf16.mxu0 %v3283
        %3537 = vmatpush1.bf16.msra.mxu0 %v3282
        %3538 = vmatprep.subr.bf16.mxu0 %v3291
        %3539 = vmatpush1.bf16.msra.mxu0 %v3290
        %3540 = vmatprep.mubr.bf16.mxu0 %v2611
        %3541 = vmatmul.mubr.bf16.gmra.mrb[0].mxu0 %v2610
        %v3542 = vpop.f32.mrb[0].mxu0
        %v3543 = vadd.f32 %v2761, %v3542
        %v3544 = vpop.f32.mrb[0].mxu0
        %v3545 = vadd.f32 %v2765, %v3544
        %v3546 = vpop.f32.mrb[0].mxu0
        %v3547 = vadd.f32 %v2761, %v3546
        %v3548 = vpop.f32.mrb[0].mxu0
        %v3549 = vadd.f32 %v2765, %v3548
        %3550 = vdwg.mxu0
        %3551 = vmatprep.subr.bf16.mxu0 %v3173
        %3552 = vmatpush1.bf16.msra.mxu0 %v3172
        %3553 = vmatprep.subr.bf16.mxu0 %v3181
        %3554 = vmatpush1.bf16.msra.mxu0 %v3180
        %3555 = vmatprep.subr.bf16.mxu0 %v3189
        %3556 = vmatpush1.bf16.msra.mxu0 %v3188
        %3557 = vmatprep.subr.bf16.mxu0 %v3197
        %3558 = vmatpush1.bf16.msra.mxu0 %v3196
        %3559 = vmatprep.subr.bf16.mxu0 %v3205
        %3560 = vmatpush1.bf16.msra.mxu0 %v3204
        %3561 = vmatprep.subr.bf16.mxu0 %v3213
        %3562 = vmatpush1.bf16.msra.mxu0 %v3212
        %3563 = vmatprep.subr.bf16.mxu0 %v3221
        %3564 = vmatpush1.bf16.msra.mxu0 %v3220
        %3565 = vmatprep.subr.bf16.mxu0 %v3229
        %3566 = vmatpush1.bf16.msra.mxu0 %v3228
        %3567 = vmatprep.subr.bf16.mxu0 %v3237
        %3568 = vmatpush1.bf16.msra.mxu0 %v3236
        %3569 = vmatprep.subr.bf16.mxu0 %v3245
        %3570 = vmatpush1.bf16.msra.mxu0 %v3244
        %3571 = vmatprep.subr.bf16.mxu0 %v3253
        %3572 = vmatpush1.bf16.msra.mxu0 %v3252
        %3573 = vmatprep.subr.bf16.mxu0 %v3261
        %3574 = vmatpush1.bf16.msra.mxu0 %v3260
        %3575 = vmatprep.subr.bf16.mxu0 %v3269
        %3576 = vmatpush1.bf16.msra.mxu0 %v3268
        %3577 = vmatprep.subr.bf16.mxu0 %v3277
        %3578 = vmatpush1.bf16.msra.mxu0 %v3276
        %3579 = vmatprep.subr.bf16.mxu0 %v3285
        %3580 = vmatpush1.bf16.msra.mxu0 %v3284
        %3581 = vmatprep.subr.bf16.mxu0 %v3293
        %3582 = vmatpush1.bf16.msra.mxu0 %v3292
        %3583 = vmatprep.mubr.bf16.mxu0 %v2611
        %3584 = vmatmul.mubr.bf16.gmra.mrb[0].mxu0 %v2610
        %v3585 = vpop.f32.mrb[0].mxu0
        %v3586 = vadd.f32 %v2769, %v3585
        %v3587 = vpop.f32.mrb[0].mxu0
        %v3588 = vadd.f32 %v2773, %v3587
        %v3589 = vpop.f32.mrb[0].mxu0
        %v3590 = vadd.f32 %v2769, %v3589
        %v3591 = vpop.f32.mrb[0].mxu0
        %v3592 = vadd.f32 %v2773, %v3591
        %3593 = vdwg.mxu0
        %v3594 = vmul.f32 %v3457, 0.5
        %v3595 = vmul.f32 %v3459, 0.5
        %v3596 = vmul.f32 %v3500, 0.5
        %v3597 = vmul.f32 %v3502, 0.5
        %v3598 = vmul.f32 %v3543, 0.5
        %v3599 = vmul.f32 %v3545, 0.5
        %v3600 = vmul.f32 %v3586, 0.5
        %v3601 = vmul.f32 %v3588, 0.5
        %v3602 = vmul.f32 %v3461, 0.5
        %v3603 = vmul.f32 %v3463, 0.5
        %v3604 = vmul.f32 %v3504, 0.5
        %v3605 = vmul.f32 %v3506, 0.5
        %v3606 = vmul.f32 %v3547, 0.5
        %v3607 = vmul.f32 %v3549, 0.5
        %v3608 = vmul.f32 %v3590, 0.5
        %v3609 = vmul.f32 %v3592, 0.5
        %v3610 = vmul.f32 %v3457, 0.7978846
        %v3611 = vmul.f32 %v3459, 0.7978846
        %v3612 = vmul.f32 %v3500, 0.7978846
        %v3613 = vmul.f32 %v3502, 0.7978846
        %v3614 = vmul.f32 %v3543, 0.7978846
        %v3615 = vmul.f32 %v3545, 0.7978846
        %v3616 = vmul.f32 %v3586, 0.7978846
        %v3617 = vmul.f32 %v3588, 0.7978846
        %v3618 = vmul.f32 %v3461, 0.7978846
        %v3619 = vmul.f32 %v3463, 0.7978846
        %v3620 = vmul.f32 %v3504, 0.7978846
        %v3621 = vmul.f32 %v3506, 0.7978846
        %v3622 = vmul.f32 %v3547, 0.7978846
        %v3623 = vmul.f32 %v3549, 0.7978846
        %v3624 = vmul.f32 %v3590, 0.7978846
        %v3625 = vmul.f32 %v3592, 0.7978846
        %v3626 = vmul.f32 %v3457, 0.044715
        %v3627 = vmul.f32 %v3459, 0.044715
        %v3628 = vmul.f32 %v3500, 0.044715
        %v3629 = vmul.f32 %v3502, 0.044715
        %v3630 = vmul.f32 %v3543, 0.044715
        %v3631 = vmul.f32 %v3545, 0.044715
        %v3632 = vmul.f32 %v3586, 0.044715
        %v3633 = vmul.f32 %v3588, 0.044715
        %v3634 = vmul.f32 %v3461, 0.044715
        %v3635 = vmul.f32 %v3463, 0.044715
        %v3636 = vmul.f32 %v3504, 0.044715
        %v3637 = vmul.f32 %v3506, 0.044715
        %v3638 = vmul.f32 %v3547, 0.044715
        %v3639 = vmul.f32 %v3549, 0.044715
        %v3640 = vmul.f32 %v3590, 0.044715
        %v3641 = vmul.f32 %v3592, 0.044715
        %v3642 = vmul.f32 %v3626, %v3457
        %v3643 = vmul.f32 %v3627, %v3459
        %v3644 = vmul.f32 %v3628, %v3500
        %v3645 = vmul.f32 %v3629, %v3502
        %v3646 = vmul.f32 %v3630, %v3543
        %v3647 = vmul.f32 %v3631, %v3545
        %v3648 = vmul.f32 %v3632, %v3586
        %v3649 = vmul.f32 %v3633, %v3588
        %v3650 = vmul.f32 %v3634, %v3461
        %v3651 = vmul.f32 %v3635, %v3463
        %v3652 = vmul.f32 %v3636, %v3504
        %v3653 = vmul.f32 %v3637, %v3506
        %v3654 = vmul.f32 %v3638, %v3547
        %v3655 = vmul.f32 %v3639, %v3549
        %v3656 = vmul.f32 %v3640, %v3590
        %v3657 = vmul.f32 %v3641, %v3592
        %v3658 = vadd.f32 %v3642, 1.0
        %v3659 = vadd.f32 %v3643, 1.0
        %v3660 = vadd.f32 %v3644, 1.0
        %v3661 = vadd.f32 %v3645, 1.0
        %v3662 = vadd.f32 %v3646, 1.0
        %v3663 = vadd.f32 %v3647, 1.0
        %v3664 = vadd.f32 %v3648, 1.0
        %v3665 = vadd.f32 %v3649, 1.0
        %v3666 = vadd.f32 %v3650, 1.0
        %v3667 = vadd.f32 %v3651, 1.0
        %v3668 = vadd.f32 %v3652, 1.0
        %v3669 = vadd.f32 %v3653, 1.0
        %v3670 = vadd.f32 %v3654, 1.0
        %v3671 = vadd.f32 %v3655, 1.0
        %v3672 = vadd.f32 %v3656, 1.0
        %v3673 = vadd.f32 %v3657, 1.0
        %v3674 = vmul.f32 %v3610, %v3658
        %v3675 = vmul.f32 %v3611, %v3659
        %v3676 = vmul.f32 %v3612, %v3660
        %v3677 = vmul.f32 %v3613, %v3661
        %v3678 = vmul.f32 %v3614, %v3662
        %v3679 = vmul.f32 %v3615, %v3663
        %v3680 = vmul.f32 %v3616, %v3664
        %v3681 = vmul.f32 %v3617, %v3665
        %v3682 = vmul.f32 %v3618, %v3666
        %v3683 = vmul.f32 %v3619, %v3667
        %v3684 = vmul.f32 %v3620, %v3668
        %v3685 = vmul.f32 %v3621, %v3669
        %v3686 = vmul.f32 %v3622, %v3670
        %v3687 = vmul.f32 %v3623, %v3671
        %v3688 = vmul.f32 %v3624, %v3672
        %v3689 = vmul.f32 %v3625, %v3673
        %v3690 = vtanh.pop %v3674
        %v3691 = vtanh.pop %v3675
        %v3692 = vtanh.pop %v3676
        %v3693 = vtanh.pop %v3677
        %v3694 = vtanh.pop %v3678
        %v3695 = vtanh.pop %v3679
        %v3696 = vtanh.pop %v3680
        %v3697 = vtanh.pop %v3681
        %v3698 = vtanh.pop %v3682
        %v3699 = vtanh.pop %v3683
        %v3700 = vtanh.pop %v3684
        %v3701 = vtanh.pop %v3685
        %v3702 = vtanh.pop %v3686
        %v3703 = vtanh.pop %v3687
        %v3704 = vtanh.pop %v3688
        %v3705 = vtanh.pop %v3689
        %v3706 = vadd.f32 %v3690, 1.0
        %v3707 = vadd.f32 %v3691, 1.0
        %v3708 = vadd.f32 %v3692, 1.0
        %v3709 = vadd.f32 %v3693, 1.0
        %v3710 = vadd.f32 %v3694, 1.0
        %v3711 = vadd.f32 %v3695, 1.0
        %v3712 = vadd.f32 %v3696, 1.0
        %v3713 = vadd.f32 %v3697, 1.0
        %v3714 = vadd.f32 %v3698, 1.0
        %v3715 = vadd.f32 %v3699, 1.0
        %v3716 = vadd.f32 %v3700, 1.0
        %v3717 = vadd.f32 %v3701, 1.0
        %v3718 = vadd.f32 %v3702, 1.0
        %v3719 = vadd.f32 %v3703, 1.0
        %v3720 = vadd.f32 %v3704, 1.0
        %v3721 = vadd.f32 %v3705, 1.0
        %v3722 = vmul.f32 %v3594, %v3706
        %v3723 = vmul.f32 %v3595, %v3707
        %v3724 = vmul.f32 %v3596, %v3708
        %v3725 = vmul.f32 %v3597, %v3709
        %v3726 = vmul.f32 %v3598, %v3710
        %v3727 = vmul.f32 %v3599, %v3711
        %v3728 = vmul.f32 %v3600, %v3712
        %v3729 = vmul.f32 %v3601, %v3713
        %v3730 = vmul.f32 %v3602, %v3714
        %v3731 = vmul.f32 %v3603, %v3715
        %v3732 = vmul.f32 %v3604, %v3716
        %v3733 = vmul.f32 %v3605, %v3717
        %v3734 = vmul.f32 %v3606, %v3718
        %v3735 = vmul.f32 %v3607, %v3719
        %v3736 = vmul.f32 %v3608, %v3720
        %v3737 = vmul.f32 %v3609, %v3721
        %v3738 = vpack.c.bf16 %v3730, %v3722
        %v3739 = vpack.c.bf16 %v3731, %v3723
        %v3740 = vpack.c.bf16 %v3732, %v3724
        %v3741 = vpack.c.bf16 %v3733, %v3725
        %v3742 = vpack.c.bf16 %v3734, %v3726
        %v3743 = vpack.c.bf16 %v3735, %v3727
        %v3744 = vpack.c.bf16 %v3736, %v3728
        %v3745 = vpack.c.bf16 %v3737, %v3729
        %v3746 = vld [vmem:[#allocation28] sm:$0xff]
        %v3747 = vld [vmem:[#allocation28 + $0x8] sm:$0xff]
        %v3748 = vld [vmem:[#allocation28 + $0x10] sm:$0xff]
        %v3749 = vld [vmem:[#allocation28 + $0x18] sm:$0xff]
        %v3750 = vld [vmem:[#allocation28 + $0x20] sm:$0xff]
        %v3751 = vld [vmem:[#allocation28 + $0x28] sm:$0xff]
        %v3752 = vld [vmem:[#allocation28 + $0x30] sm:$0xff]
        %v3753 = vld [vmem:[#allocation28 + $0x38] sm:$0xff]
        %v3754 = vld [vmem:[#allocation28 + $0x40] sm:$0xff]
        %v3755 = vld [vmem:[#allocation28 + $0x48] sm:$0xff]
        %v3756 = vld [vmem:[#allocation28 + $0x50] sm:$0xff]
        %v3757 = vld [vmem:[#allocation28 + $0x58] sm:$0xff]
        %v3758 = vld [vmem:[#allocation28 + $0x60] sm:$0xff]
        %v3759 = vld [vmem:[#allocation28 + $0x68] sm:$0xff]
        %v3760 = vld [vmem:[#allocation28 + $0x70] sm:$0xff]
        %v3761 = vld [vmem:[#allocation28 + $0x78] sm:$0xff]
        %v3762 = vld [vmem:[#allocation28 + $0x80] sm:$0xff]
        %v3763 = vld [vmem:[#allocation28 + $0x88] sm:$0xff]
        %v3764 = vld [vmem:[#allocation28 + $0x90] sm:$0xff]
        %v3765 = vld [vmem:[#allocation28 + $0x98] sm:$0xff]
        %v3766 = vld [vmem:[#allocation28 + $0xa0] sm:$0xff]
        %v3767 = vld [vmem:[#allocation28 + $0xa8] sm:$0xff]
        %v3768 = vld [vmem:[#allocation28 + $0xb0] sm:$0xff]
        %v3769 = vld [vmem:[#allocation28 + $0xb8] sm:$0xff]
        %v3770 = vld [vmem:[#allocation28 + $0xc0] sm:$0xff]
        %v3771 = vld [vmem:[#allocation28 + $0xc8] sm:$0xff]
        %v3772 = vld [vmem:[#allocation28 + $0xd0] sm:$0xff]
        %v3773 = vld [vmem:[#allocation28 + $0xd8] sm:$0xff]
        %v3774 = vld [vmem:[#allocation28 + $0xe0] sm:$0xff]
        %v3775 = vld [vmem:[#allocation28 + $0xe8] sm:$0xff]
        %v3776 = vld [vmem:[#allocation28 + $0xf0] sm:$0xff]
        %v3777 = vld [vmem:[#allocation28 + $0xf8] sm:$0xff]
        %v3778 = vld [vmem:[#allocation28 + $0x100] sm:$0xff]
        %v3779 = vld [vmem:[#allocation28 + $0x108] sm:$0xff]
        %v3780 = vld [vmem:[#allocation28 + $0x110] sm:$0xff]
        %v3781 = vld [vmem:[#allocation28 + $0x118] sm:$0xff]
        %v3782 = vld [vmem:[#allocation28 + $0x120] sm:$0xff]
        %v3783 = vld [vmem:[#allocation28 + $0x128] sm:$0xff]
        %v3784 = vld [vmem:[#allocation28 + $0x130] sm:$0xff]
        %v3785 = vld [vmem:[#allocation28 + $0x138] sm:$0xff]
        %v3786 = vld [vmem:[#allocation28 + $0x140] sm:$0xff]
        %v3787 = vld [vmem:[#allocation28 + $0x148] sm:$0xff]
        %v3788 = vld [vmem:[#allocation28 + $0x150] sm:$0xff]
        %v3789 = vld [vmem:[#allocation28 + $0x158] sm:$0xff]
        %v3790 = vld [vmem:[#allocation28 + $0x160] sm:$0xff]
        %v3791 = vld [vmem:[#allocation28 + $0x168] sm:$0xff]
        %v3792 = vld [vmem:[#allocation28 + $0x170] sm:$0xff]
        %v3793 = vld [vmem:[#allocation28 + $0x178] sm:$0xff]
        %v3794 = vld [vmem:[#allocation28 + $0x180] sm:$0xff]
        %v3795 = vld [vmem:[#allocation28 + $0x188] sm:$0xff]
        %v3796 = vld [vmem:[#allocation28 + $0x190] sm:$0xff]
        %v3797 = vld [vmem:[#allocation28 + $0x198] sm:$0xff]
        %v3798 = vld [vmem:[#allocation28 + $0x1a0] sm:$0xff]
        %v3799 = vld [vmem:[#allocation28 + $0x1a8] sm:$0xff]
        %v3800 = vld [vmem:[#allocation28 + $0x1b0] sm:$0xff]
        %v3801 = vld [vmem:[#allocation28 + $0x1b8] sm:$0xff]
        %v3802 = vld [vmem:[#allocation28 + $0x1c0] sm:$0xff]
        %v3803 = vld [vmem:[#allocation28 + $0x1c8] sm:$0xff]
        %v3804 = vld [vmem:[#allocation28 + $0x1d0] sm:$0xff]
        %v3805 = vld [vmem:[#allocation28 + $0x1d8] sm:$0xff]
        %v3806 = vld [vmem:[#allocation28 + $0x1e0] sm:$0xff]
        %v3807 = vld [vmem:[#allocation28 + $0x1e8] sm:$0xff]
        %v3808 = vld [vmem:[#allocation28 + $0x1f0] sm:$0xff]
        %v3809 = vld [vmem:[#allocation28 + $0x1f8] sm:$0xff]
        %v3810 = vld [vmem:[#allocation28 + $0x200] sm:$0xff]
        %v3811 = vld [vmem:[#allocation28 + $0x208] sm:$0xff]
        %v3812 = vld [vmem:[#allocation28 + $0x210] sm:$0xff]
        %v3813 = vld [vmem:[#allocation28 + $0x218] sm:$0xff]
        %v3814 = vld [vmem:[#allocation28 + $0x220] sm:$0xff]
        %v3815 = vld [vmem:[#allocation28 + $0x228] sm:$0xff]
        %v3816 = vld [vmem:[#allocation28 + $0x230] sm:$0xff]
        %v3817 = vld [vmem:[#allocation28 + $0x238] sm:$0xff]
        %v3818 = vld [vmem:[#allocation28 + $0x240] sm:$0xff]
        %v3819 = vld [vmem:[#allocation28 + $0x248] sm:$0xff]
        %v3820 = vld [vmem:[#allocation28 + $0x250] sm:$0xff]
        %v3821 = vld [vmem:[#allocation28 + $0x258] sm:$0xff]
        %v3822 = vld [vmem:[#allocation28 + $0x260] sm:$0xff]
        %v3823 = vld [vmem:[#allocation28 + $0x268] sm:$0xff]
        %v3824 = vld [vmem:[#allocation28 + $0x270] sm:$0xff]
        %v3825 = vld [vmem:[#allocation28 + $0x278] sm:$0xff]
        %v3826 = vld [vmem:[#allocation28 + $0x280] sm:$0xff]
        %v3827 = vld [vmem:[#allocation28 + $0x288] sm:$0xff]
        %v3828 = vld [vmem:[#allocation28 + $0x290] sm:$0xff]
        %v3829 = vld [vmem:[#allocation28 + $0x298] sm:$0xff]
        %v3830 = vld [vmem:[#allocation28 + $0x2a0] sm:$0xff]
        %v3831 = vld [vmem:[#allocation28 + $0x2a8] sm:$0xff]
        %v3832 = vld [vmem:[#allocation28 + $0x2b0] sm:$0xff]
        %v3833 = vld [vmem:[#allocation28 + $0x2b8] sm:$0xff]
        %v3834 = vld [vmem:[#allocation28 + $0x2c0] sm:$0xff]
        %v3835 = vld [vmem:[#allocation28 + $0x2c8] sm:$0xff]
        %v3836 = vld [vmem:[#allocation28 + $0x2d0] sm:$0xff]
        %v3837 = vld [vmem:[#allocation28 + $0x2d8] sm:$0xff]
        %v3838 = vld [vmem:[#allocation28 + $0x2e0] sm:$0xff]
        %v3839 = vld [vmem:[#allocation28 + $0x2e8] sm:$0xff]
        %v3840 = vld [vmem:[#allocation28 + $0x2f0] sm:$0xff]
        %v3841 = vld [vmem:[#allocation28 + $0x2f8] sm:$0xff]
        %v3842 = vld [vmem:[#allocation28 + $0x300] sm:$0xff]
        %v3843 = vld [vmem:[#allocation28 + $0x308] sm:$0xff]
        %v3844 = vld [vmem:[#allocation28 + $0x310] sm:$0xff]
        %v3845 = vld [vmem:[#allocation28 + $0x318] sm:$0xff]
        %v3846 = vld [vmem:[#allocation28 + $0x320] sm:$0xff]
        %v3847 = vld [vmem:[#allocation28 + $0x328] sm:$0xff]
        %v3848 = vld [vmem:[#allocation28 + $0x330] sm:$0xff]
        %v3849 = vld [vmem:[#allocation28 + $0x338] sm:$0xff]
        %v3850 = vld [vmem:[#allocation28 + $0x340] sm:$0xff]
        %v3851 = vld [vmem:[#allocation28 + $0x348] sm:$0xff]
        %v3852 = vld [vmem:[#allocation28 + $0x350] sm:$0xff]
        %v3853 = vld [vmem:[#allocation28 + $0x358] sm:$0xff]
        %v3854 = vld [vmem:[#allocation28 + $0x360] sm:$0xff]
        %v3855 = vld [vmem:[#allocation28 + $0x368] sm:$0xff]
        %v3856 = vld [vmem:[#allocation28 + $0x370] sm:$0xff]
        %v3857 = vld [vmem:[#allocation28 + $0x378] sm:$0xff]
        %v3858 = vld [vmem:[#allocation28 + $0x380] sm:$0xff]
        %v3859 = vld [vmem:[#allocation28 + $0x388] sm:$0xff]
        %v3860 = vld [vmem:[#allocation28 + $0x390] sm:$0xff]
        %v3861 = vld [vmem:[#allocation28 + $0x398] sm:$0xff]
        %v3862 = vld [vmem:[#allocation28 + $0x3a0] sm:$0xff]
        %v3863 = vld [vmem:[#allocation28 + $0x3a8] sm:$0xff]
        %v3864 = vld [vmem:[#allocation28 + $0x3b0] sm:$0xff]
        %v3865 = vld [vmem:[#allocation28 + $0x3b8] sm:$0xff]
        %v3866 = vld [vmem:[#allocation28 + $0x3c0] sm:$0xff]
        %v3867 = vld [vmem:[#allocation28 + $0x3c8] sm:$0xff]
        %v3868 = vld [vmem:[#allocation28 + $0x3d0] sm:$0xff]
        %v3869 = vld [vmem:[#allocation28 + $0x3d8] sm:$0xff]
        %v3870 = vld [vmem:[#allocation28 + $0x3e0] sm:$0xff]
        %v3871 = vld [vmem:[#allocation28 + $0x3e8] sm:$0xff]
        %v3872 = vld [vmem:[#allocation28 + $0x3f0] sm:$0xff]
        %v3873 = vld [vmem:[#allocation28 + $0x3f8] sm:$0xff]
        %v3874 = vld [vmem:[#allocation29] sm:$0x3]
        %v3876 = vlaneseq
        %v3877 = vshrl.u32 %v3876, 7
        %v3878 = vsub.s32 0, %v3877
        %v3879 = vrot.slane %v3874, %v3878
        %v3880 = vlaneseq
        %v3881 = vshrl.u32 %v3880, 7
        %v3882 = vsub.s32 1, %v3881
        %v3883 = vrot.slane %v3874, %v3882
        %v4014 = vunpack.c.l.b16 %v3746
        %v4015 = vunpack.c.h.b16 %v3746
        %v4016 = vunpack.c.l.b16 %v3747
        %v4017 = vunpack.c.h.b16 %v3747
        %v4018 = vunpack.c.l.b16 %v3748
        %v4019 = vunpack.c.h.b16 %v3748
        %v4020 = vunpack.c.l.b16 %v3749
        %v4021 = vunpack.c.h.b16 %v3749
        %v4022 = vunpack.c.l.b16 %v3750
        %v4023 = vunpack.c.h.b16 %v3750
        %v4024 = vunpack.c.l.b16 %v3751
        %v4025 = vunpack.c.h.b16 %v3751
        %v4026 = vunpack.c.l.b16 %v3752
        %v4027 = vunpack.c.h.b16 %v3752
        %v4028 = vunpack.c.l.b16 %v3753
        %v4029 = vunpack.c.h.b16 %v3753
        %v4030 = vunpack.c.l.b16 %v3754
        %v4031 = vunpack.c.h.b16 %v3754
        %v4032 = vunpack.c.l.b16 %v3755
        %v4033 = vunpack.c.h.b16 %v3755
        %v4034 = vunpack.c.l.b16 %v3756
        %v4035 = vunpack.c.h.b16 %v3756
        %v4036 = vunpack.c.l.b16 %v3757
        %v4037 = vunpack.c.h.b16 %v3757
        %v4038 = vunpack.c.l.b16 %v3758
        %v4039 = vunpack.c.h.b16 %v3758
        %v4040 = vunpack.c.l.b16 %v3759
        %v4041 = vunpack.c.h.b16 %v3759
        %v4042 = vunpack.c.l.b16 %v3760
        %v4043 = vunpack.c.h.b16 %v3760
        %v4044 = vunpack.c.l.b16 %v3761
        %v4045 = vunpack.c.h.b16 %v3761
        %v4046 = vunpack.c.l.b16 %v3762
        %v4047 = vunpack.c.h.b16 %v3762
        %v4048 = vunpack.c.l.b16 %v3763
        %v4049 = vunpack.c.h.b16 %v3763
        %v4050 = vunpack.c.l.b16 %v3764
        %v4051 = vunpack.c.h.b16 %v3764
        %v4052 = vunpack.c.l.b16 %v3765
        %v4053 = vunpack.c.h.b16 %v3765
        %v4054 = vunpack.c.l.b16 %v3766
        %v4055 = vunpack.c.h.b16 %v3766
        %v4056 = vunpack.c.l.b16 %v3767
        %v4057 = vunpack.c.h.b16 %v3767
        %v4058 = vunpack.c.l.b16 %v3768
        %v4059 = vunpack.c.h.b16 %v3768
        %v4060 = vunpack.c.l.b16 %v3769
        %v4061 = vunpack.c.h.b16 %v3769
        %v4062 = vunpack.c.l.b16 %v3770
        %v4063 = vunpack.c.h.b16 %v3770
        %v4064 = vunpack.c.l.b16 %v3771
        %v4065 = vunpack.c.h.b16 %v3771
        %v4066 = vunpack.c.l.b16 %v3772
        %v4067 = vunpack.c.h.b16 %v3772
        %v4068 = vunpack.c.l.b16 %v3773
        %v4069 = vunpack.c.h.b16 %v3773
        %v4070 = vunpack.c.l.b16 %v3774
        %v4071 = vunpack.c.h.b16 %v3774
        %v4072 = vunpack.c.l.b16 %v3775
        %v4073 = vunpack.c.h.b16 %v3775
        %v4074 = vunpack.c.l.b16 %v3776
        %v4075 = vunpack.c.h.b16 %v3776
        %v4076 = vunpack.c.l.b16 %v3777
        %v4077 = vunpack.c.h.b16 %v3777
        %v4078 = vunpack.c.l.b16 %v3778
        %v4079 = vunpack.c.h.b16 %v3778
        %v4080 = vunpack.c.l.b16 %v3779
        %v4081 = vunpack.c.h.b16 %v3779
        %v4082 = vunpack.c.l.b16 %v3780
        %v4083 = vunpack.c.h.b16 %v3780
        %v4084 = vunpack.c.l.b16 %v3781
        %v4085 = vunpack.c.h.b16 %v3781
        %v4086 = vunpack.c.l.b16 %v3782
        %v4087 = vunpack.c.h.b16 %v3782
        %v4088 = vunpack.c.l.b16 %v3783
        %v4089 = vunpack.c.h.b16 %v3783
        %v4090 = vunpack.c.l.b16 %v3784
        %v4091 = vunpack.c.h.b16 %v3784
        %v4092 = vunpack.c.l.b16 %v3785
        %v4093 = vunpack.c.h.b16 %v3785
        %v4094 = vunpack.c.l.b16 %v3786
        %v4095 = vunpack.c.h.b16 %v3786
        %v4096 = vunpack.c.l.b16 %v3787
        %v4097 = vunpack.c.h.b16 %v3787
        %v4098 = vunpack.c.l.b16 %v3788
        %v4099 = vunpack.c.h.b16 %v3788
        %v4100 = vunpack.c.l.b16 %v3789
        %v4101 = vunpack.c.h.b16 %v3789
        %v4102 = vunpack.c.l.b16 %v3790
        %v4103 = vunpack.c.h.b16 %v3790
        %v4104 = vunpack.c.l.b16 %v3791
        %v4105 = vunpack.c.h.b16 %v3791
        %v4106 = vunpack.c.l.b16 %v3792
        %v4107 = vunpack.c.h.b16 %v3792
        %v4108 = vunpack.c.l.b16 %v3793
        %v4109 = vunpack.c.h.b16 %v3793
        %v4110 = vunpack.c.l.b16 %v3794
        %v4111 = vunpack.c.h.b16 %v3794
        %v4112 = vunpack.c.l.b16 %v3795
        %v4113 = vunpack.c.h.b16 %v3795
        %v4114 = vunpack.c.l.b16 %v3796
        %v4115 = vunpack.c.h.b16 %v3796
        %v4116 = vunpack.c.l.b16 %v3797
        %v4117 = vunpack.c.h.b16 %v3797
        %v4118 = vunpack.c.l.b16 %v3798
        %v4119 = vunpack.c.h.b16 %v3798
        %v4120 = vunpack.c.l.b16 %v3799
        %v4121 = vunpack.c.h.b16 %v3799
        %v4122 = vunpack.c.l.b16 %v3800
        %v4123 = vunpack.c.h.b16 %v3800
        %v4124 = vunpack.c.l.b16 %v3801
        %v4125 = vunpack.c.h.b16 %v3801
        %v4126 = vunpack.c.l.b16 %v3802
        %v4127 = vunpack.c.h.b16 %v3802
        %v4128 = vunpack.c.l.b16 %v3803
        %v4129 = vunpack.c.h.b16 %v3803
        %v4130 = vunpack.c.l.b16 %v3804
        %v4131 = vunpack.c.h.b16 %v3804
        %v4132 = vunpack.c.l.b16 %v3805
        %v4133 = vunpack.c.h.b16 %v3805
        %v4134 = vunpack.c.l.b16 %v3806
        %v4135 = vunpack.c.h.b16 %v3806
        %v4136 = vunpack.c.l.b16 %v3807
        %v4137 = vunpack.c.h.b16 %v3807
        %v4138 = vunpack.c.l.b16 %v3808
        %v4139 = vunpack.c.h.b16 %v3808
        %v4140 = vunpack.c.l.b16 %v3809
        %v4141 = vunpack.c.h.b16 %v3809
        %v4142 = vunpack.c.l.b16 %v3810
        %v4143 = vunpack.c.h.b16 %v3810
        %v4144 = vunpack.c.l.b16 %v3811
        %v4145 = vunpack.c.h.b16 %v3811
        %v4146 = vunpack.c.l.b16 %v3812
        %v4147 = vunpack.c.h.b16 %v3812
        %v4148 = vunpack.c.l.b16 %v3813
        %v4149 = vunpack.c.h.b16 %v3813
        %v4150 = vunpack.c.l.b16 %v3814
        %v4151 = vunpack.c.h.b16 %v3814
        %v4152 = vunpack.c.l.b16 %v3815
        %v4153 = vunpack.c.h.b16 %v3815
        %v4154 = vunpack.c.l.b16 %v3816
        %v4155 = vunpack.c.h.b16 %v3816
        %v4156 = vunpack.c.l.b16 %v3817
        %v4157 = vunpack.c.h.b16 %v3817
        %v4158 = vunpack.c.l.b16 %v3818
        %v4159 = vunpack.c.h.b16 %v3818
        %v4160 = vunpack.c.l.b16 %v3819
        %v4161 = vunpack.c.h.b16 %v3819
        %v4162 = vunpack.c.l.b16 %v3820
        %v4163 = vunpack.c.h.b16 %v3820
        %v4164 = vunpack.c.l.b16 %v3821
        %v4165 = vunpack.c.h.b16 %v3821
        %v4166 = vunpack.c.l.b16 %v3822
        %v4167 = vunpack.c.h.b16 %v3822
        %v4168 = vunpack.c.l.b16 %v3823
        %v4169 = vunpack.c.h.b16 %v3823
        %v4170 = vunpack.c.l.b16 %v3824
        %v4171 = vunpack.c.h.b16 %v3824
        %v4172 = vunpack.c.l.b16 %v3825
        %v4173 = vunpack.c.h.b16 %v3825
        %v4174 = vunpack.c.l.b16 %v3826
        %v4175 = vunpack.c.h.b16 %v3826
        %v4176 = vunpack.c.l.b16 %v3827
        %v4177 = vunpack.c.h.b16 %v3827
        %v4178 = vunpack.c.l.b16 %v3828
        %v4179 = vunpack.c.h.b16 %v3828
        %v4180 = vunpack.c.l.b16 %v3829
        %v4181 = vunpack.c.h.b16 %v3829
        %v4182 = vunpack.c.l.b16 %v3830
        %v4183 = vunpack.c.h.b16 %v3830
        %v4184 = vunpack.c.l.b16 %v3831
        %v4185 = vunpack.c.h.b16 %v3831
        %v4186 = vunpack.c.l.b16 %v3832
        %v4187 = vunpack.c.h.b16 %v3832
        %v4188 = vunpack.c.l.b16 %v3833
        %v4189 = vunpack.c.h.b16 %v3833
        %v4190 = vunpack.c.l.b16 %v3834
        %v4191 = vunpack.c.h.b16 %v3834
        %v4192 = vunpack.c.l.b16 %v3835
        %v4193 = vunpack.c.h.b16 %v3835
        %v4194 = vunpack.c.l.b16 %v3836
        %v4195 = vunpack.c.h.b16 %v3836
        %v4196 = vunpack.c.l.b16 %v3837
        %v4197 = vunpack.c.h.b16 %v3837
        %v4198 = vunpack.c.l.b16 %v3838
        %v4199 = vunpack.c.h.b16 %v3838
        %v4200 = vunpack.c.l.b16 %v3839
        %v4201 = vunpack.c.h.b16 %v3839
        %v4202 = vunpack.c.l.b16 %v3840
        %v4203 = vunpack.c.h.b16 %v3840
        %v4204 = vunpack.c.l.b16 %v3841
        %v4205 = vunpack.c.h.b16 %v3841
        %v4206 = vunpack.c.l.b16 %v3842
        %v4207 = vunpack.c.h.b16 %v3842
        %v4208 = vunpack.c.l.b16 %v3843
        %v4209 = vunpack.c.h.b16 %v3843
        %v4210 = vunpack.c.l.b16 %v3844
        %v4211 = vunpack.c.h.b16 %v3844
        %v4212 = vunpack.c.l.b16 %v3845
        %v4213 = vunpack.c.h.b16 %v3845
        %v4214 = vunpack.c.l.b16 %v3846
        %v4215 = vunpack.c.h.b16 %v3846
        %v4216 = vunpack.c.l.b16 %v3847
        %v4217 = vunpack.c.h.b16 %v3847
        %v4218 = vunpack.c.l.b16 %v3848
        %v4219 = vunpack.c.h.b16 %v3848
        %v4220 = vunpack.c.l.b16 %v3849
        %v4221 = vunpack.c.h.b16 %v3849
        %v4222 = vunpack.c.l.b16 %v3850
        %v4223 = vunpack.c.h.b16 %v3850
        %v4224 = vunpack.c.l.b16 %v3851
        %v4225 = vunpack.c.h.b16 %v3851
        %v4226 = vunpack.c.l.b16 %v3852
        %v4227 = vunpack.c.h.b16 %v3852
        %v4228 = vunpack.c.l.b16 %v3853
        %v4229 = vunpack.c.h.b16 %v3853
        %v4230 = vunpack.c.l.b16 %v3854
        %v4231 = vunpack.c.h.b16 %v3854
        %v4232 = vunpack.c.l.b16 %v3855
        %v4233 = vunpack.c.h.b16 %v3855
        %v4234 = vunpack.c.l.b16 %v3856
        %v4235 = vunpack.c.h.b16 %v3856
        %v4236 = vunpack.c.l.b16 %v3857
        %v4237 = vunpack.c.h.b16 %v3857
        %v4238 = vunpack.c.l.b16 %v3858
        %v4239 = vunpack.c.h.b16 %v3858
        %v4240 = vunpack.c.l.b16 %v3859
        %v4241 = vunpack.c.h.b16 %v3859
        %v4242 = vunpack.c.l.b16 %v3860
        %v4243 = vunpack.c.h.b16 %v3860
        %v4244 = vunpack.c.l.b16 %v3861
        %v4245 = vunpack.c.h.b16 %v3861
        %v4246 = vunpack.c.l.b16 %v3862
        %v4247 = vunpack.c.h.b16 %v3862
        %v4248 = vunpack.c.l.b16 %v3863
        %v4249 = vunpack.c.h.b16 %v3863
        %v4250 = vunpack.c.l.b16 %v3864
        %v4251 = vunpack.c.h.b16 %v3864
        %v4252 = vunpack.c.l.b16 %v3865
        %v4253 = vunpack.c.h.b16 %v3865
        %v4254 = vunpack.c.l.b16 %v3866
        %v4255 = vunpack.c.h.b16 %v3866
        %v4256 = vunpack.c.l.b16 %v3867
        %v4257 = vunpack.c.h.b16 %v3867
        %v4258 = vunpack.c.l.b16 %v3868
        %v4259 = vunpack.c.h.b16 %v3868
        %v4260 = vunpack.c.l.b16 %v3869
        %v4261 = vunpack.c.h.b16 %v3869
        %v4262 = vunpack.c.l.b16 %v3870
        %v4263 = vunpack.c.h.b16 %v3870
        %v4264 = vunpack.c.l.b16 %v3871
        %v4265 = vunpack.c.h.b16 %v3871
        %v4266 = vunpack.c.l.b16 %v3872
        %v4267 = vunpack.c.h.b16 %v3872
        %v4268 = vunpack.c.l.b16 %v3873
        %v4269 = vunpack.c.h.b16 %v3873
        %v4270 = vpack.c.b16 %v4016, %v4014
        %v4271 = vpack.c.b16 %v4017, %v4015
        %v4272 = vpack.c.b16 %v4020, %v4018
        %v4273 = vpack.c.b16 %v4021, %v4019
        %v4274 = vpack.c.b16 %v4024, %v4022
        %v4275 = vpack.c.b16 %v4025, %v4023
        %v4276 = vpack.c.b16 %v4028, %v4026
        %v4277 = vpack.c.b16 %v4029, %v4027
        %v4278 = vpack.c.b16 %v4032, %v4030
        %v4279 = vpack.c.b16 %v4033, %v4031
        %v4280 = vpack.c.b16 %v4036, %v4034
        %v4281 = vpack.c.b16 %v4037, %v4035
        %v4282 = vpack.c.b16 %v4040, %v4038
        %v4283 = vpack.c.b16 %v4041, %v4039
        %v4284 = vpack.c.b16 %v4044, %v4042
        %v4285 = vpack.c.b16 %v4045, %v4043
        %v4286 = vpack.c.b16 %v4048, %v4046
        %v4287 = vpack.c.b16 %v4049, %v4047
        %v4288 = vpack.c.b16 %v4052, %v4050
        %v4289 = vpack.c.b16 %v4053, %v4051
        %v4290 = vpack.c.b16 %v4056, %v4054
        %v4291 = vpack.c.b16 %v4057, %v4055
        %v4292 = vpack.c.b16 %v4060, %v4058
        %v4293 = vpack.c.b16 %v4061, %v4059
        %v4294 = vpack.c.b16 %v4064, %v4062
        %v4295 = vpack.c.b16 %v4065, %v4063
        %v4296 = vpack.c.b16 %v4068, %v4066
        %v4297 = vpack.c.b16 %v4069, %v4067
        %v4298 = vpack.c.b16 %v4072, %v4070
        %v4299 = vpack.c.b16 %v4073, %v4071
        %v4300 = vpack.c.b16 %v4076, %v4074
        %v4301 = vpack.c.b16 %v4077, %v4075
        %v4302 = vpack.c.b16 %v4080, %v4078
        %v4303 = vpack.c.b16 %v4081, %v4079
        %v4304 = vpack.c.b16 %v4084, %v4082
        %v4305 = vpack.c.b16 %v4085, %v4083
        %v4306 = vpack.c.b16 %v4088, %v4086
        %v4307 = vpack.c.b16 %v4089, %v4087
        %v4308 = vpack.c.b16 %v4092, %v4090
        %v4309 = vpack.c.b16 %v4093, %v4091
        %v4310 = vpack.c.b16 %v4096, %v4094
        %v4311 = vpack.c.b16 %v4097, %v4095
        %v4312 = vpack.c.b16 %v4100, %v4098
        %v4313 = vpack.c.b16 %v4101, %v4099
        %v4314 = vpack.c.b16 %v4104, %v4102
        %v4315 = vpack.c.b16 %v4105, %v4103
        %v4316 = vpack.c.b16 %v4108, %v4106
        %v4317 = vpack.c.b16 %v4109, %v4107
        %v4318 = vpack.c.b16 %v4112, %v4110
        %v4319 = vpack.c.b16 %v4113, %v4111
        %v4320 = vpack.c.b16 %v4116, %v4114
        %v4321 = vpack.c.b16 %v4117, %v4115
        %v4322 = vpack.c.b16 %v4120, %v4118
        %v4323 = vpack.c.b16 %v4121, %v4119
        %v4324 = vpack.c.b16 %v4124, %v4122
        %v4325 = vpack.c.b16 %v4125, %v4123
        %v4326 = vpack.c.b16 %v4128, %v4126
        %v4327 = vpack.c.b16 %v4129, %v4127
        %v4328 = vpack.c.b16 %v4132, %v4130
        %v4329 = vpack.c.b16 %v4133, %v4131
        %v4330 = vpack.c.b16 %v4136, %v4134
        %v4331 = vpack.c.b16 %v4137, %v4135
        %v4332 = vpack.c.b16 %v4140, %v4138
        %v4333 = vpack.c.b16 %v4141, %v4139
        %v4334 = vpack.c.b16 %v4144, %v4142
        %v4335 = vpack.c.b16 %v4145, %v4143
        %v4336 = vpack.c.b16 %v4148, %v4146
        %v4337 = vpack.c.b16 %v4149, %v4147
        %v4338 = vpack.c.b16 %v4152, %v4150
        %v4339 = vpack.c.b16 %v4153, %v4151
        %v4340 = vpack.c.b16 %v4156, %v4154
        %v4341 = vpack.c.b16 %v4157, %v4155
        %v4342 = vpack.c.b16 %v4160, %v4158
        %v4343 = vpack.c.b16 %v4161, %v4159
        %v4344 = vpack.c.b16 %v4164, %v4162
        %v4345 = vpack.c.b16 %v4165, %v4163
        %v4346 = vpack.c.b16 %v4168, %v4166
        %v4347 = vpack.c.b16 %v4169, %v4167
        %v4348 = vpack.c.b16 %v4172, %v4170
        %v4349 = vpack.c.b16 %v4173, %v4171
        %v4350 = vpack.c.b16 %v4176, %v4174
        %v4351 = vpack.c.b16 %v4177, %v4175
        %v4352 = vpack.c.b16 %v4180, %v4178
        %v4353 = vpack.c.b16 %v4181, %v4179
        %v4354 = vpack.c.b16 %v4184, %v4182
        %v4355 = vpack.c.b16 %v4185, %v4183
        %v4356 = vpack.c.b16 %v4188, %v4186
        %v4357 = vpack.c.b16 %v4189, %v4187
        %v4358 = vpack.c.b16 %v4192, %v4190
        %v4359 = vpack.c.b16 %v4193, %v4191
        %v4360 = vpack.c.b16 %v4196, %v4194
        %v4361 = vpack.c.b16 %v4197, %v4195
        %v4362 = vpack.c.b16 %v4200, %v4198
        %v4363 = vpack.c.b16 %v4201, %v4199
        %v4364 = vpack.c.b16 %v4204, %v4202
        %v4365 = vpack.c.b16 %v4205, %v4203
        %v4366 = vpack.c.b16 %v4208, %v4206
        %v4367 = vpack.c.b16 %v4209, %v4207
        %v4368 = vpack.c.b16 %v4212, %v4210
        %v4369 = vpack.c.b16 %v4213, %v4211
        %v4370 = vpack.c.b16 %v4216, %v4214
        %v4371 = vpack.c.b16 %v4217, %v4215
        %v4372 = vpack.c.b16 %v4220, %v4218
        %v4373 = vpack.c.b16 %v4221, %v4219
        %v4374 = vpack.c.b16 %v4224, %v4222
        %v4375 = vpack.c.b16 %v4225, %v4223
        %v4376 = vpack.c.b16 %v4228, %v4226
        %v4377 = vpack.c.b16 %v4229, %v4227
        %v4378 = vpack.c.b16 %v4232, %v4230
        %v4379 = vpack.c.b16 %v4233, %v4231
        %v4380 = vpack.c.b16 %v4236, %v4234
        %v4381 = vpack.c.b16 %v4237, %v4235
        %v4382 = vpack.c.b16 %v4240, %v4238
        %v4383 = vpack.c.b16 %v4241, %v4239
        %v4384 = vpack.c.b16 %v4244, %v4242
        %v4385 = vpack.c.b16 %v4245, %v4243
        %v4386 = vpack.c.b16 %v4248, %v4246
        %v4387 = vpack.c.b16 %v4249, %v4247
        %v4388 = vpack.c.b16 %v4252, %v4250
        %v4389 = vpack.c.b16 %v4253, %v4251
        %v4390 = vpack.c.b16 %v4256, %v4254
        %v4391 = vpack.c.b16 %v4257, %v4255
        %v4392 = vpack.c.b16 %v4260, %v4258
        %v4393 = vpack.c.b16 %v4261, %v4259
        %v4394 = vpack.c.b16 %v4264, %v4262
        %v4395 = vpack.c.b16 %v4265, %v4263
        %v4396 = vpack.c.b16 %v4268, %v4266
        %v4397 = vpack.c.b16 %v4269, %v4267
        %4526 = vmatprep.subr.bf16.mxu0 %v4271
        %4527 = vmatpush1.bf16.msra.mxu0 %v4270
        %4528 = vmatprep.subr.bf16.mxu0 %v4273
        %4529 = vmatpush1.bf16.msra.mxu0 %v4272
        %4530 = vmatprep.subr.bf16.mxu0 %v4275
        %4531 = vmatpush1.bf16.msra.mxu0 %v4274
        %4532 = vmatprep.subr.bf16.mxu0 %v4277
        %4533 = vmatpush1.bf16.msra.mxu0 %v4276
        %4534 = vmatprep.subr.bf16.mxu0 %v4279
        %4535 = vmatpush1.bf16.msra.mxu0 %v4278
        %4536 = vmatprep.subr.bf16.mxu0 %v4281
        %4537 = vmatpush1.bf16.msra.mxu0 %v4280
        %4538 = vmatprep.subr.bf16.mxu0 %v4283
        %4539 = vmatpush1.bf16.msra.mxu0 %v4282
        %4540 = vmatprep.subr.bf16.mxu0 %v4285
        %4541 = vmatpush1.bf16.msra.mxu0 %v4284
        %4542 = vmatprep.subr.bf16.mxu0 %v4287
        %4543 = vmatpush1.bf16.msra.mxu0 %v4286
        %4544 = vmatprep.subr.bf16.mxu0 %v4289
        %4545 = vmatpush1.bf16.msra.mxu0 %v4288
        %4546 = vmatprep.subr.bf16.mxu0 %v4291
        %4547 = vmatpush1.bf16.msra.mxu0 %v4290
        %4548 = vmatprep.subr.bf16.mxu0 %v4293
        %4549 = vmatpush1.bf16.msra.mxu0 %v4292
        %4550 = vmatprep.subr.bf16.mxu0 %v4295
        %4551 = vmatpush1.bf16.msra.mxu0 %v4294
        %4552 = vmatprep.subr.bf16.mxu0 %v4297
        %4553 = vmatpush1.bf16.msra.mxu0 %v4296
        %4554 = vmatprep.subr.bf16.mxu0 %v4299
        %4555 = vmatpush1.bf16.msra.mxu0 %v4298
        %4556 = vmatprep.subr.bf16.mxu0 %v4301
        %4557 = vmatpush1.bf16.msra.mxu0 %v4300
        %4558 = vmatprep.mubr.bf16.mxu0 %v3739
        %4559 = vmatmul.mubr.bf16.gmra.mrb[0].mxu0 %v3738
        %v4560 = vpop.f32.mrb[0].mxu0
        %v4561 = vadd.f32 %v3879, %v4560
        %v4562 = vpop.f32.mrb[0].mxu0
        %v4563 = vadd.f32 %v3883, %v4562
        %v4564 = vpop.f32.mrb[0].mxu0
        %v4565 = vadd.f32 %v3879, %v4564
        %v4566 = vpop.f32.mrb[0].mxu0
        %v4567 = vadd.f32 %v3883, %v4566
        %4568 = vdwg.mxu0
        %4569 = vmatprep.subr.bf16.mxu0 %v4303
        %4570 = vmatpush1.bf16.msra.mxu0 %v4302
        %4571 = vmatprep.subr.bf16.mxu0 %v4305
        %4572 = vmatpush1.bf16.msra.mxu0 %v4304
        %4573 = vmatprep.subr.bf16.mxu0 %v4307
        %4574 = vmatpush1.bf16.msra.mxu0 %v4306
        %4575 = vmatprep.subr.bf16.mxu0 %v4309
        %4576 = vmatpush1.bf16.msra.mxu0 %v4308
        %4577 = vmatprep.subr.bf16.mxu0 %v4311
        %4578 = vmatpush1.bf16.msra.mxu0 %v4310
        %4579 = vmatprep.subr.bf16.mxu0 %v4313
        %4580 = vmatpush1.bf16.msra.mxu0 %v4312
        %4581 = vmatprep.subr.bf16.mxu0 %v4315
        %4582 = vmatpush1.bf16.msra.mxu0 %v4314
        %4583 = vmatprep.subr.bf16.mxu0 %v4317
        %4584 = vmatpush1.bf16.msra.mxu0 %v4316
        %4585 = vmatprep.subr.bf16.mxu0 %v4319
        %4586 = vmatpush1.bf16.msra.mxu0 %v4318
        %4587 = vmatprep.subr.bf16.mxu0 %v4321
        %4588 = vmatpush1.bf16.msra.mxu0 %v4320
        %4589 = vmatprep.subr.bf16.mxu0 %v4323
        %4590 = vmatpush1.bf16.msra.mxu0 %v4322
        %4591 = vmatprep.subr.bf16.mxu0 %v4325
        %4592 = vmatpush1.bf16.msra.mxu0 %v4324
        %4593 = vmatprep.subr.bf16.mxu0 %v4327
        %4594 = vmatpush1.bf16.msra.mxu0 %v4326
        %4595 = vmatprep.subr.bf16.mxu0 %v4329
        %4596 = vmatpush1.bf16.msra.mxu0 %v4328
        %4597 = vmatprep.subr.bf16.mxu0 %v4331
        %4598 = vmatpush1.bf16.msra.mxu0 %v4330
        %4599 = vmatprep.subr.bf16.mxu0 %v4333
        %4600 = vmatpush1.bf16.msra.mxu0 %v4332
        %4601 = vmatprep.mubr.bf16.mxu0 %v3741
        %4602 = vmatmul.mubr.bf16.gmra.mrb[0].mxu0 %v3740
        %v4603 = vpop.f32.mrb[0].mxu0
        %v4604 = vadd.f32 %v4561, %v4603
        %v4605 = vpop.f32.mrb[0].mxu0
        %v4606 = vadd.f32 %v4563, %v4605
        %v4607 = vpop.f32.mrb[0].mxu0
        %v4608 = vadd.f32 %v4565, %v4607
        %v4609 = vpop.f32.mrb[0].mxu0
        %v4610 = vadd.f32 %v4567, %v4609
        %4611 = vdwg.mxu0
        %4612 = vmatprep.subr.bf16.mxu0 %v4335
        %4613 = vmatpush1.bf16.msra.mxu0 %v4334
        %4614 = vmatprep.subr.bf16.mxu0 %v4337
        %4615 = vmatpush1.bf16.msra.mxu0 %v4336
        %4616 = vmatprep.subr.bf16.mxu0 %v4339
        %4617 = vmatpush1.bf16.msra.mxu0 %v4338
        %4618 = vmatprep.subr.bf16.mxu0 %v4341
        %4619 = vmatpush1.bf16.msra.mxu0 %v4340
        %4620 = vmatprep.subr.bf16.mxu0 %v4343
        %4621 = vmatpush1.bf16.msra.mxu0 %v4342
        %4622 = vmatprep.subr.bf16.mxu0 %v4345
        %4623 = vmatpush1.bf16.msra.mxu0 %v4344
        %4624 = vmatprep.subr.bf16.mxu0 %v4347
        %4625 = vmatpush1.bf16.msra.mxu0 %v4346
        %4626 = vmatprep.subr.bf16.mxu0 %v4349
        %4627 = vmatpush1.bf16.msra.mxu0 %v4348
        %4628 = vmatprep.subr.bf16.mxu0 %v4351
        %4629 = vmatpush1.bf16.msra.mxu0 %v4350
        %4630 = vmatprep.subr.bf16.mxu0 %v4353
        %4631 = vmatpush1.bf16.msra.mxu0 %v4352
        %4632 = vmatprep.subr.bf16.mxu0 %v4355
        %4633 = vmatpush1.bf16.msra.mxu0 %v4354
        %4634 = vmatprep.subr.bf16.mxu0 %v4357
        %4635 = vmatpush1.bf16.msra.mxu0 %v4356
        %4636 = vmatprep.subr.bf16.mxu0 %v4359
        %4637 = vmatpush1.bf16.msra.mxu0 %v4358
        %4638 = vmatprep.subr.bf16.mxu0 %v4361
        %4639 = vmatpush1.bf16.msra.mxu0 %v4360
        %4640 = vmatprep.subr.bf16.mxu0 %v4363
        %4641 = vmatpush1.bf16.msra.mxu0 %v4362
        %4642 = vmatprep.subr.bf16.mxu0 %v4365
        %4643 = vmatpush1.bf16.msra.mxu0 %v4364
        %4644 = vmatprep.mubr.bf16.mxu0 %v3743
        %4645 = vmatmul.mubr.bf16.gmra.mrb[0].mxu0 %v3742
        %v4646 = vpop.f32.mrb[0].mxu0
        %v4647 = vadd.f32 %v4604, %v4646
        %v4648 = vpop.f32.mrb[0].mxu0
        %v4649 = vadd.f32 %v4606, %v4648
        %v4650 = vpop.f32.mrb[0].mxu0
        %v4651 = vadd.f32 %v4608, %v4650
        %v4652 = vpop.f32.mrb[0].mxu0
        %v4653 = vadd.f32 %v4610, %v4652
        %4654 = vdwg.mxu0
        %4655 = vmatprep.subr.bf16.mxu0 %v4367
        %4656 = vmatpush1.bf16.msra.mxu0 %v4366
        %4657 = vmatprep.subr.bf16.mxu0 %v4369
        %4658 = vmatpush1.bf16.msra.mxu0 %v4368
        %4659 = vmatprep.subr.bf16.mxu0 %v4371
        %4660 = vmatpush1.bf16.msra.mxu0 %v4370
        %4661 = vmatprep.subr.bf16.mxu0 %v4373
        %4662 = vmatpush1.bf16.msra.mxu0 %v4372
        %4663 = vmatprep.subr.bf16.mxu0 %v4375
        %4664 = vmatpush1.bf16.msra.mxu0 %v4374
        %4665 = vmatprep.subr.bf16.mxu0 %v4377
        %4666 = vmatpush1.bf16.msra.mxu0 %v4376
        %4667 = vmatprep.subr.bf16.mxu0 %v4379
        %4668 = vmatpush1.bf16.msra.mxu0 %v4378
        %4669 = vmatprep.subr.bf16.mxu0 %v4381
        %4670 = vmatpush1.bf16.msra.mxu0 %v4380
        %4671 = vmatprep.subr.bf16.mxu0 %v4383
        %4672 = vmatpush1.bf16.msra.mxu0 %v4382
        %4673 = vmatprep.subr.bf16.mxu0 %v4385
        %4674 = vmatpush1.bf16.msra.mxu0 %v4384
        %4675 = vmatprep.subr.bf16.mxu0 %v4387
        %4676 = vmatpush1.bf16.msra.mxu0 %v4386
        %4677 = vmatprep.subr.bf16.mxu0 %v4389
        %4678 = vmatpush1.bf16.msra.mxu0 %v4388
        %4679 = vmatprep.subr.bf16.mxu0 %v4391
        %4680 = vmatpush1.bf16.msra.mxu0 %v4390
        %4681 = vmatprep.subr.bf16.mxu0 %v4393
        %4682 = vmatpush1.bf16.msra.mxu0 %v4392
        %4683 = vmatprep.subr.bf16.mxu0 %v4395
        %4684 = vmatpush1.bf16.msra.mxu0 %v4394
        %4685 = vmatprep.subr.bf16.mxu0 %v4397
        %4686 = vmatpush1.bf16.msra.mxu0 %v4396
        %4687 = vmatprep.mubr.bf16.mxu0 %v3745
        %4688 = vmatmul.mubr.bf16.gmra.mrb[0].mxu0 %v3744
        %v4689 = vpop.f32.mrb[0].mxu0
        %v4690 = vadd.f32 %v4647, %v4689
        %v4691 = vpop.f32.mrb[0].mxu0
        %v4692 = vadd.f32 %v4649, %v4691
        %v4693 = vpop.f32.mrb[0].mxu0
        %v4694 = vadd.f32 %v4651, %v4693
        %v4695 = vpop.f32.mrb[0].mxu0
        %v4696 = vadd.f32 %v4653, %v4695
        %4697 = vdwg.mxu0
        %v4698 = vmul.f32 %v2606, 7.483315
        %v4699 = vmul.f32 %v2607, 7.483315
        %v4700 = vmul.f32 %v2608, 7.483315
        %v4701 = vmul.f32 %v2609, 7.483315
        %v4702 = vadd.f32 %v4698, %v4690
        %v4703 = vadd.f32 %v4699, %v4692
        %v4704 = vadd.f32 %v4700, %v4694
        %v4705 = vadd.f32 %v4701, %v4696
        %4706 = vst [vmem:[%s1001] sm:$0xff] %v4702
        %4707 = vst [vmem:[%s1001 + $0x8] sm:$0xff] %v4703
        %4708 = vst [vmem:[%s1001 + $0x10] sm:$0xff] %v4704
        %4709 = vst [vmem:[%s1001 + $0x18] sm:$0xff] %v4705
        %s4710 = sand.u32 %s471, 1
        %s4711 = scalar_lea.sflag [#allocation4], %s4710
        %s4712 = sand.u32 %s471, 1
        %s4713 = smul.addr %s4712, 32
        %s4714 = scalar_lea.vmem [#allocation31], %s4713
        %s4715 = sand.u32 %s497, 1
        %s4716 = scalar_lea.sflag [#allocation33], %s4715
        %s4717 = sand.u32 %s497, 1
        %s4718 = smul.addr %s4717, 64
        %s4719 = scalar_lea.vmem [#allocation32], %s4718
        // Predicated region
        $region165: #{tpu_custom_call.1} parent=91 // pred_check
          %p4720 = pneg %p481
        $region166: #{tpu_custom_call.1} parent=91 // pred_check_branch
          %4722 = sbr.rel (%p4720) target = $region168
        $region167: #{tpu_custom_call.1} parent=91 // pred_region
          %s4724 = ssub.s32 512, 512
          %4725 = vsyncadd %s4711, %s4724
          %s4726 = smul.addr %s55, 4
          %s4727 = smul.addr %s4726, 128
          %s4728 = scalar_lea.hbm %s18, %s4727
          %s4729 = sshll.u32 %s4714, 4
          %s4730 = int_to_ptr.vmem [resolvable:$true] %s4729
          %4735 = dma.vmem_to_hbm [thread:$0]  %s4730, 512, %s4728, %s4711, 256, 256, 16
        $region168: #{tpu_custom_call.1} parent=91 // pred_fallthru
          _
        // Predicated region
        $region169: #{tpu_custom_call.1} parent=91 // pred_check
          %p4736 = pneg %p507
        $region170: #{tpu_custom_call.1} parent=91 // pred_check_branch
          %4738 = sbr.rel (%p4736) target = $region172
        $region171: #{tpu_custom_call.1} parent=91 // pred_region
          #allocation37 [shape = 'u32[6]{0}', space=smem, size = 0x18, scoped, tag = 'DMA stride descriptor']
          %s4740 = ssub.s32 1024, 1024
          %4741 = vsyncadd %s4716, %s4740
          %s4742 = smul.addr %s55, 8
          %s4743 = smul.addr %s4742, 64
          %s4744 = scalar_lea.hbm %s19, %s4743
          %s4746 = sshll.u32 1, 14
          %s4747 = sxor.u32 4294967295, %s4746
          %s4750 = sshll.u32 7, 18
          %s4751 = sxor.u32 4294967295, %s4750
          %s4752 = sand.u32 0, %s4751
          %s4754 = sor.u32 %s4752, 0
          %s4756 = sshll.u32 3, 24
          %s4757 = sxor.u32 4294967295, %s4756
          %s4758 = sand.u32 %s4754, %s4757
          %s4760 = sor.u32 %s4758, 0
          %s4761 = sshll.u32 %s4719, 4
          %s4762 = int_to_ptr.vmem [resolvable:$true] %s4761
          %4768 = sst [smem:[#allocation37]] 512
          %s4769 = scalar_lea.smem [#allocation37], 1
          %4770 = sst [smem:[%s4769]] 1024
          %s4771 = scalar_lea.smem [#allocation37], 2
          %4772 = sst [smem:[%s4771]] 8
          %s4773 = scalar_lea.smem [#allocation37], 3
          %4774 = sst [smem:[%s4773]] 64
          %s4775 = scalar_lea.smem [#allocation37], 4
          %4776 = sst [smem:[%s4775]] 64
          %s4777 = scalar_lea.smem [#allocation37], 5
          %4778 = sst [smem:[%s4777]] 4
          %4780 = dma.general %s4762, 1024, %s4744, %s4716, [#allocation36], [#allocation37], %s4760, 0
        $region172: #{tpu_custom_call.1} parent=91 // pred_fallthru
          _
      $region92: #{tpu_custom_call.1} parent=5 // pred_fallthru
        _
      %p4781 = scmp.le.s32.totalorder 2, %s50
      // Predicated region
      $region173: #{tpu_custom_call.1} parent=5 // pred_check
        %p4782 = pneg %p4781
      $region174: #{tpu_custom_call.1} parent=5 // pred_check_branch
        %4784 = sbr.rel (%p4782) target = $region176
      $region175: #{tpu_custom_call.1} parent=5 // pred_region
        %s4785 = ssub.s32 %s50, 2
        // Predicated region
        $region177: #{tpu_custom_call.1} parent=175 // pred_check
          %p4786 = pneg %p487
        $region178: #{tpu_custom_call.1} parent=175 // pred_check_branch
          %4788 = sbr.rel (%p4786) target = $region180
        $region179: #{tpu_custom_call.1} parent=175 // pred_region
          %s4789 = sand.u32 %s472, 1
          %s4790 = scalar_lea.sflag [#allocation4], %s4789
          %s4791 = sand.u32 %s472, 1
          %s4792 = smul.addr %s4791, 32
          %s4793 = scalar_lea.vmem [#allocation31], %s4792
          %4794 = dma.done %s4790, 512
        $region180: #{tpu_custom_call.1} parent=175 // pred_fallthru
          _
        // Predicated region
        $region181: #{tpu_custom_call.1} parent=175 // pred_check
          %p4795 = pneg %p513
        $region182: #{tpu_custom_call.1} parent=175 // pred_check_branch
          %4797 = sbr.rel (%p4795) target = $region184
        $region183: #{tpu_custom_call.1} parent=175 // pred_region
          %s4798 = sand.u32 %s498, 1
          %s4799 = scalar_lea.sflag [#allocation33], %s4798
          %s4800 = sand.u32 %s498, 1
          %s4801 = smul.addr %s4800, 64
          %s4802 = scalar_lea.vmem [#allocation32], %s4801
          %4803 = dma.done %s4799, 1024
        $region184: #{tpu_custom_call.1} parent=175 // pred_fallthru
          _
      $region176: #{tpu_custom_call.1} parent=5 // pred_fallthru
        _
    $region6: #{tpu_custom_call.1} parent=1 // loop_footer
      %s54 = sadd.s32 1, %s50
    $region7: #{tpu_custom_call.1} parent=1 // loop_footer_branch
      %49 = sbr.rel target = $region3
    $region8: #{tpu_custom_call.1} parent=1 // loop_exit
      _
    %4804 = vsyncpa [#allocation3], 1
    %s4805 = scalar_lea.sflag [#allocation3], 1
    %4806 = vsyncpa %s4805, 1
    %4807 = vsyncpa [#allocation6], 1
    %s4808 = scalar_lea.sflag [#allocation6], 1
    %4809 = vsyncpa %s4808, 1
    %4810 = vsyncpa [#allocation9], 1
    %s4811 = scalar_lea.sflag [#allocation9], 1
    %4812 = vsyncpa %s4811, 1
    %4813 = vsyncpa [#allocation12], 1
    %s4814 = scalar_lea.sflag [#allocation12], 1
    %4815 = vsyncpa %s4814, 1
    %4816 = vsyncpa [#allocation15], 1
    %4817 = vsyncpa [#allocation18], 1
    %4818 = vsyncpa [#allocation21], 1
    %4819 = vsyncpa [#allocation24], 1
    %4820 = vsyncpa [#allocation27], 1
    %4821 = vsyncpa [#allocation30], 1
    %4822 = vsyncpa [#allocation4], 1
    %s4823 = scalar_lea.sflag [#allocation4], 1
    %4824 = vsyncpa %s4823, 1
    %4825 = vsyncpa [#allocation33], 1
    %s4826 = scalar_lea.sflag [#allocation33], 1
    %4827 = vsyncpa %s4826, 1

</llo_original>
